<compile_context>
chip_gen: v7x
topology: tpu7x:2x2x1
jax: 0.10.0
libtpu: 0.0.40
codegen_flags: <defaults>
</compile_context>

<pallas_src>
import functools
import numpy as np
import jax
import jax.numpy as jnp
from jax.experimental import pallas as pl
from jax.experimental.pallas import tpu as pltpu


VMEM_LIMIT = 32 * 1024 * 1024  # scoped limit, safe on v5e / v6e / v7x


# ------------------------------ tiling helpers ------------------------------

def _pick_tile(dim, target, align):
    """Largest tile <= target that divides dim and is a multiple of align
    (falls back to the full dim, which always satisfies the (8,128) rule)."""
    if dim <= target:
        return dim
    t = (target // align) * align
    while t >= align:
        if dim % t == 0:
            return t
        t -= align
    return dim


def _head_block(H, dh):
    """Heads per attention grid step so the output lane width ~>= 128."""
    hb = min(H, max(1, -(-128 // dh)))      # ceil(128 / dh), capped at H
    while H % hb != 0:
        hb -= 1
    return hb


# ----------------------- fused matmul (the workhorse) -----------------------
# out = [relu]( [rmsnorm(x) or x] @ w ) [+ residual]
# grid = (M/tm, N/tn, K/tk), K last ("arbitrary").
# If K fits in one step (always when RMSNorm is fused) no accumulator scratch
# is allocated and the result is written directly to the output block.

def _fused_matmul_kernel(*refs, n_k, has_norm, has_res, eps, activation):
    it = iter(refs)
    x_ref = next(it)
    w_ref = next(it)
    g_ref = next(it) if has_norm else None
    r_ref = next(it) if has_res else None
    o_ref = next(it)
    acc_ref = next(it, None)                # only present when n_k > 1

    x = x_ref[...]
    if has_norm:
        # T5LayerNorm: x * rsqrt(mean(x^2) + eps) * g   (f32 math, no mean-sub)
        xf = x.astype(jnp.float32)
        var = jnp.mean(xf * xf, axis=-1, keepdims=True)
        xf = xf * jax.lax.rsqrt(var + eps) * g_ref[...]
        x = xf.astype(jnp.bfloat16)
    else:
        x = x.astype(jnp.bfloat16)

    partial = jnp.dot(x, w_ref[...].astype(jnp.bfloat16),
                      preferred_element_type=jnp.float32)

    def _epilogue(out):
        if activation == "relu":
            out = jnp.maximum(out, 0.0)
        if has_res:
            out = out + r_ref[...].astype(jnp.float32)
        return out.astype(o_ref.dtype)

    if n_k == 1:
        # single K step: no accumulator round trip at all
        o_ref[...] = _epilogue(partial)
    else:
        @pl.when(pl.program_id(2) == 0)
        def _init():
            acc_ref[...] = jnp.zeros_like(acc_ref)

        acc_ref[...] += partial

        @pl.when(pl.program_id(2) == n_k - 1)
        def _finalize():
            o_ref[...] = _epilogue(acc_ref[...])


def fused_matmul(x, w, *, norm_w=None, residual=None, activation=None,
                 out_dtype=jnp.bfloat16, eps=1e-6):
    M, K = x.shape
    K2, N = w.shape
    assert K == K2
    tm = _pick_tile(M, 256, 8)
    tn = _pick_tile(N, 256, 128)
    # rmsnorm needs the full feature row -> keep K un-tiled when norm is fused
    tk = K if norm_w is not None else _pick_tile(K, 512, 128)
    grid = (M // tm, N // tn, K // tk)
    n_k = grid[2]

    in_specs = [
        pl.BlockSpec((tm, tk), lambda i, j, k: (i, k)),
        pl.BlockSpec((tk, tn), lambda i, j, k: (k, j)),
    ]
    args = [x, w]
    if norm_w is not None:
        in_specs.append(pl.BlockSpec((1, tk), lambda i, j, k: (0, k)))
        args.append(norm_w.reshape(1, K).astype(jnp.float32))
    if residual is not None:
        in_specs.append(pl.BlockSpec((tm, tn), lambda i, j, k: (i, j)))
        args.append(residual)

    kernel = functools.partial(
        _fused_matmul_kernel, n_k=n_k, has_norm=norm_w is not None,
        has_res=residual is not None, eps=eps, activation=activation)

    scratch = [pltpu.VMEM((tm, tn), jnp.float32)] if n_k > 1 else []

    return pl.pallas_call(
        kernel,
        out_shape=jax.ShapeDtypeStruct((M, N), out_dtype),
        grid=grid,
        in_specs=in_specs,
        out_specs=pl.BlockSpec((tm, tn), lambda i, j, k: (i, j)),
        scratch_shapes=scratch,
        compiler_params=pltpu.CompilerParams(
            dimension_semantics=("parallel", "parallel", "arbitrary"),
            vmem_limit_bytes=VMEM_LIMIT),
    )(*args)


# ------------------------------ attention core ------------------------------
# grid = (batch, head_group); heads of a group are processed together so the
# attention-output block is lane-dense.  No scaling by 1/sqrt(d) (T5 style).

def _attn_heads(q_all, k_all, v_all, bias, hb, dh, out_dtype):
    outs = []
    for h in range(hb):
        q = q_all[:, h * dh:(h + 1) * dh]
        k = k_all[:, h * dh:(h + 1) * dh]
        v = v_all[:, h * dh:(h + 1) * dh]
        s = jnp.dot(q, k.T, preferred_element_type=jnp.float32)
        if bias is not None:
            s = s + bias[h]
        s = s - jnp.max(s, axis=-1, keepdims=True)
        p = jnp.exp(s)
        inv = pl.reciprocal(jnp.sum(p, axis=-1, keepdims=True), approx=True)
        p = (p * inv).astype(v.dtype)
        outs.append(jnp.dot(p, v, preferred_element_type=jnp.float32))
    out = outs[0] if hb == 1 else jnp.concatenate(outs, axis=-1)
    return out.astype(out_dtype)


def _self_attn_kernel(qkv_ref, bias_ref, o_ref, *, hb, dh):
    S = qkv_ref.shape[1]
    qkv = qkv_ref[...].reshape(S, 3 * hb * dh)
    q = qkv[:, :hb * dh]
    k = qkv[:, hb * dh:2 * hb * dh]
    v = qkv[:, 2 * hb * dh:]
    out = _attn_heads(q, k, v, bias_ref[...], hb, dh, o_ref.dtype)
    o_ref[...] = out.reshape(o_ref.shape)


def _cross_attn_kernel(q_ref, kv_ref, o_ref, *, hb, dh):
    S = q_ref.shape[1]
    q = q_ref[...].reshape(S, hb * dh)
    kv = kv_ref[...].reshape(S, 2 * hb * dh)
    k = kv[:, :hb * dh]
    v = kv[:, hb * dh:]
    out = _attn_heads(q, k, v, None, hb, dh, o_ref.dtype)
    o_ref[...] = out.reshape(o_ref.shape)


def self_attention(qkv, bias, H, dh, hb):
    """qkv: [B, S, G*(3*hb*dh)] grouped slab, bias: [H, S, S] f32."""
    B, S, _ = qkv.shape
    G = H // hb
    return pl.pallas_call(
        functools.partial(_self_attn_kernel, hb=hb, dh=dh),
        out_shape=jax.ShapeDtypeStruct((B, S, H * dh), qkv.dtype),
        grid=(B, G),
        in_specs=[
            pl.BlockSpec((1, S, 3 * hb * dh), lambda b, g: (b, 0, g)),
            pl.BlockSpec((hb, S, S), lambda b, g: (g, 0, 0)),
        ],
        out_specs=pl.BlockSpec((1, S, hb * dh), lambda b, g: (b, 0, g)),
        compiler_params=pltpu.CompilerParams(
            dimension_semantics=("parallel", "parallel"),
            vmem_limit_bytes=VMEM_LIMIT),
    )(qkv, bias)


def cross_attention(q, kv, H, dh, hb):
    """q: [B, S, H*dh], kv: [B, S, G*(2*hb*dh)].  No bias (it is zero in T5)."""
    B, S, _ = q.shape
    G = H // hb
    return pl.pallas_call(
        functools.partial(_cross_attn_kernel, hb=hb, dh=dh),
        out_shape=jax.ShapeDtypeStruct((B, S, H * dh), q.dtype),
        grid=(B, G),
        in_specs=[
            pl.BlockSpec((1, S, hb * dh), lambda b, g: (b, 0, g)),
            pl.BlockSpec((1, S, 2 * hb * dh), lambda b, g: (b, 0, g)),
        ],
        out_specs=pl.BlockSpec((1, S, hb * dh), lambda b, g: (b, 0, g)),
        compiler_params=pltpu.CompilerParams(
            dimension_semantics=("parallel", "parallel"),
            vmem_limit_bytes=VMEM_LIMIT),
    )(q, kv)


# -------------------- ranking head: final RMSNorm + Linear(D,1) -------------

def _head_kernel(x_ref, g_ref, w_ref, b_ref, o_ref, *, eps):
    x = x_ref[...].astype(jnp.float32)
    var = jnp.mean(x * x, axis=-1, keepdims=True)
    h = x * jax.lax.rsqrt(var + eps) * g_ref[...]
    logit = jnp.sum(h * w_ref[...], axis=-1, keepdims=True) + b_ref[...]
    o_ref[...] = logit.astype(o_ref.dtype)


def rank_head(x2, norm_w, dense_w, dense_b, eps=1e-6):
    M, D = x2.shape
    tm = _pick_tile(M, 512, 8)
    return pl.pallas_call(
        functools.partial(_head_kernel, eps=eps),
        out_shape=jax.ShapeDtypeStruct((M, 1), jnp.float32),
        grid=(M // tm,),
        in_specs=[
            pl.BlockSpec((tm, D), lambda i: (i, 0)),
            pl.BlockSpec((1, D), lambda i: (0, 0)),
            pl.BlockSpec((1, D), lambda i: (0, 0)),
            pl.BlockSpec((1, 1), lambda i: (0, 0)),
        ],
        out_specs=pl.BlockSpec((tm, 1), lambda i: (i, 0)),
        compiler_params=pltpu.CompilerParams(
            dimension_semantics=("parallel",),
            vmem_limit_bytes=VMEM_LIMIT),
    )(x2, norm_w.reshape(1, D), dense_w.reshape(1, D), dense_b.reshape(1, 1))


# ------------------------ T5 relative position bias -------------------------

def _relative_position_bucket(relative_position, bidirectional,
                              num_buckets=32, max_distance=128):
    relative_buckets = np.zeros_like(relative_position)
    if bidirectional:
        num_buckets //= 2
        relative_buckets += (relative_position > 0).astype(np.int64) * num_buckets
        relative_position = np.abs(relative_position)
    else:
        relative_position = -np.minimum(relative_position, 0)
    max_exact = num_buckets // 2
    is_small = relative_position < max_exact
    rp_safe = np.maximum(relative_position, 1).astype(np.float64)
    rp_if_large = max_exact + (
        np.log(rp_safe / max_exact) / np.log(max_distance / max_exact)
        * (num_buckets - max_exact)
    ).astype(np.int64)
    rp_if_large = np.minimum(rp_if_large, num_buckets - 1)
    relative_buckets += np.where(is_small, relative_position, rp_if_large)
    return relative_buckets


def compute_position_bias(rel_bias_table, Sq, Sk, bidirectional):
    ctx = np.arange(Sq, dtype=np.int64)[:, None]
    mem = np.arange(Sk, dtype=np.int64)[None, :]
    buckets = _relative_position_bucket(mem - ctx, bidirectional)   # [Sq,Sk]
    bias = rel_bias_table[jnp.asarray(buckets)]                     # [Sq,Sk,H]
    return jnp.transpose(bias, (2, 0, 1)).astype(jnp.float32)       # [H,Sq,Sk]


# ------------------------------ model wiring --------------------------------

def t5_encoder(x, params, bias, cfg):
    B, S, D = x.shape
    H, dh, hb = cfg["H"], cfg["dh"], cfg["hb"]
    inner = H * dh
    x2 = x.reshape(-1, D)
    for lp in params["layers"]:
        # LN + fused QKV projection (one kernel)
        qkv = fused_matmul(x2, lp["w_qkv"], norm_w=lp["ln_sa"])
        attn = self_attention(qkv.reshape(B, S, 3 * inner), bias, H, dh, hb)
        # output projection + residual (one kernel)
        x2 = fused_matmul(attn.reshape(-1, inner), lp["w_o"], residual=x2)
        # LN + FFN-in + ReLU (one kernel), FFN-out + residual (one kernel)
        h = fused_matmul(x2, lp["w_ff_in"], norm_w=lp["ln_ff"], activation="relu")
        x2 = fused_matmul(h, lp["w_ff_out"], residual=x2)
    # encoder final RMSNorm is fused into the decoder cross-attn K/V projections
    return x2


def t5_decoder(x, enc_x2, params, enc_final_ln, self_bias, cfg):
    B, S, D = x.shape
    H, dh, hb = cfg["H"], cfg["dh"], cfg["hb"]
    inner = H * dh
    x2 = x.reshape(-1, D)
    for lp in params["layers"]:
        # masked self-attention
        qkv = fused_matmul(x2, lp["w_qkv"], norm_w=lp["ln_sa"])
        attn = self_attention(qkv.reshape(B, S, 3 * inner), self_bias, H, dh, hb)
        x2 = fused_matmul(attn.reshape(-1, inner), lp["w_o"], residual=x2)
        # cross-attention (zero position bias -> no bias tensor at all)
        q = fused_matmul(x2, lp["w_ca_q"], norm_w=lp["ln_ca"])
        kv = fused_matmul(enc_x2, lp["w_ca_kv"], norm_w=enc_final_ln)
        cattn = cross_attention(q.reshape(B, S, inner),
                                kv.reshape(B, S, 2 * inner), H, dh, hb)
        x2 = fused_matmul(cattn.reshape(-1, inner), lp["w_ca_o"], residual=x2)
        # FFN
        h = fused_matmul(x2, lp["w_ff_in"], norm_w=lp["ln_ff"], activation="relu")
        x2 = fused_matmul(h, lp["w_ff_out"], residual=x2)
    # decoder final RMSNorm is fused into the ranking head kernel
    return x2


def rankt5_forward(params, input_ids, cfg):
    B, S = input_ids.shape
    D = cfg["D"]
    # TODO(synk): tokenizer / ms_marco / pretrained t5-small checkpoint are
    # host-side glue; embedding gather stays an XLA jnp.take (data-dependent).
    emb = jnp.take(params["embedding"], input_ids, axis=0)          # [B,S,D] bf16

    enc_bias = compute_position_bias(params["enc_rel_bias"], S, S, bidirectional=True)
    dec_bias = compute_position_bias(params["dec_rel_bias"], S, S, bidirectional=False)
    causal = jnp.asarray(np.where(np.tril(np.ones((S, S), np.float32)) > 0, 0.0, -1e9))
    dec_self_bias = dec_bias + causal[None, :, :]                   # [H,S,S]

    enc_x2 = t5_encoder(emb, params["encoder"], enc_bias, cfg)
    dec_x2 = t5_decoder(emb, enc_x2, params["decoder"],
                        params["encoder"]["final_ln"], dec_self_bias, cfg)

    logits = rank_head(dec_x2, params["decoder"]["final_ln"],
                       params["dense_w"], params["dense_b"])
    return logits.reshape(B, S, 1)


# ------------------------------- param init ---------------------------------

def init_params(key, cfg):
    D, H, dh, dff, L, V, NB = (cfg["D"], cfg["H"], cfg["dh"], cfg["dff"],
                               cfg["layers"], cfg["vocab"], cfg["num_buckets"])
    hb = cfg["hb"]
    G = H // hb
    inner = H * dh
    keys = iter(jax.random.split(key, 512))

    def w(shape, scale=0.02, dtype=jnp.bfloat16):
        return (jax.random.normal(next(keys), shape, jnp.float32) * scale).astype(dtype)

    def pack(parts):
        # pack per-head projections into a head-group-major fused weight so the
        # attention kernel can slice groups purely via its BlockSpec index_map
        parts = [p.reshape(D, G, hb * dh) for p in parts]
        return jnp.stack(parts, axis=2).reshape(D, len(parts) * inner)

    def enc_layer():
        return {
            "ln_sa": jnp.ones((D,), jnp.float32),
            "w_qkv": pack([w((D, inner)), w((D, inner)), w((D, inner))]),
            "w_o": w((inner, D)),
            "ln_ff": jnp.ones((D,), jnp.float32),
            "w_ff_in": w((D, dff)),
            "w_ff_out": w((dff, D)),
        }

    def dec_layer():
        lp = enc_layer()
        lp["ln_ca"] = jnp.ones((D,), jnp.float32)
        lp["w_ca_q"] = w((D, inner))
        lp["w_ca_kv"] = pack([w((D, inner)), w((D, inner))])
        lp["w_ca_o"] = w((inner, D))
        return lp

    return {
        "embedding": w((V, D), scale=1.0),
        "enc_rel_bias": w((NB, H), dtype=jnp.float32),
        "dec_rel_bias": w((NB, H), dtype=jnp.float32),
        "encoder": {"layers": [enc_layer() for _ in range(L)],
                    "final_ln": jnp.ones((D,), jnp.float32)},
        "decoder": {"layers": [dec_layer() for _ in range(L)],
                    "final_ln": jnp.ones((D,), jnp.float32)},
        "dense_w": w((1, D), dtype=jnp.float32),
        "dense_b": jnp.zeros((1, 1), jnp.float32),
    }


# ---------------------------------- main -------------------------------------

if __name__ == "__main__":
    cfg = dict(D=32, H=4, dh=8, dff=64, layers=2, vocab=64,
               num_buckets=32, max_distance=128)
    cfg["hb"] = _head_block(cfg["H"], cfg["dh"])

    key = jax.random.PRNGKey(0)
    k_param, k_ids = jax.random.split(key)
    params = init_params(k_param, cfg)

    B, S = 2, 8
    input_ids = jax.random.randint(k_ids, (B, S), 0, cfg["vocab"], dtype=jnp.int32)

    fwd = jax.jit(functools.partial(rankt5_forward, cfg=cfg))
    out = fwd(params, input_ids)
    out = jax.block_until_ready(out)
    assert out.shape == (B, S, 1) and out.dtype == jnp.float32
    assert bool(jnp.all(jnp.isfinite(out)))
    print("KERNEL_OK")
</pallas_src>

<mosaic_0001>
module attributes {stable_mosaic.version = 11 : i64} {
  func.func @_fused_matmul_kernel(%arg0: i32, %arg1: i32, %arg2: i32, %arg3: memref<16x32xbf16, #tpu.memory_space<vmem>>, %arg4: memref<32x96xbf16, #tpu.memory_space<vmem>>, %arg5: memref<1x32xf32, #tpu.memory_space<vmem>>, %arg6: memref<16x96xbf16, #tpu.memory_space<vmem>>) attributes {dimension_semantics = [#tpu.dimension_semantics<parallel>, #tpu.dimension_semantics<parallel>, #tpu.dimension_semantics<arbitrary>], iteration_bounds = array<i64: 1, 1, 1>, scalar_prefetch = 0 : i64, scratch_operands = 0 : i64, tpu.core_type = #tpu.core_type<tc>, window_params = [{transform_indices = @transform_0, window_bounds = array<i64: 16, 32>}, {transform_indices = @transform_1, window_bounds = array<i64: 32, 96>}, {transform_indices = @transform_2, window_bounds = array<i64: 1, 32>}, {transform_indices = @transform_3, window_bounds = array<i64: 16, 96>}]} {
    %c0 = arith.constant 0 : index
    %c0_0 = arith.constant 0 : index
    %0 = vector.load %arg3[%c0, %c0_0] : memref<16x32xbf16, #tpu.memory_space<vmem>>, vector<16x32xbf16>
    %1 = arith.extf %0 : vector<16x32xbf16> to vector<16x32xf32>
    %2 = arith.mulf %1, %1 : vector<16x32xf32>
    %cst = arith.constant dense<0.000000e+00> : vector<16xf32>
    %3 = vector.multi_reduction <add>, %2, %cst [1] : vector<16x32xf32> to vector<16xf32>
    %4 = vector.shape_cast %3 : vector<16xf32> to vector<16x1xf32>
    %cst_1 = arith.constant 3.200000e+01 : f32
    %5 = vector.broadcast %cst_1 : f32 to vector<16x1xf32>
    %6 = arith.divf %4, %5 : vector<16x1xf32>
    %cst_2 = arith.constant 9.99999997E-7 : f32
    %7 = vector.broadcast %cst_2 : f32 to vector<16x1xf32>
    %8 = arith.addf %6, %7 : vector<16x1xf32>
    %9 = math.rsqrt %8 : vector<16x1xf32>
    %10 = vector.broadcast %9 : vector<16x1xf32> to vector<16x32xf32>
    %11 = arith.mulf %1, %10 : vector<16x32xf32>
    %c0_3 = arith.constant 0 : index
    %c0_4 = arith.constant 0 : index
    %12 = vector.load %arg5[%c0_3, %c0_4] : memref<1x32xf32, #tpu.memory_space<vmem>>, vector<1x32xf32>
    %13 = vector.broadcast %12 : vector<1x32xf32> to vector<16x32xf32>
    %14 = arith.mulf %11, %13 : vector<16x32xf32>
    %15 = arith.truncf %14 : vector<16x32xf32> to vector<16x32xbf16>
    %c0_5 = arith.constant 0 : index
    %c0_6 = arith.constant 0 : index
    %16 = vector.load %arg4[%c0_5, %c0_6] : memref<32x96xbf16, #tpu.memory_space<vmem>>, vector<32x96xbf16>
    %cst_7 = arith.constant dense<0.000000e+00> : vector<16x96xf32>
    %17 = tpu.matmul %15, %16, %cst_7 {dimension_numbers = #tpu.dot_dimension_numbers<[1], [0], [0], [1], [0, 0, 1, 1], [], []>} : vector<16x32xbf16>, vector<32x96xbf16>, vector<16x96xf32> -> vector<16x96xf32>
    %18 = arith.truncf %17 : vector<16x96xf32> to vector<16x96xbf16>
    %c0_8 = arith.constant 0 : index
    %c0_9 = arith.constant 0 : index
    %19 = vector.load %arg6[%c0_8, %c0_9] : memref<16x96xbf16, #tpu.memory_space<vmem>>, vector<16x96xbf16>
    tpu.vector_store %arg6[%c0_8, %c0_9], %18 {strides = array<i32>} : memref<16x96xbf16, #tpu.memory_space<vmem>>, vector<16x96xbf16>,
    return
  }
  func.func @transform_0(%arg0: i32, %arg1: i32, %arg2: i32) -> (i32, i32) {
    %c0_i32 = arith.constant 0 : i32
    return %arg0, %arg2 : i32, i32
  }
  func.func @transform_1(%arg0: i32, %arg1: i32, %arg2: i32) -> (i32, i32) {
    %c0_i32 = arith.constant 0 : i32
    return %arg2, %arg1 : i32, i32
  }
  func.func @transform_2(%arg0: i32, %arg1: i32, %arg2: i32) -> (i32, i32) {
    %c0_i32 = arith.constant 0 : i32
    %c0_i32_0 = arith.constant 0 : i32
    return %c0_i32, %arg2 : i32, i32
  }
  func.func @transform_3(%arg0: i32, %arg1: i32, %arg2: i32) -> (i32, i32) {
    %c0_i32 = arith.constant 0 : i32
    return %arg0, %arg1 : i32, i32
  }
}

module attributes {stable_mosaic.version = 11 : i64} {
  func.func @_fused_matmul_kernel(%arg0: i32, %arg1: i32, %arg2: i32, %arg3: memref<16x32xbf16, #tpu.memory_space<vmem>>, %arg4: memref<32x32xbf16, #tpu.memory_space<vmem>>, %arg5: memref<16x32xbf16, #tpu.memory_space<vmem>>, %arg6: memref<16x32xbf16, #tpu.memory_space<vmem>>) attributes {dimension_semantics = [#tpu.dimension_semantics<parallel>, #tpu.dimension_semantics<parallel>, #tpu.dimension_semantics<arbitrary>], iteration_bounds = array<i64: 1, 1, 1>, scalar_prefetch = 0 : i64, scratch_operands = 0 : i64, tpu.core_type = #tpu.core_type<tc>, window_params = [{transform_indices = @transform_0, window_bounds = array<i64: 16, 32>}, {transform_indices = @transform_1, window_bounds = array<i64: 32, 32>}, {transform_indices = @transform_2, window_bounds = array<i64: 16, 32>}, {transform_indices = @transform_3, window_bounds = array<i64: 16, 32>}]} {
    %c0 = arith.constant 0 : index
    %c0_0 = arith.constant 0 : index
    %0 = vector.load %arg3[%c0, %c0_0] : memref<16x32xbf16, #tpu.memory_space<vmem>>, vector<16x32xbf16>
    %c0_1 = arith.constant 0 : index
    %c0_2 = arith.constant 0 : index
    %1 = vector.load %arg4[%c0_1, %c0_2] : memref<32x32xbf16, #tpu.memory_space<vmem>>, vector<32x32xbf16>
    %cst = arith.constant dense<0.000000e+00> : vector<16x32xf32>
    %2 = tpu.matmul %0, %1, %cst {dimension_numbers = #tpu.dot_dimension_numbers<[1], [0], [0], [1], [0, 0, 1, 1], [], []>} : vector<16x32xbf16>, vector<32x32xbf16>, vector<16x32xf32> -> vector<16x32xf32>
    %c0_3 = arith.constant 0 : index
    %c0_4 = arith.constant 0 : index
    %3 = vector.load %arg5[%c0_3, %c0_4] : memref<16x32xbf16, #tpu.memory_space<vmem>>, vector<16x32xbf16>
    %4 = arith.extf %3 : vector<16x32xbf16> to vector<16x32xf32>
    %5 = arith.addf %2, %4 : vector<16x32xf32>
    %6 = arith.truncf %5 : vector<16x32xf32> to vector<16x32xbf16>
    %c0_5 = arith.constant 0 : index
    %c0_6 = arith.constant 0 : index
    %7 = vector.load %arg6[%c0_5, %c0_6] : memref<16x32xbf16, #tpu.memory_space<vmem>>, vector<16x32xbf16>
    tpu.vector_store %arg6[%c0_5, %c0_6], %6 {strides = array<i32>} : memref<16x32xbf16, #tpu.memory_space<vmem>>, vector<16x32xbf16>,
    return
  }
  func.func @transform_0(%arg0: i32, %arg1: i32, %arg2: i32) -> (i32, i32) {
    %c0_i32 = arith.constant 0 : i32
    return %arg0, %arg2 : i32, i32
  }
  func.func @transform_1(%arg0: i32, %arg1: i32, %arg2: i32) -> (i32, i32) {
    %c0_i32 = arith.constant 0 : i32
    return %arg2, %arg1 : i32, i32
  }
  func.func @transform_2(%arg0: i32, %arg1: i32, %arg2: i32) -> (i32, i32) {
    %c0_i32 = arith.constant 0 : i32
    return %arg0, %arg1 : i32, i32
  }
  func.func @transform_3(%arg0: i32, %arg1: i32, %arg2: i32) -> (i32, i32) {
    %c0_i32 = arith.constant 0 : i32
    return %arg0, %arg1 : i32, i32
  }
}

module attributes {stable_mosaic.version = 11 : i64} {
  func.func @_fused_matmul_kernel(%arg0: i32, %arg1: i32, %arg2: i32, %arg3: memref<16x32xbf16, #tpu.memory_space<vmem>>, %arg4: memref<32x64xbf16, #tpu.memory_space<vmem>>, %arg5: memref<1x32xf32, #tpu.memory_space<vmem>>, %arg6: memref<16x64xbf16, #tpu.memory_space<vmem>>) attributes {dimension_semantics = [#tpu.dimension_semantics<parallel>, #tpu.dimension_semantics<parallel>, #tpu.dimension_semantics<arbitrary>], iteration_bounds = array<i64: 1, 1, 1>, scalar_prefetch = 0 : i64, scratch_operands = 0 : i64, tpu.core_type = #tpu.core_type<tc>, window_params = [{transform_indices = @transform_0, window_bounds = array<i64: 16, 32>}, {transform_indices = @transform_1, window_bounds = array<i64: 32, 64>}, {transform_indices = @transform_2, window_bounds = array<i64: 1, 32>}, {transform_indices = @transform_3, window_bounds = array<i64: 16, 64>}]} {
    %c0 = arith.constant 0 : index
    %c0_0 = arith.constant 0 : index
    %0 = vector.load %arg3[%c0, %c0_0] : memref<16x32xbf16, #tpu.memory_space<vmem>>, vector<16x32xbf16>
    %1 = arith.extf %0 : vector<16x32xbf16> to vector<16x32xf32>
    %2 = arith.mulf %1, %1 : vector<16x32xf32>
    %cst = arith.constant dense<0.000000e+00> : vector<16xf32>
    %3 = vector.multi_reduction <add>, %2, %cst [1] : vector<16x32xf32> to vector<16xf32>
    %4 = vector.shape_cast %3 : vector<16xf32> to vector<16x1xf32>
    %cst_1 = arith.constant 3.200000e+01 : f32
    %5 = vector.broadcast %cst_1 : f32 to vector<16x1xf32>
    %6 = arith.divf %4, %5 : vector<16x1xf32>
    %cst_2 = arith.constant 9.99999997E-7 : f32
    %7 = vector.broadcast %cst_2 : f32 to vector<16x1xf32>
    %8 = arith.addf %6, %7 : vector<16x1xf32>
    %9 = math.rsqrt %8 : vector<16x1xf32>
    %10 = vector.broadcast %9 : vector<16x1xf32> to vector<16x32xf32>
    %11 = arith.mulf %1, %10 : vector<16x32xf32>
    %c0_3 = arith.constant 0 : index
    %c0_4 = arith.constant 0 : index
    %12 = vector.load %arg5[%c0_3, %c0_4] : memref<1x32xf32, #tpu.memory_space<vmem>>, vector<1x32xf32>
    %13 = vector.broadcast %12 : vector<1x32xf32> to vector<16x32xf32>
    %14 = arith.mulf %11, %13 : vector<16x32xf32>
    %15 = arith.truncf %14 : vector<16x32xf32> to vector<16x32xbf16>
    %c0_5 = arith.constant 0 : index
    %c0_6 = arith.constant 0 : index
    %16 = vector.load %arg4[%c0_5, %c0_6] : memref<32x64xbf16, #tpu.memory_space<vmem>>, vector<32x64xbf16>
    %cst_7 = arith.constant dense<0.000000e+00> : vector<16x64xf32>
    %17 = tpu.matmul %15, %16, %cst_7 {dimension_numbers = #tpu.dot_dimension_numbers<[1], [0], [0], [1], [0, 0, 1, 1], [], []>} : vector<16x32xbf16>, vector<32x64xbf16>, vector<16x64xf32> -> vector<16x64xf32>
    %cst_8 = arith.constant 0.000000e+00 : f32
    %18 = vector.broadcast %cst_8 : f32 to vector<16x64xf32>
    %19 = arith.maximumf %17, %18 : vector<16x64xf32>
    %20 = arith.truncf %19 : vector<16x64xf32> to vector<16x64xbf16>
    %c0_9 = arith.constant 0 : index
    %c0_10 = arith.constant 0 : index
    %21 = vector.load %arg6[%c0_9, %c0_10] : memref<16x64xbf16, #tpu.memory_space<vmem>>, vector<16x64xbf16>
    tpu.vector_store %arg6[%c0_9, %c0_10], %20 {strides = array<i32>} : memref<16x64xbf16, #tpu.memory_space<vmem>>, vector<16x64xbf16>,
    return
  }
  func.func @transform_0(%arg0: i32, %arg1: i32, %arg2: i32) -> (i32, i32) {
    %c0_i32 = arith.constant 0 : i32
    return %arg0, %arg2 : i32, i32
  }
  func.func @transform_1(%arg0: i32, %arg1: i32, %arg2: i32) -> (i32, i32) {
    %c0_i32 = arith.constant 0 : i32
    return %arg2, %arg1 : i32, i32
  }
  func.func @transform_2(%arg0: i32, %arg1: i32, %arg2: i32) -> (i32, i32) {
    %c0_i32 = arith.constant 0 : i32
    %c0_i32_0 = arith.constant 0 : i32
    return %c0_i32, %arg2 : i32, i32
  }
  func.func @transform_3(%arg0: i32, %arg1: i32, %arg2: i32) -> (i32, i32) {
    %c0_i32 = arith.constant 0 : i32
    return %arg0, %arg1 : i32, i32
  }
}

module attributes {stable_mosaic.version = 11 : i64} {
  func.func @_self_attn_kernel(%arg0: i32, %arg1: i32, %arg2: memref<1x8x96xbf16, #tpu.memory_space<vmem>>, %arg3: memref<4x8x8xf32, #tpu.memory_space<vmem>>, %arg4: memref<1x8x32xbf16, #tpu.memory_space<vmem>>) attributes {dimension_semantics = [#tpu.dimension_semantics<parallel>, #tpu.dimension_semantics<parallel>], iteration_bounds = array<i64: 2, 1>, scalar_prefetch = 0 : i64, scratch_operands = 0 : i64, tpu.core_type = #tpu.core_type<tc>, window_params = [{transform_indices = @transform_0, window_bounds = array<i64: 1, 8, 96>}, {transform_indices = @transform_1, window_bounds = array<i64: 4, 8, 8>}, {transform_indices = @transform_2, window_bounds = array<i64: 1, 8, 32>}]} {
    %c0 = arith.constant 0 : index
    %c0_0 = arith.constant 0 : index
    %c0_1 = arith.constant 0 : index
    %0 = vector.load %arg2[%c0, %c0_0, %c0_1] : memref<1x8x96xbf16, #tpu.memory_space<vmem>>, vector<1x8x96xbf16>
    %1 = vector.shape_cast %0 : vector<1x8x96xbf16> to vector<8x96xbf16>
    %2 = vector.extract_strided_slice %1 {offsets = [0, 0], sizes = [8, 32], strides = [1, 1]} : vector<8x96xbf16> to vector<8x32xbf16>
    %3 = vector.extract_strided_slice %1 {offsets = [0, 32], sizes = [8, 32], strides = [1, 1]} : vector<8x96xbf16> to vector<8x32xbf16>
    %4 = vector.extract_strided_slice %1 {offsets = [0, 64], sizes = [8, 32], strides = [1, 1]} : vector<8x96xbf16> to vector<8x32xbf16>
    %c0_2 = arith.constant 0 : index
    %c0_3 = arith.constant 0 : index
    %c0_4 = arith.constant 0 : index
    %5 = vector.load %arg3[%c0_2, %c0_3, %c0_4] : memref<4x8x8xf32, #tpu.memory_space<vmem>>, vector<4x8x8xf32>
    %6 = vector.extract_strided_slice %2 {offsets = [0, 0], sizes = [8, 8], strides = [1, 1]} : vector<8x32xbf16> to vector<8x8xbf16>
    %7 = vector.extract_strided_slice %3 {offsets = [0, 0], sizes = [8, 8], strides = [1, 1]} : vector<8x32xbf16> to vector<8x8xbf16>
    %8 = vector.extract_strided_slice %4 {offsets = [0, 0], sizes = [8, 8], strides = [1, 1]} : vector<8x32xbf16> to vector<8x8xbf16>
    %9 = tpu.transpose %7, [1, 0] : vector<8x8xbf16> -> vector<8x8xbf16>
    %cst = arith.constant dense<0.000000e+00> : vector<8x8xf32>
    %10 = tpu.matmul %6, %9, %cst {dimension_numbers = #tpu.dot_dimension_numbers<[1], [0], [0], [1], [0, 0, 1, 1], [], []>} : vector<8x8xbf16>, vector<8x8xbf16>, vector<8x8xf32> -> vector<8x8xf32>
    %11 = vector.extract_strided_slice %5 {offsets = [0, 0, 0], sizes = [1, 8, 8], strides = [1, 1, 1]} : vector<4x8x8xf32> to vector<1x8x8xf32>
    %12 = vector.shape_cast %11 : vector<1x8x8xf32> to vector<8x8xf32>
    %13 = arith.addf %10, %12 : vector<8x8xf32>
    %cst_5 = arith.constant dense<0xFF800000> : vector<8xf32>
    %14 = vector.multi_reduction <maximumf>, %13, %cst_5 [1] : vector<8x8xf32> to vector<8xf32>
    %15 = vector.shape_cast %14 : vector<8xf32> to vector<8x1xf32>
    %16 = vector.broadcast %15 : vector<8x1xf32> to vector<8x8xf32>
    %17 = arith.subf %13, %16 : vector<8x8xf32>
    %18 = math.exp %17 : vector<8x8xf32>
    %cst_6 = arith.constant dense<0.000000e+00> : vector<8xf32>
    %19 = vector.multi_reduction <add>, %18, %cst_6 [1] : vector<8x8xf32> to vector<8xf32>
    %20 = vector.shape_cast %19 : vector<8xf32> to vector<8x1xf32>
    %21 = tpu.reciprocal %20 {approx = true} : vector<8x1xf32> -> vector<8x1xf32>
    %22 = vector.broadcast %21 : vector<8x1xf32> to vector<8x8xf32>
    %23 = arith.mulf %18, %22 : vector<8x8xf32>
    %24 = arith.truncf %23 : vector<8x8xf32> to vector<8x8xbf16>
    %cst_7 = arith.constant dense<0.000000e+00> : vector<8x8xf32>
    %25 = tpu.matmul %24, %8, %cst_7 {dimension_numbers = #tpu.dot_dimension_numbers<[1], [0], [0], [1], [0, 0, 1, 1], [], []>} : vector<8x8xbf16>, vector<8x8xbf16>, vector<8x8xf32> -> vector<8x8xf32>
    %26 = vector.extract_strided_slice %2 {offsets = [0, 8], sizes = [8, 8], strides = [1, 1]} : vector<8x32xbf16> to vector<8x8xbf16>
    %27 = vector.extract_strided_slice %3 {offsets = [0, 8], sizes = [8, 8], strides = [1, 1]} : vector<8x32xbf16> to vector<8x8xbf16>
    %28 = vector.extract_strided_slice %4 {offsets = [0, 8], sizes = [8, 8], strides = [1, 1]} : vector<8x32xbf16> to vector<8x8xbf16>
    %29 = tpu.transpose %27, [1, 0] : vector<8x8xbf16> -> vector<8x8xbf16>
    %cst_8 = arith.constant dense<0.000000e+00> : vector<8x8xf32>
    %30 = tpu.matmul %26, %29, %cst_8 {dimension_numbers = #tpu.dot_dimension_numbers<[1], [0], [0], [1], [0, 0, 1, 1], [], []>} : vector<8x8xbf16>, vector<8x8xbf16>, vector<8x8xf32> -> vector<8x8xf32>
    %31 = vector.extract_strided_slice %5 {offsets = [1, 0, 0], sizes = [1, 8, 8], strides = [1, 1, 1]} : vector<4x8x8xf32> to vector<1x8x8xf32>
    %32 = vector.shape_cast %31 : vector<1x8x8xf32> to vector<8x8xf32>
    %33 = arith.addf %30, %32 : vector<8x8xf32>
    %cst_9 = arith.constant dense<0xFF800000> : vector<8xf32>
    %34 = vector.multi_reduction <maximumf>, %33, %cst_9 [1] : vector<8x8xf32> to vector<8xf32>
    %35 = vector.shape_cast %34 : vector<8xf32> to vector<8x1xf32>
    %36 = vector.broadcast %35 : vector<8x1xf32> to vector<8x8xf32>
    %37 = arith.subf %33, %36 : vector<8x8xf32>
    %38 = math.exp %37 : vector<8x8xf32>
    %cst_10 = arith.constant dense<0.000000e+00> : vector<8xf32>
    %39 = vector.multi_reduction <add>, %38, %cst_10 [1] : vector<8x8xf32> to vector<8xf32>
    %40 = vector.shape_cast %39 : vector<8xf32> to vector<8x1xf32>
    %41 = tpu.reciprocal %40 {approx = true} : vector<8x1xf32> -> vector<8x1xf32>
    %42 = vector.broadcast %41 : vector<8x1xf32> to vector<8x8xf32>
    %43 = arith.mulf %38, %42 : vector<8x8xf32>
    %44 = arith.truncf %43 : vector<8x8xf32> to vector<8x8xbf16>
    %cst_11 = arith.constant dense<0.000000e+00> : vector<8x8xf32>
    %45 = tpu.matmul %44, %28, %cst_11 {dimension_numbers = #tpu.dot_dimension_numbers<[1], [0], [0], [1], [0, 0, 1, 1], [], []>} : vector<8x8xbf16>, vector<8x8xbf16>, vector<8x8xf32> -> vector<8x8xf32>
    %46 = vector.extract_strided_slice %2 {offsets = [0, 16], sizes = [8, 8], strides = [1, 1]} : vector<8x32xbf16> to vector<8x8xbf16>
    %47 = vector.extract_strided_slice %3 {offsets = [0, 16], sizes = [8, 8], strides = [1, 1]} : vector<8x32xbf16> to vector<8x8xbf16>
    %48 = vector.extract_strided_slice %4 {offsets = [0, 16], sizes = [8, 8], strides = [1, 1]} : vector<8x32xbf16> to vector<8x8xbf16>
    %49 = tpu.transpose %47, [1, 0] : vector<8x8xbf16> -> vector<8x8xbf16>
    %cst_12 = arith.constant dense<0.000000e+00> : vector<8x8xf32>
    %50 = tpu.matmul %46, %49, %cst_12 {dimension_numbers = #tpu.dot_dimension_numbers<[1], [0], [0], [1], [0, 0, 1, 1], [], []>} : vector<8x8xbf16>, vector<8x8xbf16>, vector<8x8xf32> -> vector<8x8xf32>
    %51 = vector.extract_strided_slice %5 {offsets = [2, 0, 0], sizes = [1, 8, 8], strides = [1, 1, 1]} : vector<4x8x8xf32> to vector<1x8x8xf32>
    %52 = vector.shape_cast %51 : vector<1x8x8xf32> to vector<8x8xf32>
    %53 = arith.addf %50, %52 : vector<8x8xf32>
    %cst_13 = arith.constant dense<0xFF800000> : vector<8xf32>
    %54 = vector.multi_reduction <maximumf>, %53, %cst_13 [1] : vector<8x8xf32> to vector<8xf32>
    %55 = vector.shape_cast %54 : vector<8xf32> to vector<8x1xf32>
    %56 = vector.broadcast %55 : vector<8x1xf32> to vector<8x8xf32>
    %57 = arith.subf %53, %56 : vector<8x8xf32>
    %58 = math.exp %57 : vector<8x8xf32>
    %cst_14 = arith.constant dense<0.000000e+00> : vector<8xf32>
    %59 = vector.multi_reduction <add>, %58, %cst_14 [1] : vector<8x8xf32> to vector<8xf32>
    %60 = vector.shape_cast %59 : vector<8xf32> to vector<8x1xf32>
    %61 = tpu.reciprocal %60 {approx = true} : vector<8x1xf32> -> vector<8x1xf32>
    %62 = vector.broadcast %61 : vector<8x1xf32> to vector<8x8xf32>
    %63 = arith.mulf %58, %62 : vector<8x8xf32>
    %64 = arith.truncf %63 : vector<8x8xf32> to vector<8x8xbf16>
    %cst_15 = arith.constant dense<0.000000e+00> : vector<8x8xf32>
    %65 = tpu.matmul %64, %48, %cst_15 {dimension_numbers = #tpu.dot_dimension_numbers<[1], [0], [0], [1], [0, 0, 1, 1], [], []>} : vector<8x8xbf16>, vector<8x8xbf16>, vector<8x8xf32> -> vector<8x8xf32>
    %66 = vector.extract_strided_slice %2 {offsets = [0, 24], sizes = [8, 8], strides = [1, 1]} : vector<8x32xbf16> to vector<8x8xbf16>
    %67 = vector.extract_strided_slice %3 {offsets = [0, 24], sizes = [8, 8], strides = [1, 1]} : vector<8x32xbf16> to vector<8x8xbf16>
    %68 = vector.extract_strided_slice %4 {offsets = [0, 24], sizes = [8, 8], strides = [1, 1]} : vector<8x32xbf16> to vector<8x8xbf16>
    %69 = tpu.transpose %67, [1, 0] : vector<8x8xbf16> -> vector<8x8xbf16>
    %cst_16 = arith.constant dense<0.000000e+00> : vector<8x8xf32>
    %70 = tpu.matmul %66, %69, %cst_16 {dimension_numbers = #tpu.dot_dimension_numbers<[1], [0], [0], [1], [0, 0, 1, 1], [], []>} : vector<8x8xbf16>, vector<8x8xbf16>, vector<8x8xf32> -> vector<8x8xf32>
    %71 = vector.extract_strided_slice %5 {offsets = [3, 0, 0], sizes = [1, 8, 8], strides = [1, 1, 1]} : vector<4x8x8xf32> to vector<1x8x8xf32>
    %72 = vector.shape_cast %71 : vector<1x8x8xf32> to vector<8x8xf32>
    %73 = arith.addf %70, %72 : vector<8x8xf32>
    %cst_17 = arith.constant dense<0xFF800000> : vector<8xf32>
    %74 = vector.multi_reduction <maximumf>, %73, %cst_17 [1] : vector<8x8xf32> to vector<8xf32>
    %75 = vector.shape_cast %74 : vector<8xf32> to vector<8x1xf32>
    %76 = vector.broadcast %75 : vector<8x1xf32> to vector<8x8xf32>
    %77 = arith.subf %73, %76 : vector<8x8xf32>
    %78 = math.exp %77 : vector<8x8xf32>
    %cst_18 = arith.constant dense<0.000000e+00> : vector<8xf32>
    %79 = vector.multi_reduction <add>, %78, %cst_18 [1] : vector<8x8xf32> to vector<8xf32>
    %80 = vector.shape_cast %79 : vector<8xf32> to vector<8x1xf32>
    %81 = tpu.reciprocal %80 {approx = true} : vector<8x1xf32> -> vector<8x1xf32>
    %82 = vector.broadcast %81 : vector<8x1xf32> to vector<8x8xf32>
    %83 = arith.mulf %78, %82 : vector<8x8xf32>
    %84 = arith.truncf %83 : vector<8x8xf32> to vector<8x8xbf16>
    %cst_19 = arith.constant dense<0.000000e+00> : vector<8x8xf32>
    %85 = tpu.matmul %84, %68, %cst_19 {dimension_numbers = #tpu.dot_dimension_numbers<[1], [0], [0], [1], [0, 0, 1, 1], [], []>} : vector<8x8xbf16>, vector<8x8xbf16>, vector<8x8xf32> -> vector<8x8xf32>
    %86 = tpu.concatenate %25, %45, %65, %85 in 1 : vector<8x8xf32>, vector<8x8xf32>, vector<8x8xf32>, vector<8x8xf32> -> vector<8x32xf32>
    %87 = arith.truncf %86 : vector<8x32xf32> to vector<8x32xbf16>
    %88 = vector.shape_cast %87 : vector<8x32xbf16> to vector<1x8x32xbf16>
    %c0_20 = arith.constant 0 : index
    %c0_21 = arith.constant 0 : index
    %c0_22 = arith.constant 0 : index
    %89 = vector.load %arg4[%c0_20, %c0_21, %c0_22] : memref<1x8x32xbf16, #tpu.memory_space<vmem>>, vector<1x8x32xbf16>
    tpu.vector_store %arg4[%c0_20, %c0_21, %c0_22], %88 {strides = array<i32>} : memref<1x8x32xbf16, #tpu.memory_space<vmem>>, vector<1x8x32xbf16>,
    return
  }
  func.func @transform_0(%arg0: i32, %arg1: i32) -> (i32, i32, i32) {
    %c0_i32 = arith.constant 0 : i32
    %c0_i32_0 = arith.constant 0 : i32
    return %arg0, %c0_i32, %arg1 : i32, i32, i32
  }
  func.func @transform_1(%arg0: i32, %arg1: i32) -> (i32, i32, i32) {
    %c0_i32 = arith.constant 0 : i32
    %c0_i32_0 = arith.constant 0 : i32
    %c0_i32_1 = arith.constant 0 : i32
    return %arg1, %c0_i32, %c0_i32_0 : i32, i32, i32
  }
  func.func @transform_2(%arg0: i32, %arg1: i32) -> (i32, i32, i32) {
    %c0_i32 = arith.constant 0 : i32
    %c0_i32_0 = arith.constant 0 : i32
    return %arg0, %c0_i32, %arg1 : i32, i32, i32
  }
}

module attributes {stable_mosaic.version = 11 : i64} {
  func.func @_fused_matmul_kernel(%arg0: i32, %arg1: i32, %arg2: i32, %arg3: memref<16x64xbf16, #tpu.memory_space<vmem>>, %arg4: memref<64x32xbf16, #tpu.memory_space<vmem>>, %arg5: memref<16x32xbf16, #tpu.memory_space<vmem>>, %arg6: memref<16x32xbf16, #tpu.memory_space<vmem>>) attributes {dimension_semantics = [#tpu.dimension_semantics<parallel>, #tpu.dimension_semantics<parallel>, #tpu.dimension_semantics<arbitrary>], iteration_bounds = array<i64: 1, 1, 1>, scalar_prefetch = 0 : i64, scratch_operands = 0 : i64, tpu.core_type = #tpu.core_type<tc>, window_params = [{transform_indices = @transform_0, window_bounds = array<i64: 16, 64>}, {transform_indices = @transform_1, window_bounds = array<i64: 64, 32>}, {transform_indices = @transform_2, window_bounds = array<i64: 16, 32>}, {transform_indices = @transform_3, window_bounds = array<i64: 16, 32>}]} {
    %c0 = arith.constant 0 : index
    %c0_0 = arith.constant 0 : index
    %0 = vector.load %arg3[%c0, %c0_0] : memref<16x64xbf16, #tpu.memory_space<vmem>>, vector<16x64xbf16>
    %c0_1 = arith.constant 0 : index
    %c0_2 = arith.constant 0 : index
    %1 = vector.load %arg4[%c0_1, %c0_2] : memref<64x32xbf16, #tpu.memory_space<vmem>>, vector<64x32xbf16>
    %cst = arith.constant dense<0.000000e+00> : vector<16x32xf32>
    %2 = tpu.matmul %0, %1, %cst {dimension_numbers = #tpu.dot_dimension_numbers<[1], [0], [0], [1], [0, 0, 1, 1], [], []>} : vector<16x64xbf16>, vector<64x32xbf16>, vector<16x32xf32> -> vector<16x32xf32>
    %c0_3 = arith.constant 0 : index
    %c0_4 = arith.constant 0 : index
    %3 = vector.load %arg5[%c0_3, %c0_4] : memref<16x32xbf16, #tpu.memory_space<vmem>>, vector<16x32xbf16>
    %4 = arith.extf %3 : vector<16x32xbf16> to vector<16x32xf32>
    %5 = arith.addf %2, %4 : vector<16x32xf32>
    %6 = arith.truncf %5 : vector<16x32xf32> to vector<16x32xbf16>
    %c0_5 = arith.constant 0 : index
    %c0_6 = arith.constant 0 : index
    %7 = vector.load %arg6[%c0_5, %c0_6] : memref<16x32xbf16, #tpu.memory_space<vmem>>, vector<16x32xbf16>
    tpu.vector_store %arg6[%c0_5, %c0_6], %6 {strides = array<i32>} : memref<16x32xbf16, #tpu.memory_space<vmem>>, vector<16x32xbf16>,
    return
  }
  func.func @transform_0(%arg0: i32, %arg1: i32, %arg2: i32) -> (i32, i32) {
    %c0_i32 = arith.constant 0 : i32
    return %arg0, %arg2 : i32, i32
  }
  func.func @transform_1(%arg0: i32, %arg1: i32, %arg2: i32) -> (i32, i32) {
    %c0_i32 = arith.constant 0 : i32
    return %arg2, %arg1 : i32, i32
  }
  func.func @transform_2(%arg0: i32, %arg1: i32, %arg2: i32) -> (i32, i32) {
    %c0_i32 = arith.constant 0 : i32
    return %arg0, %arg1 : i32, i32
  }
  func.func @transform_3(%arg0: i32, %arg1: i32, %arg2: i32) -> (i32, i32) {
    %c0_i32 = arith.constant 0 : i32
    return %arg0, %arg1 : i32, i32
  }
}

module attributes {stable_mosaic.version = 11 : i64} {
  func.func @_fused_matmul_kernel(%arg0: i32, %arg1: i32, %arg2: i32, %arg3: memref<16x32xbf16, #tpu.memory_space<vmem>>, %arg4: memref<32x32xbf16, #tpu.memory_space<vmem>>, %arg5: memref<1x32xf32, #tpu.memory_space<vmem>>, %arg6: memref<16x32xbf16, #tpu.memory_space<vmem>>) attributes {dimension_semantics = [#tpu.dimension_semantics<parallel>, #tpu.dimension_semantics<parallel>, #tpu.dimension_semantics<arbitrary>], iteration_bounds = array<i64: 1, 1, 1>, scalar_prefetch = 0 : i64, scratch_operands = 0 : i64, tpu.core_type = #tpu.core_type<tc>, window_params = [{transform_indices = @transform_0, window_bounds = array<i64: 16, 32>}, {transform_indices = @transform_1, window_bounds = array<i64: 32, 32>}, {transform_indices = @transform_2, window_bounds = array<i64: 1, 32>}, {transform_indices = @transform_3, window_bounds = array<i64: 16, 32>}]} {
    %c0 = arith.constant 0 : index
    %c0_0 = arith.constant 0 : index
    %0 = vector.load %arg3[%c0, %c0_0] : memref<16x32xbf16, #tpu.memory_space<vmem>>, vector<16x32xbf16>
    %1 = arith.extf %0 : vector<16x32xbf16> to vector<16x32xf32>
    %2 = arith.mulf %1, %1 : vector<16x32xf32>
    %cst = arith.constant dense<0.000000e+00> : vector<16xf32>
    %3 = vector.multi_reduction <add>, %2, %cst [1] : vector<16x32xf32> to vector<16xf32>
    %4 = vector.shape_cast %3 : vector<16xf32> to vector<16x1xf32>
    %cst_1 = arith.constant 3.200000e+01 : f32
    %5 = vector.broadcast %cst_1 : f32 to vector<16x1xf32>
    %6 = arith.divf %4, %5 : vector<16x1xf32>
    %cst_2 = arith.constant 9.99999997E-7 : f32
    %7 = vector.broadcast %cst_2 : f32 to vector<16x1xf32>
    %8 = arith.addf %6, %7 : vector<16x1xf32>
    %9 = math.rsqrt %8 : vector<16x1xf32>
    %10 = vector.broadcast %9 : vector<16x1xf32> to vector<16x32xf32>
    %11 = arith.mulf %1, %10 : vector<16x32xf32>
    %c0_3 = arith.constant 0 : index
    %c0_4 = arith.constant 0 : index
    %12 = vector.load %arg5[%c0_3, %c0_4] : memref<1x32xf32, #tpu.memory_space<vmem>>, vector<1x32xf32>
    %13 = vector.broadcast %12 : vector<1x32xf32> to vector<16x32xf32>
    %14 = arith.mulf %11, %13 : vector<16x32xf32>
    %15 = arith.truncf %14 : vector<16x32xf32> to vector<16x32xbf16>
    %c0_5 = arith.constant 0 : index
    %c0_6 = arith.constant 0 : index
    %16 = vector.load %arg4[%c0_5, %c0_6] : memref<32x32xbf16, #tpu.memory_space<vmem>>, vector<32x32xbf16>
    %cst_7 = arith.constant dense<0.000000e+00> : vector<16x32xf32>
    %17 = tpu.matmul %15, %16, %cst_7 {dimension_numbers = #tpu.dot_dimension_numbers<[1], [0], [0], [1], [0, 0, 1, 1], [], []>} : vector<16x32xbf16>, vector<32x32xbf16>, vector<16x32xf32> -> vector<16x32xf32>
    %18 = arith.truncf %17 : vector<16x32xf32> to vector<16x32xbf16>
    %c0_8 = arith.constant 0 : index
    %c0_9 = arith.constant 0 : index
    %19 = vector.load %arg6[%c0_8, %c0_9] : memref<16x32xbf16, #tpu.memory_space<vmem>>, vector<16x32xbf16>
    tpu.vector_store %arg6[%c0_8, %c0_9], %18 {strides = array<i32>} : memref<16x32xbf16, #tpu.memory_space<vmem>>, vector<16x32xbf16>,
    return
  }
  func.func @transform_0(%arg0: i32, %arg1: i32, %arg2: i32) -> (i32, i32) {
    %c0_i32 = arith.constant 0 : i32
    return %arg0, %arg2 : i32, i32
  }
  func.func @transform_1(%arg0: i32, %arg1: i32, %arg2: i32) -> (i32, i32) {
    %c0_i32 = arith.constant 0 : i32
    return %arg2, %arg1 : i32, i32
  }
  func.func @transform_2(%arg0: i32, %arg1: i32, %arg2: i32) -> (i32, i32) {
    %c0_i32 = arith.constant 0 : i32
    %c0_i32_0 = arith.constant 0 : i32
    return %c0_i32, %arg2 : i32, i32
  }
  func.func @transform_3(%arg0: i32, %arg1: i32, %arg2: i32) -> (i32, i32) {
    %c0_i32 = arith.constant 0 : i32
    return %arg0, %arg1 : i32, i32
  }
}

module attributes {stable_mosaic.version = 11 : i64} {
  func.func @_fused_matmul_kernel(%arg0: i32, %arg1: i32, %arg2: i32, %arg3: memref<16x32xbf16, #tpu.memory_space<vmem>>, %arg4: memref<32x64xbf16, #tpu.memory_space<vmem>>, %arg5: memref<1x32xf32, #tpu.memory_space<vmem>>, %arg6: memref<16x64xbf16, #tpu.memory_space<vmem>>) attributes {dimension_semantics = [#tpu.dimension_semantics<parallel>, #tpu.dimension_semantics<parallel>, #tpu.dimension_semantics<arbitrary>], iteration_bounds = array<i64: 1, 1, 1>, scalar_prefetch = 0 : i64, scratch_operands = 0 : i64, tpu.core_type = #tpu.core_type<tc>, window_params = [{transform_indices = @transform_0, window_bounds = array<i64: 16, 32>}, {transform_indices = @transform_1, window_bounds = array<i64: 32, 64>}, {transform_indices = @transform_2, window_bounds = array<i64: 1, 32>}, {transform_indices = @transform_3, window_bounds = array<i64: 16, 64>}]} {
    %c0 = arith.constant 0 : index
    %c0_0 = arith.constant 0 : index
    %0 = vector.load %arg3[%c0, %c0_0] : memref<16x32xbf16, #tpu.memory_space<vmem>>, vector<16x32xbf16>
    %1 = arith.extf %0 : vector<16x32xbf16> to vector<16x32xf32>
    %2 = arith.mulf %1, %1 : vector<16x32xf32>
    %cst = arith.constant dense<0.000000e+00> : vector<16xf32>
    %3 = vector.multi_reduction <add>, %2, %cst [1] : vector<16x32xf32> to vector<16xf32>
    %4 = vector.shape_cast %3 : vector<16xf32> to vector<16x1xf32>
    %cst_1 = arith.constant 3.200000e+01 : f32
    %5 = vector.broadcast %cst_1 : f32 to vector<16x1xf32>
    %6 = arith.divf %4, %5 : vector<16x1xf32>
    %cst_2 = arith.constant 9.99999997E-7 : f32
    %7 = vector.broadcast %cst_2 : f32 to vector<16x1xf32>
    %8 = arith.addf %6, %7 : vector<16x1xf32>
    %9 = math.rsqrt %8 : vector<16x1xf32>
    %10 = vector.broadcast %9 : vector<16x1xf32> to vector<16x32xf32>
    %11 = arith.mulf %1, %10 : vector<16x32xf32>
    %c0_3 = arith.constant 0 : index
    %c0_4 = arith.constant 0 : index
    %12 = vector.load %arg5[%c0_3, %c0_4] : memref<1x32xf32, #tpu.memory_space<vmem>>, vector<1x32xf32>
    %13 = vector.broadcast %12 : vector<1x32xf32> to vector<16x32xf32>
    %14 = arith.mulf %11, %13 : vector<16x32xf32>
    %15 = arith.truncf %14 : vector<16x32xf32> to vector<16x32xbf16>
    %c0_5 = arith.constant 0 : index
    %c0_6 = arith.constant 0 : index
    %16 = vector.load %arg4[%c0_5, %c0_6] : memref<32x64xbf16, #tpu.memory_space<vmem>>, vector<32x64xbf16>
    %cst_7 = arith.constant dense<0.000000e+00> : vector<16x64xf32>
    %17 = tpu.matmul %15, %16, %cst_7 {dimension_numbers = #tpu.dot_dimension_numbers<[1], [0], [0], [1], [0, 0, 1, 1], [], []>} : vector<16x32xbf16>, vector<32x64xbf16>, vector<16x64xf32> -> vector<16x64xf32>
    %18 = arith.truncf %17 : vector<16x64xf32> to vector<16x64xbf16>
    %c0_8 = arith.constant 0 : index
    %c0_9 = arith.constant 0 : index
    %19 = vector.load %arg6[%c0_8, %c0_9] : memref<16x64xbf16, #tpu.memory_space<vmem>>, vector<16x64xbf16>
    tpu.vector_store %arg6[%c0_8, %c0_9], %18 {strides = array<i32>} : memref<16x64xbf16, #tpu.memory_space<vmem>>, vector<16x64xbf16>,
    return
  }
  func.func @transform_0(%arg0: i32, %arg1: i32, %arg2: i32) -> (i32, i32) {
    %c0_i32 = arith.constant 0 : i32
    return %arg0, %arg2 : i32, i32
  }
  func.func @transform_1(%arg0: i32, %arg1: i32, %arg2: i32) -> (i32, i32) {
    %c0_i32 = arith.constant 0 : i32
    return %arg2, %arg1 : i32, i32
  }
  func.func @transform_2(%arg0: i32, %arg1: i32, %arg2: i32) -> (i32, i32) {
    %c0_i32 = arith.constant 0 : i32
    %c0_i32_0 = arith.constant 0 : i32
    return %c0_i32, %arg2 : i32, i32
  }
  func.func @transform_3(%arg0: i32, %arg1: i32, %arg2: i32) -> (i32, i32) {
    %c0_i32 = arith.constant 0 : i32
    return %arg0, %arg1 : i32, i32
  }
}

module attributes {stable_mosaic.version = 11 : i64} {
  func.func @_cross_attn_kernel(%arg0: i32, %arg1: i32, %arg2: memref<1x8x32xbf16, #tpu.memory_space<vmem>>, %arg3: memref<1x8x64xbf16, #tpu.memory_space<vmem>>, %arg4: memref<1x8x32xbf16, #tpu.memory_space<vmem>>) attributes {dimension_semantics = [#tpu.dimension_semantics<parallel>, #tpu.dimension_semantics<parallel>], iteration_bounds = array<i64: 2, 1>, scalar_prefetch = 0 : i64, scratch_operands = 0 : i64, tpu.core_type = #tpu.core_type<tc>, window_params = [{transform_indices = @transform_0, window_bounds = array<i64: 1, 8, 32>}, {transform_indices = @transform_1, window_bounds = array<i64: 1, 8, 64>}, {transform_indices = @transform_2, window_bounds = array<i64: 1, 8, 32>}]} {
    %c0 = arith.constant 0 : index
    %c0_0 = arith.constant 0 : index
    %c0_1 = arith.constant 0 : index
    %0 = vector.load %arg2[%c0, %c0_0, %c0_1] : memref<1x8x32xbf16, #tpu.memory_space<vmem>>, vector<1x8x32xbf16>
    %1 = vector.shape_cast %0 : vector<1x8x32xbf16> to vector<8x32xbf16>
    %c0_2 = arith.constant 0 : index
    %c0_3 = arith.constant 0 : index
    %c0_4 = arith.constant 0 : index
    %2 = vector.load %arg3[%c0_2, %c0_3, %c0_4] : memref<1x8x64xbf16, #tpu.memory_space<vmem>>, vector<1x8x64xbf16>
    %3 = vector.shape_cast %2 : vector<1x8x64xbf16> to vector<8x64xbf16>
    %4 = vector.extract_strided_slice %3 {offsets = [0, 0], sizes = [8, 32], strides = [1, 1]} : vector<8x64xbf16> to vector<8x32xbf16>
    %5 = vector.extract_strided_slice %3 {offsets = [0, 32], sizes = [8, 32], strides = [1, 1]} : vector<8x64xbf16> to vector<8x32xbf16>
    %6 = vector.extract_strided_slice %1 {offsets = [0, 0], sizes = [8, 8], strides = [1, 1]} : vector<8x32xbf16> to vector<8x8xbf16>
    %7 = vector.extract_strided_slice %4 {offsets = [0, 0], sizes = [8, 8], strides = [1, 1]} : vector<8x32xbf16> to vector<8x8xbf16>
    %8 = vector.extract_strided_slice %5 {offsets = [0, 0], sizes = [8, 8], strides = [1, 1]} : vector<8x32xbf16> to vector<8x8xbf16>
    %9 = tpu.transpose %7, [1, 0] : vector<8x8xbf16> -> vector<8x8xbf16>
    %cst = arith.constant dense<0.000000e+00> : vector<8x8xf32>
    %10 = tpu.matmul %6, %9, %cst {dimension_numbers = #tpu.dot_dimension_numbers<[1], [0], [0], [1], [0, 0, 1, 1], [], []>} : vector<8x8xbf16>, vector<8x8xbf16>, vector<8x8xf32> -> vector<8x8xf32>
    %cst_5 = arith.constant dense<0xFF800000> : vector<8xf32>
    %11 = vector.multi_reduction <maximumf>, %10, %cst_5 [1] : vector<8x8xf32> to vector<8xf32>
    %12 = vector.shape_cast %11 : vector<8xf32> to vector<8x1xf32>
    %13 = vector.broadcast %12 : vector<8x1xf32> to vector<8x8xf32>
    %14 = arith.subf %10, %13 : vector<8x8xf32>
    %15 = math.exp %14 : vector<8x8xf32>
    %cst_6 = arith.constant dense<0.000000e+00> : vector<8xf32>
    %16 = vector.multi_reduction <add>, %15, %cst_6 [1] : vector<8x8xf32> to vector<8xf32>
    %17 = vector.shape_cast %16 : vector<8xf32> to vector<8x1xf32>
    %18 = tpu.reciprocal %17 {approx = true} : vector<8x1xf32> -> vector<8x1xf32>
    %19 = vector.broadcast %18 : vector<8x1xf32> to vector<8x8xf32>
    %20 = arith.mulf %15, %19 : vector<8x8xf32>
    %21 = arith.truncf %20 : vector<8x8xf32> to vector<8x8xbf16>
    %cst_7 = arith.constant dense<0.000000e+00> : vector<8x8xf32>
    %22 = tpu.matmul %21, %8, %cst_7 {dimension_numbers = #tpu.dot_dimension_numbers<[1], [0], [0], [1], [0, 0, 1, 1], [], []>} : vector<8x8xbf16>, vector<8x8xbf16>, vector<8x8xf32> -> vector<8x8xf32>
    %23 = vector.extract_strided_slice %1 {offsets = [0, 8], sizes = [8, 8], strides = [1, 1]} : vector<8x32xbf16> to vector<8x8xbf16>
    %24 = vector.extract_strided_slice %4 {offsets = [0, 8], sizes = [8, 8], strides = [1, 1]} : vector<8x32xbf16> to vector<8x8xbf16>
    %25 = vector.extract_strided_slice %5 {offsets = [0, 8], sizes = [8, 8], strides = [1, 1]} : vector<8x32xbf16> to vector<8x8xbf16>
    %26 = tpu.transpose %24, [1, 0] : vector<8x8xbf16> -> vector<8x8xbf16>
    %cst_8 = arith.constant dense<0.000000e+00> : vector<8x8xf32>
    %27 = tpu.matmul %23, %26, %cst_8 {dimension_numbers = #tpu.dot_dimension_numbers<[1], [0], [0], [1], [0, 0, 1, 1], [], []>} : vector<8x8xbf16>, vector<8x8xbf16>, vector<8x8xf32> -> vector<8x8xf32>
    %cst_9 = arith.constant dense<0xFF800000> : vector<8xf32>
    %28 = vector.multi_reduction <maximumf>, %27, %cst_9 [1] : vector<8x8xf32> to vector<8xf32>
    %29 = vector.shape_cast %28 : vector<8xf32> to vector<8x1xf32>
    %30 = vector.broadcast %29 : vector<8x1xf32> to vector<8x8xf32>
    %31 = arith.subf %27, %30 : vector<8x8xf32>
    %32 = math.exp %31 : vector<8x8xf32>
    %cst_10 = arith.constant dense<0.000000e+00> : vector<8xf32>
    %33 = vector.multi_reduction <add>, %32, %cst_10 [1] : vector<8x8xf32> to vector<8xf32>
    %34 = vector.shape_cast %33 : vector<8xf32> to vector<8x1xf32>
    %35 = tpu.reciprocal %34 {approx = true} : vector<8x1xf32> -> vector<8x1xf32>
    %36 = vector.broadcast %35 : vector<8x1xf32> to vector<8x8xf32>
    %37 = arith.mulf %32, %36 : vector<8x8xf32>
    %38 = arith.truncf %37 : vector<8x8xf32> to vector<8x8xbf16>
    %cst_11 = arith.constant dense<0.000000e+00> : vector<8x8xf32>
    %39 = tpu.matmul %38, %25, %cst_11 {dimension_numbers = #tpu.dot_dimension_numbers<[1], [0], [0], [1], [0, 0, 1, 1], [], []>} : vector<8x8xbf16>, vector<8x8xbf16>, vector<8x8xf32> -> vector<8x8xf32>
    %40 = vector.extract_strided_slice %1 {offsets = [0, 16], sizes = [8, 8], strides = [1, 1]} : vector<8x32xbf16> to vector<8x8xbf16>
    %41 = vector.extract_strided_slice %4 {offsets = [0, 16], sizes = [8, 8], strides = [1, 1]} : vector<8x32xbf16> to vector<8x8xbf16>
    %42 = vector.extract_strided_slice %5 {offsets = [0, 16], sizes = [8, 8], strides = [1, 1]} : vector<8x32xbf16> to vector<8x8xbf16>
    %43 = tpu.transpose %41, [1, 0] : vector<8x8xbf16> -> vector<8x8xbf16>
    %cst_12 = arith.constant dense<0.000000e+00> : vector<8x8xf32>
    %44 = tpu.matmul %40, %43, %cst_12 {dimension_numbers = #tpu.dot_dimension_numbers<[1], [0], [0], [1], [0, 0, 1, 1], [], []>} : vector<8x8xbf16>, vector<8x8xbf16>, vector<8x8xf32> -> vector<8x8xf32>
    %cst_13 = arith.constant dense<0xFF800000> : vector<8xf32>
    %45 = vector.multi_reduction <maximumf>, %44, %cst_13 [1] : vector<8x8xf32> to vector<8xf32>
    %46 = vector.shape_cast %45 : vector<8xf32> to vector<8x1xf32>
    %47 = vector.broadcast %46 : vector<8x1xf32> to vector<8x8xf32>
    %48 = arith.subf %44, %47 : vector<8x8xf32>
    %49 = math.exp %48 : vector<8x8xf32>
    %cst_14 = arith.constant dense<0.000000e+00> : vector<8xf32>
    %50 = vector.multi_reduction <add>, %49, %cst_14 [1] : vector<8x8xf32> to vector<8xf32>
    %51 = vector.shape_cast %50 : vector<8xf32> to vector<8x1xf32>
    %52 = tpu.reciprocal %51 {approx = true} : vector<8x1xf32> -> vector<8x1xf32>
    %53 = vector.broadcast %52 : vector<8x1xf32> to vector<8x8xf32>
    %54 = arith.mulf %49, %53 : vector<8x8xf32>
    %55 = arith.truncf %54 : vector<8x8xf32> to vector<8x8xbf16>
    %cst_15 = arith.constant dense<0.000000e+00> : vector<8x8xf32>
    %56 = tpu.matmul %55, %42, %cst_15 {dimension_numbers = #tpu.dot_dimension_numbers<[1], [0], [0], [1], [0, 0, 1, 1], [], []>} : vector<8x8xbf16>, vector<8x8xbf16>, vector<8x8xf32> -> vector<8x8xf32>
    %57 = vector.extract_strided_slice %1 {offsets = [0, 24], sizes = [8, 8], strides = [1, 1]} : vector<8x32xbf16> to vector<8x8xbf16>
    %58 = vector.extract_strided_slice %4 {offsets = [0, 24], sizes = [8, 8], strides = [1, 1]} : vector<8x32xbf16> to vector<8x8xbf16>
    %59 = vector.extract_strided_slice %5 {offsets = [0, 24], sizes = [8, 8], strides = [1, 1]} : vector<8x32xbf16> to vector<8x8xbf16>
    %60 = tpu.transpose %58, [1, 0] : vector<8x8xbf16> -> vector<8x8xbf16>
    %cst_16 = arith.constant dense<0.000000e+00> : vector<8x8xf32>
    %61 = tpu.matmul %57, %60, %cst_16 {dimension_numbers = #tpu.dot_dimension_numbers<[1], [0], [0], [1], [0, 0, 1, 1], [], []>} : vector<8x8xbf16>, vector<8x8xbf16>, vector<8x8xf32> -> vector<8x8xf32>
    %cst_17 = arith.constant dense<0xFF800000> : vector<8xf32>
    %62 = vector.multi_reduction <maximumf>, %61, %cst_17 [1] : vector<8x8xf32> to vector<8xf32>
    %63 = vector.shape_cast %62 : vector<8xf32> to vector<8x1xf32>
    %64 = vector.broadcast %63 : vector<8x1xf32> to vector<8x8xf32>
    %65 = arith.subf %61, %64 : vector<8x8xf32>
    %66 = math.exp %65 : vector<8x8xf32>
    %cst_18 = arith.constant dense<0.000000e+00> : vector<8xf32>
    %67 = vector.multi_reduction <add>, %66, %cst_18 [1] : vector<8x8xf32> to vector<8xf32>
    %68 = vector.shape_cast %67 : vector<8xf32> to vector<8x1xf32>
    %69 = tpu.reciprocal %68 {approx = true} : vector<8x1xf32> -> vector<8x1xf32>
    %70 = vector.broadcast %69 : vector<8x1xf32> to vector<8x8xf32>
    %71 = arith.mulf %66, %70 : vector<8x8xf32>
    %72 = arith.truncf %71 : vector<8x8xf32> to vector<8x8xbf16>
    %cst_19 = arith.constant dense<0.000000e+00> : vector<8x8xf32>
    %73 = tpu.matmul %72, %59, %cst_19 {dimension_numbers = #tpu.dot_dimension_numbers<[1], [0], [0], [1], [0, 0, 1, 1], [], []>} : vector<8x8xbf16>, vector<8x8xbf16>, vector<8x8xf32> -> vector<8x8xf32>
    %74 = tpu.concatenate %22, %39, %56, %73 in 1 : vector<8x8xf32>, vector<8x8xf32>, vector<8x8xf32>, vector<8x8xf32> -> vector<8x32xf32>
    %75 = arith.truncf %74 : vector<8x32xf32> to vector<8x32xbf16>
    %76 = vector.shape_cast %75 : vector<8x32xbf16> to vector<1x8x32xbf16>
    %c0_20 = arith.constant 0 : index
    %c0_21 = arith.constant 0 : index
    %c0_22 = arith.constant 0 : index
    %77 = vector.load %arg4[%c0_20, %c0_21, %c0_22] : memref<1x8x32xbf16, #tpu.memory_space<vmem>>, vector<1x8x32xbf16>
    tpu.vector_store %arg4[%c0_20, %c0_21, %c0_22], %76 {strides = array<i32>} : memref<1x8x32xbf16, #tpu.memory_space<vmem>>, vector<1x8x32xbf16>,
    return
  }
  func.func @transform_0(%arg0: i32, %arg1: i32) -> (i32, i32, i32) {
    %c0_i32 = arith.constant 0 : i32
    %c0_i32_0 = arith.constant 0 : i32
    return %arg0, %c0_i32, %arg1 : i32, i32, i32
  }
  func.func @transform_1(%arg0: i32, %arg1: i32) -> (i32, i32, i32) {
    %c0_i32 = arith.constant 0 : i32
    %c0_i32_0 = arith.constant 0 : i32
    return %arg0, %c0_i32, %arg1 : i32, i32, i32
  }
  func.func @transform_2(%arg0: i32, %arg1: i32) -> (i32, i32, i32) {
    %c0_i32 = arith.constant 0 : i32
    %c0_i32_0 = arith.constant 0 : i32
    return %arg0, %c0_i32, %arg1 : i32, i32, i32
  }
}

module attributes {stable_mosaic.version = 11 : i64} {
  func.func @_head_kernel(%arg0: i32, %arg1: memref<16x32xbf16, #tpu.memory_space<vmem>>, %arg2: memref<1x32xf32, #tpu.memory_space<vmem>>, %arg3: memref<1x32xf32, #tpu.memory_space<vmem>>, %arg4: memref<1x1xf32, #tpu.memory_space<vmem>>, %arg5: memref<16x1xf32, #tpu.memory_space<vmem>>) attributes {dimension_semantics = [#tpu.dimension_semantics<parallel>], iteration_bounds = array<i64: 1>, scalar_prefetch = 0 : i64, scratch_operands = 0 : i64, tpu.core_type = #tpu.core_type<tc>, window_params = [{transform_indices = @transform_0, window_bounds = array<i64: 16, 32>}, {pipeline_mode = #tpu.pipeline_mode<synchronous>, transform_indices = @transform_1, window_bounds = array<i64: 1, 32>}, {pipeline_mode = #tpu.pipeline_mode<synchronous>, transform_indices = @transform_2, window_bounds = array<i64: 1, 32>}, {pipeline_mode = #tpu.pipeline_mode<synchronous>, transform_indices = @transform_3, window_bounds = array<i64: 1, 1>}, {transform_indices = @transform_4, window_bounds = array<i64: 16, 1>}]} {
    %c0 = arith.constant 0 : index
    %c0_0 = arith.constant 0 : index
    %0 = vector.load %arg1[%c0, %c0_0] : memref<16x32xbf16, #tpu.memory_space<vmem>>, vector<16x32xbf16>
    %1 = arith.extf %0 : vector<16x32xbf16> to vector<16x32xf32>
    %2 = arith.mulf %1, %1 : vector<16x32xf32>
    %cst = arith.constant dense<0.000000e+00> : vector<16xf32>
    %3 = vector.multi_reduction <add>, %2, %cst [1] : vector<16x32xf32> to vector<16xf32>
    %4 = vector.shape_cast %3 : vector<16xf32> to vector<16x1xf32>
    %cst_1 = arith.constant 3.200000e+01 : f32
    %5 = vector.broadcast %cst_1 : f32 to vector<16x1xf32>
    %6 = arith.divf %4, %5 : vector<16x1xf32>
    %cst_2 = arith.constant 9.99999997E-7 : f32
    %7 = vector.broadcast %cst_2 : f32 to vector<16x1xf32>
    %8 = arith.addf %6, %7 : vector<16x1xf32>
    %9 = math.rsqrt %8 : vector<16x1xf32>
    %10 = vector.broadcast %9 : vector<16x1xf32> to vector<16x32xf32>
    %11 = arith.mulf %1, %10 : vector<16x32xf32>
    %c0_3 = arith.constant 0 : index
    %c0_4 = arith.constant 0 : index
    %12 = vector.load %arg2[%c0_3, %c0_4] : memref<1x32xf32, #tpu.memory_space<vmem>>, vector<1x32xf32>
    %13 = vector.broadcast %12 : vector<1x32xf32> to vector<16x32xf32>
    %14 = arith.mulf %11, %13 : vector<16x32xf32>
    %c0_5 = arith.constant 0 : index
    %c0_6 = arith.constant 0 : index
    %15 = vector.load %arg3[%c0_5, %c0_6] : memref<1x32xf32, #tpu.memory_space<vmem>>, vector<1x32xf32>
    %16 = vector.broadcast %15 : vector<1x32xf32> to vector<16x32xf32>
    %17 = arith.mulf %14, %16 : vector<16x32xf32>
    %cst_7 = arith.constant dense<0.000000e+00> : vector<16xf32>
    %18 = vector.multi_reduction <add>, %17, %cst_7 [1] : vector<16x32xf32> to vector<16xf32>
    %19 = vector.shape_cast %18 : vector<16xf32> to vector<16x1xf32>
    %c0_8 = arith.constant 0 : index
    %c0_9 = arith.constant 0 : index
    %20 = vector.load %arg4[%c0_8, %c0_9] : memref<1x1xf32, #tpu.memory_space<vmem>>, vector<1x1xf32>
    %21 = vector.broadcast %20 : vector<1x1xf32> to vector<16x1xf32>
    %22 = arith.addf %19, %21 : vector<16x1xf32>
    %c0_10 = arith.constant 0 : index
    %c0_11 = arith.constant 0 : index
    %23 = vector.load %arg5[%c0_10, %c0_11] : memref<16x1xf32, #tpu.memory_space<vmem>>, vector<16x1xf32>
    tpu.vector_store %arg5[%c0_10, %c0_11], %22 {strides = array<i32>} : memref<16x1xf32, #tpu.memory_space<vmem>>, vector<16x1xf32>,
    return
  }
  func.func @transform_0(%arg0: i32) -> (i32, i32) {
    %c0_i32 = arith.constant 0 : i32
    %c0_i32_0 = arith.constant 0 : i32
    return %arg0, %c0_i32 : i32, i32
  }
  func.func @transform_1(%arg0: i32) -> (i32, i32) {
    %c0_i32 = arith.constant 0 : i32
    %c0_i32_0 = arith.constant 0 : i32
    %c0_i32_1 = arith.constant 0 : i32
    return %c0_i32, %c0_i32_0 : i32, i32
  }
  func.func @transform_2(%arg0: i32) -> (i32, i32) {
    %c0_i32 = arith.constant 0 : i32
    %c0_i32_0 = arith.constant 0 : i32
    %c0_i32_1 = arith.constant 0 : i32
    return %c0_i32, %c0_i32_0 : i32, i32
  }
  func.func @transform_3(%arg0: i32) -> (i32, i32) {
    %c0_i32 = arith.constant 0 : i32
    %c0_i32_0 = arith.constant 0 : i32
    %c0_i32_1 = arith.constant 0 : i32
    return %c0_i32, %c0_i32_0 : i32, i32
  }
  func.func @transform_4(%arg0: i32) -> (i32, i32) {
    %c0_i32 = arith.constant 0 : i32
    %c0_i32_0 = arith.constant 0 : i32
    return %arg0, %c0_i32 : i32, i32
  }
}

</mosaic_0001>

<llo_original>
// kernel: rankt5_forward.32
$region0: #{rankt5_forward.32}
  #allocation0 [shape = 'u32[]', space=smem, size = 0x4, offset = 0x4, fixed_abs, tag = 'smem constant byte address 0x4 - core index']
  #allocation1 [shape = 'u32[144,128]{1,0:T(1,128)}', space=vmem, size = 0x12000, scoped, tag = 'internal scratch']
  %s0 = inlined_call_operand.vmem [shape: bf16[16,32], index: 0, kind: input, shape index: {}]
  %s1 = inlined_call_operand.vmem [shape: bf16[32,64], index: 1, kind: input, shape index: {}]
  %s2 = inlined_call_operand.vmem [shape: f32[1,32], index: 2, kind: input, shape index: {}]
  %s3 = inlined_call_operand.vmem [shape: bf16[16,64], index: 3, kind: output, shape index: {}]
  %s4 = sld [smem:[#allocation0]]
  $region22: #{rankt5_forward.32} parent=0
    _
  %s6 = ssub.s32 1, %s4
  %s7 = scalar_select 0, %s6, %s4
  // Predicated region
  $region2: #{rankt5_forward.32} parent=0 // pred_check
    _
  $region3: #{rankt5_forward.32} parent=0 // pred_check_branch
    %9 = sbr.rel (0) target = $region5
  $region4: #{rankt5_forward.32} parent=0 // pred_region
    _
  $region5: #{rankt5_forward.32} parent=0 // pred_fallthru
    _
  // Predicated region
  $region6: #{rankt5_forward.32} parent=0 // pred_check
    _
  $region7: #{rankt5_forward.32} parent=0 // pred_check_branch
    %11 = sbr.rel (0) target = $region9
  $region8: #{rankt5_forward.32} parent=0 // pred_region
    _
  $region9: #{rankt5_forward.32} parent=0 // pred_fallthru
    _
  // Predicated region
  $region10: #{rankt5_forward.32} parent=0 // pred_check
    _
  $region11: #{rankt5_forward.32} parent=0 // pred_check_branch
    %13 = sbr.rel (0) target = $region13
  $region12: #{rankt5_forward.32} parent=0 // pred_region
    _
  $region13: #{rankt5_forward.32} parent=0 // pred_fallthru
    _
  %v15 = vld [vmem:[%s0] sm:$0xf]
  %v16 = vld [vmem:[%s0 + $0x4] sm:$0xf]
  %v17 = vunpack.c.l.bf16 %v15
  %v18 = vunpack.c.l.bf16 %v16
  %v19 = vmul.f32 %v17, %v17
  %v20 = vmul.f32 %v18, %v18
  %vm21 = vcmask 261120
  %v22 = vsel %vm21, %v19, 0.0
  %23 = vadd.xlane.f32.xlu0 %v22
  %v24 = vpop.xlane.xlu0 %23
  %v25 = vsel %vm21, %v20, 0.0
  %26 = vadd.xlane.f32.xlu0 %v25
  %v27 = vpop.xlane.xlu0 %26
  %v28 = vrcp.pop 32.0
  %v29 = vmul.f32 %v24, %v28
  %v30 = vmul.f32 %v27, %v28
  %v31 = vadd.f32 %v29, 1e-06
  %v32 = vadd.f32 %v30, 1e-06
  %v33 = vrsqrt.pop %v31
  %v34 = vrsqrt.pop %v32
  %v35 = vmul.f32 %v17, %v33
  %v36 = vmul.f32 %v18, %v34
  %v37 = vld [vmem:[%s2] sm:$0x1]
  %v39 = vlaneseq
  %v40 = vshrl.u32 %v39, 7
  %v41 = vsub.s32 0, %v40
  %v42 = vrot.slane %v37, %v41
  %v44 = vmul.f32 %v35, %v42
  %v45 = vmul.f32 %v36, %v42
  %v46 = vpack.c.bf16 %v45, %v44
  %v47 = vld [vmem:[%s1] sm:$0xf]
  %v48 = vld [vmem:[%s1 + $0x4] sm:$0xf]
  %v49 = vld [vmem:[%s1 + $0x8] sm:$0xf]
  %v50 = vld [vmem:[%s1 + $0xc] sm:$0xf]
  %v55 = vunpack.c.l.b16 %v47
  %v56 = vunpack.c.l.b16 %v48
  %v57 = vunpack.c.l.b16 %v49
  %v58 = vunpack.c.l.b16 %v50
  %v59 = vpack.c.b16 %v56, %v55
  %v60 = vpack.c.b16 %v58, %v57
  %v64 = vsel %vm21, %v46, 0
  %66 = vmatprep.subr.bf16.mxu0 0
  %67 = vmatpush1.bf16.msra.mxu0 %v59
  %68 = vmatprep.subr.bf16.mxu0 0
  %69 = vmatpush1.bf16.msra.mxu0 %v60
  %70 = vmatprep.subr.bf16.mxu0 0
  %71 = vmatpush1.bf16.msra.mxu0 0
  %72 = vmatprep.subr.bf16.mxu0 0
  %73 = vmatpush1.bf16.msra.mxu0 0
  %74 = vmatprep.subr.bf16.mxu0 0
  %75 = vmatpush1.bf16.msra.mxu0 0
  %76 = vmatprep.subr.bf16.mxu0 0
  %77 = vmatpush1.bf16.msra.mxu0 0
  %78 = vmatprep.subr.bf16.mxu0 0
  %79 = vmatpush1.bf16.msra.mxu0 0
  %80 = vmatprep.subr.bf16.mxu0 0
  %81 = vmatpush1.bf16.msra.mxu0 0
  %82 = vmatprep.subr.bf16.mxu0 0
  %83 = vmatpush1.bf16.msra.mxu0 0
  %84 = vmatprep.subr.bf16.mxu0 0
  %85 = vmatpush1.bf16.msra.mxu0 0
  %86 = vmatprep.subr.bf16.mxu0 0
  %87 = vmatpush1.bf16.msra.mxu0 0
  %88 = vmatprep.subr.bf16.mxu0 0
  %89 = vmatpush1.bf16.msra.mxu0 0
  %90 = vmatprep.subr.bf16.mxu0 0
  %91 = vmatpush1.bf16.msra.mxu0 0
  %92 = vmatprep.subr.bf16.mxu0 0
  %93 = vmatpush1.bf16.msra.mxu0 0
  %94 = vmatprep.subr.bf16.mxu0 0
  %95 = vmatpush1.bf16.msra.mxu0 0
  %96 = vmatprep.subr.bf16.mxu0 0
  %97 = vmatpush1.bf16.msra.mxu0 0
  %98 = vmatprep.mubr.bf16.mxu0 0
  %99 = vmatmul.mubr.bf16.gmra.mrb[0].mxu0 %v64
  %v100 = vpop.f32.mrb[0].mxu0
  %v101 = vadd.f32 0.0, %v100
  %v102 = vpop.f32.mrb[0].mxu0
  %v103 = vpop.f32.mrb[0].mxu0
  %v104 = vadd.f32 0.0, %v103
  %v105 = vpop.f32.mrb[0].mxu0
  %106 = vdwg.mxu0
  %v107 = vmax.f32 %v101, 0.0
  %v108 = vmax.f32 %v104, 0.0
  %v109 = vpack.c.bf16 %v108, %v107
  %v111 = vunpack.c.l.b16 %v109
  %v112 = vunpack.c.h.b16 %v109
  %v113 = vpack.c.b16 %v111, %v111
  %v114 = vpack.c.b16 %v112, %v112
  %vm117 = vcmask 519168
  %118 = vst.msk [vmem:[%s3] sm:$0xf] %vm117, %v113
  %119 = vst.msk [vmem:[%s3 + $0x4] sm:$0xf] %vm117, %v114
  // Predicated region
  $region14: #{rankt5_forward.32} parent=0 // pred_check
    _
  $region15: #{rankt5_forward.32} parent=0 // pred_check_branch
    %121 = sbr.rel (0) target = $region17
  $region16: #{rankt5_forward.32} parent=0 // pred_region
    _
  $region17: #{rankt5_forward.32} parent=0 // pred_fallthru
    _
  // Predicated region
  $region18: #{rankt5_forward.32} parent=0 // pred_check
    _
  $region19: #{rankt5_forward.32} parent=0 // pred_check_branch
    %123 = sbr.rel (0) target = $region21
  $region20: #{rankt5_forward.32} parent=0 // pred_region
    _
  $region21: #{rankt5_forward.32} parent=0 // pred_fallthru
    _

// kernel: rankt5_forward.31
$region0: #{rankt5_forward.31}
  #allocation0 [shape = 'u32[]', space=smem, size = 0x4, offset = 0x4, fixed_abs, tag = 'smem constant byte address 0x4 - core index']
  #allocation1 [shape = 'u32[144,128]{1,0:T(1,128)}', space=vmem, size = 0x12000, scoped, tag = 'internal scratch']
  %s0 = inlined_call_operand.vmem [shape: bf16[16,32], index: 0, kind: input, shape index: {}]
  %s1 = inlined_call_operand.vmem [shape: bf16[32,32], index: 1, kind: input, shape index: {}]
  %s2 = inlined_call_operand.vmem [shape: bf16[16,32], index: 2, kind: input, shape index: {}]
  %s3 = inlined_call_operand.vmem [shape: bf16[16,32], index: 3, kind: output, shape index: {}]
  %s4 = sld [smem:[#allocation0]]
  $region22: #{rankt5_forward.31} parent=0
    _
  %s6 = ssub.s32 1, %s4
  %s7 = scalar_select 0, %s6, %s4
  // Predicated region
  $region2: #{rankt5_forward.31} parent=0 // pred_check
    _
  $region3: #{rankt5_forward.31} parent=0 // pred_check_branch
    %9 = sbr.rel (0) target = $region5
  $region4: #{rankt5_forward.31} parent=0 // pred_region
    _
  $region5: #{rankt5_forward.31} parent=0 // pred_fallthru
    _
  // Predicated region
  $region6: #{rankt5_forward.31} parent=0 // pred_check
    _
  $region7: #{rankt5_forward.31} parent=0 // pred_check_branch
    %11 = sbr.rel (0) target = $region9
  $region8: #{rankt5_forward.31} parent=0 // pred_region
    _
  $region9: #{rankt5_forward.31} parent=0 // pred_fallthru
    _
  // Predicated region
  $region10: #{rankt5_forward.31} parent=0 // pred_check
    _
  $region11: #{rankt5_forward.31} parent=0 // pred_check_branch
    %13 = sbr.rel (0) target = $region13
  $region12: #{rankt5_forward.31} parent=0 // pred_region
    _
  $region13: #{rankt5_forward.31} parent=0 // pred_fallthru
    _
  %v15 = vld [vmem:[%s0] sm:$0xf]
  %v16 = vld [vmem:[%s0 + $0x4] sm:$0xf]
  %v17 = vld [vmem:[%s1] sm:$0xf]
  %v18 = vld [vmem:[%s1 + $0x4] sm:$0xf]
  %v19 = vld [vmem:[%s1 + $0x8] sm:$0xf]
  %v20 = vld [vmem:[%s1 + $0xc] sm:$0xf]
  %v21 = vld [vmem:[%s2] sm:$0xf]
  %v22 = vld [vmem:[%s2 + $0x4] sm:$0xf]
  %v23 = vunpack.c.l.bf16 %v21
  %v24 = vunpack.c.l.bf16 %v22
  %v27 = vunpack.c.l.b16 %v15
  %v28 = vunpack.c.l.b16 %v16
  %v29 = vpack.c.b16 %v28, %v27
  %v34 = vunpack.c.l.b16 %v17
  %v35 = vunpack.c.l.b16 %v18
  %v36 = vunpack.c.l.b16 %v19
  %v37 = vunpack.c.l.b16 %v20
  %v38 = vpack.c.b16 %v35, %v34
  %v39 = vpack.c.b16 %v37, %v36
  %vm42 = vcmask 261120
  %v44 = vsel %vm42, %v29, 0
  %46 = vmatprep.subr.bf16.mxu0 0
  %47 = vmatpush1.bf16.msra.mxu0 %v38
  %48 = vmatprep.subr.bf16.mxu0 0
  %49 = vmatpush1.bf16.msra.mxu0 %v39
  %50 = vmatprep.subr.bf16.mxu0 0
  %51 = vmatpush1.bf16.msra.mxu0 0
  %52 = vmatprep.subr.bf16.mxu0 0
  %53 = vmatpush1.bf16.msra.mxu0 0
  %54 = vmatprep.subr.bf16.mxu0 0
  %55 = vmatpush1.bf16.msra.mxu0 0
  %56 = vmatprep.subr.bf16.mxu0 0
  %57 = vmatpush1.bf16.msra.mxu0 0
  %58 = vmatprep.subr.bf16.mxu0 0
  %59 = vmatpush1.bf16.msra.mxu0 0
  %60 = vmatprep.subr.bf16.mxu0 0
  %61 = vmatpush1.bf16.msra.mxu0 0
  %62 = vmatprep.subr.bf16.mxu0 0
  %63 = vmatpush1.bf16.msra.mxu0 0
  %64 = vmatprep.subr.bf16.mxu0 0
  %65 = vmatpush1.bf16.msra.mxu0 0
  %66 = vmatprep.subr.bf16.mxu0 0
  %67 = vmatpush1.bf16.msra.mxu0 0
  %68 = vmatprep.subr.bf16.mxu0 0
  %69 = vmatpush1.bf16.msra.mxu0 0
  %70 = vmatprep.subr.bf16.mxu0 0
  %71 = vmatpush1.bf16.msra.mxu0 0
  %72 = vmatprep.subr.bf16.mxu0 0
  %73 = vmatpush1.bf16.msra.mxu0 0
  %74 = vmatprep.subr.bf16.mxu0 0
  %75 = vmatpush1.bf16.msra.mxu0 0
  %76 = vmatprep.subr.bf16.mxu0 0
  %77 = vmatpush1.bf16.msra.mxu0 0
  %78 = vmatprep.mubr.bf16.mxu0 0
  %79 = vmatmul.mubr.bf16.gmra.mrb[0].mxu0 %v44
  %v80 = vpop.f32.mrb[0].mxu0
  %v81 = vadd.f32 %v23, %v80
  %v82 = vpop.f32.mrb[0].mxu0
  %v83 = vpop.f32.mrb[0].mxu0
  %v84 = vadd.f32 %v24, %v83
  %v85 = vpop.f32.mrb[0].mxu0
  %86 = vdwg.mxu0
  %v87 = vpack.c.bf16 %v84, %v81
  %v89 = vunpack.c.l.b16 %v87
  %v90 = vunpack.c.h.b16 %v87
  %v91 = vpack.c.b16 %v89, %v89
  %v92 = vpack.c.b16 %v90, %v90
  %vm95 = vcmask 257024
  %96 = vst.msk [vmem:[%s3] sm:$0xf] %vm95, %v91
  %97 = vst.msk [vmem:[%s3 + $0x4] sm:$0xf] %vm95, %v92
  // Predicated region
  $region14: #{rankt5_forward.31} parent=0 // pred_check
    _
  $region15: #{rankt5_forward.31} parent=0 // pred_check_branch
    %99 = sbr.rel (0) target = $region17
  $region16: #{rankt5_forward.31} parent=0 // pred_region
    _
  $region17: #{rankt5_forward.31} parent=0 // pred_fallthru
    _
  // Predicated region
  $region18: #{rankt5_forward.31} parent=0 // pred_check
    _
  $region19: #{rankt5_forward.31} parent=0 // pred_check_branch
    %101 = sbr.rel (0) target = $region21
  $region20: #{rankt5_forward.31} parent=0 // pred_region
    _
  $region21: #{rankt5_forward.31} parent=0 // pred_fallthru
    _

// kernel: rankt5_forward.29
$region0: #{rankt5_forward.29}
  #allocation0 [shape = 'u32[]', space=smem, size = 0x4, offset = 0x4, fixed_abs, tag = 'smem constant byte address 0x4 - core index']
  #allocation1 [shape = 'u32[144,128]{1,0:T(1,128)}', space=vmem, size = 0x12000, scoped, tag = 'internal scratch']
  %s0 = inlined_call_operand.vmem [shape: bf16[16,32], index: 0, kind: input, shape index: {}]
  %s1 = inlined_call_operand.vmem [shape: bf16[32,96], index: 1, kind: input, shape index: {}]
  %s2 = inlined_call_operand.vmem [shape: f32[1,32], index: 2, kind: input, shape index: {}]
  %s3 = inlined_call_operand.vmem [shape: bf16[16,96], index: 3, kind: output, shape index: {}]
  %s4 = sld [smem:[#allocation0]]
  $region22: #{rankt5_forward.29} parent=0
    _
  %s6 = ssub.s32 1, %s4
  %s7 = scalar_select 0, %s6, %s4
  // Predicated region
  $region2: #{rankt5_forward.29} parent=0 // pred_check
    _
  $region3: #{rankt5_forward.29} parent=0 // pred_check_branch
    %9 = sbr.rel (0) target = $region5
  $region4: #{rankt5_forward.29} parent=0 // pred_region
    _
  $region5: #{rankt5_forward.29} parent=0 // pred_fallthru
    _
  // Predicated region
  $region6: #{rankt5_forward.29} parent=0 // pred_check
    _
  $region7: #{rankt5_forward.29} parent=0 // pred_check_branch
    %11 = sbr.rel (0) target = $region9
  $region8: #{rankt5_forward.29} parent=0 // pred_region
    _
  $region9: #{rankt5_forward.29} parent=0 // pred_fallthru
    _
  // Predicated region
  $region10: #{rankt5_forward.29} parent=0 // pred_check
    _
  $region11: #{rankt5_forward.29} parent=0 // pred_check_branch
    %13 = sbr.rel (0) target = $region13
  $region12: #{rankt5_forward.29} parent=0 // pred_region
    _
  $region13: #{rankt5_forward.29} parent=0 // pred_fallthru
    _
  %v15 = vld [vmem:[%s0] sm:$0xf]
  %v16 = vld [vmem:[%s0 + $0x4] sm:$0xf]
  %v17 = vunpack.c.l.bf16 %v15
  %v18 = vunpack.c.l.bf16 %v16
  %v19 = vmul.f32 %v17, %v17
  %v20 = vmul.f32 %v18, %v18
  %vm21 = vcmask 261120
  %v22 = vsel %vm21, %v19, 0.0
  %23 = vadd.xlane.f32.xlu0 %v22
  %v24 = vpop.xlane.xlu0 %23
  %v25 = vsel %vm21, %v20, 0.0
  %26 = vadd.xlane.f32.xlu0 %v25
  %v27 = vpop.xlane.xlu0 %26
  %v28 = vrcp.pop 32.0
  %v29 = vmul.f32 %v24, %v28
  %v30 = vmul.f32 %v27, %v28
  %v31 = vadd.f32 %v29, 1e-06
  %v32 = vadd.f32 %v30, 1e-06
  %v33 = vrsqrt.pop %v31
  %v34 = vrsqrt.pop %v32
  %v35 = vmul.f32 %v17, %v33
  %v36 = vmul.f32 %v18, %v34
  %v37 = vld [vmem:[%s2] sm:$0x1]
  %v39 = vlaneseq
  %v40 = vshrl.u32 %v39, 7
  %v41 = vsub.s32 0, %v40
  %v42 = vrot.slane %v37, %v41
  %v44 = vmul.f32 %v35, %v42
  %v45 = vmul.f32 %v36, %v42
  %v46 = vpack.c.bf16 %v45, %v44
  %v47 = vld [vmem:[%s1] sm:$0xf]
  %v48 = vld [vmem:[%s1 + $0x4] sm:$0xf]
  %v49 = vld [vmem:[%s1 + $0x8] sm:$0xf]
  %v50 = vld [vmem:[%s1 + $0xc] sm:$0xf]
  %v55 = vunpack.c.l.b16 %v47
  %v56 = vunpack.c.l.b16 %v48
  %v57 = vunpack.c.l.b16 %v49
  %v58 = vunpack.c.l.b16 %v50
  %v59 = vpack.c.b16 %v56, %v55
  %v60 = vpack.c.b16 %v58, %v57
  %v64 = vsel %vm21, %v46, 0
  %66 = vmatprep.subr.bf16.mxu0 0
  %67 = vmatpush1.bf16.msra.mxu0 %v59
  %68 = vmatprep.subr.bf16.mxu0 0
  %69 = vmatpush1.bf16.msra.mxu0 %v60
  %70 = vmatprep.subr.bf16.mxu0 0
  %71 = vmatpush1.bf16.msra.mxu0 0
  %72 = vmatprep.subr.bf16.mxu0 0
  %73 = vmatpush1.bf16.msra.mxu0 0
  %74 = vmatprep.subr.bf16.mxu0 0
  %75 = vmatpush1.bf16.msra.mxu0 0
  %76 = vmatprep.subr.bf16.mxu0 0
  %77 = vmatpush1.bf16.msra.mxu0 0
  %78 = vmatprep.subr.bf16.mxu0 0
  %79 = vmatpush1.bf16.msra.mxu0 0
  %80 = vmatprep.subr.bf16.mxu0 0
  %81 = vmatpush1.bf16.msra.mxu0 0
  %82 = vmatprep.subr.bf16.mxu0 0
  %83 = vmatpush1.bf16.msra.mxu0 0
  %84 = vmatprep.subr.bf16.mxu0 0
  %85 = vmatpush1.bf16.msra.mxu0 0
  %86 = vmatprep.subr.bf16.mxu0 0
  %87 = vmatpush1.bf16.msra.mxu0 0
  %88 = vmatprep.subr.bf16.mxu0 0
  %89 = vmatpush1.bf16.msra.mxu0 0
  %90 = vmatprep.subr.bf16.mxu0 0
  %91 = vmatpush1.bf16.msra.mxu0 0
  %92 = vmatprep.subr.bf16.mxu0 0
  %93 = vmatpush1.bf16.msra.mxu0 0
  %94 = vmatprep.subr.bf16.mxu0 0
  %95 = vmatpush1.bf16.msra.mxu0 0
  %96 = vmatprep.subr.bf16.mxu0 0
  %97 = vmatpush1.bf16.msra.mxu0 0
  %98 = vmatprep.mubr.bf16.mxu0 0
  %99 = vmatmul.mubr.bf16.gmra.mrb[0].mxu0 %v64
  %v100 = vpop.f32.mrb[0].mxu0
  %v101 = vadd.f32 0.0, %v100
  %v102 = vpop.f32.mrb[0].mxu0
  %v103 = vpop.f32.mrb[0].mxu0
  %v104 = vadd.f32 0.0, %v103
  %v105 = vpop.f32.mrb[0].mxu0
  %106 = vdwg.mxu0
  %v107 = vpack.c.bf16 %v104, %v101
  %v109 = vunpack.c.l.b16 %v107
  %v110 = vunpack.c.h.b16 %v107
  %v111 = vpack.c.b16 %v109, %v109
  %v112 = vpack.c.b16 %v110, %v110
  %vm115 = vcmask 781312
  %116 = vst.msk [vmem:[%s3] sm:$0xf] %vm115, %v111
  %117 = vst.msk [vmem:[%s3 + $0x4] sm:$0xf] %vm115, %v112
  // Predicated region
  $region14: #{rankt5_forward.29} parent=0 // pred_check
    _
  $region15: #{rankt5_forward.29} parent=0 // pred_check_branch
    %119 = sbr.rel (0) target = $region17
  $region16: #{rankt5_forward.29} parent=0 // pred_region
    _
  $region17: #{rankt5_forward.29} parent=0 // pred_fallthru
    _
  // Predicated region
  $region18: #{rankt5_forward.29} parent=0 // pred_check
    _
  $region19: #{rankt5_forward.29} parent=0 // pred_check_branch
    %121 = sbr.rel (0) target = $region21
  $region20: #{rankt5_forward.29} parent=0 // pred_region
    _
  $region21: #{rankt5_forward.29} parent=0 // pred_fallthru
    _

// kernel: rankt5_forward.33
$region0: #{rankt5_forward.33}
  #allocation0 [shape = 'u32[]', space=smem, size = 0x4, offset = 0x4, fixed_abs, tag = 'smem constant byte address 0x4 - core index']
  #allocation1 [shape = 'u32[144,128]{1,0:T(1,128)}', space=vmem, size = 0x12000, scoped, tag = 'internal scratch']
  %s0 = inlined_call_operand.vmem [shape: bf16[16,64], index: 0, kind: input, shape index: {}]
  %s1 = inlined_call_operand.vmem [shape: bf16[64,32], index: 1, kind: input, shape index: {}]
  %s2 = inlined_call_operand.vmem [shape: bf16[16,32], index: 2, kind: input, shape index: {}]
  %s3 = inlined_call_operand.vmem [shape: bf16[16,32], index: 3, kind: output, shape index: {}]
  %s4 = sld [smem:[#allocation0]]
  $region22: #{rankt5_forward.33} parent=0
    _
  %s6 = ssub.s32 1, %s4
  %s7 = scalar_select 0, %s6, %s4
  // Predicated region
  $region2: #{rankt5_forward.33} parent=0 // pred_check
    _
  $region3: #{rankt5_forward.33} parent=0 // pred_check_branch
    %9 = sbr.rel (0) target = $region5
  $region4: #{rankt5_forward.33} parent=0 // pred_region
    _
  $region5: #{rankt5_forward.33} parent=0 // pred_fallthru
    _
  // Predicated region
  $region6: #{rankt5_forward.33} parent=0 // pred_check
    _
  $region7: #{rankt5_forward.33} parent=0 // pred_check_branch
    %11 = sbr.rel (0) target = $region9
  $region8: #{rankt5_forward.33} parent=0 // pred_region
    _
  $region9: #{rankt5_forward.33} parent=0 // pred_fallthru
    _
  // Predicated region
  $region10: #{rankt5_forward.33} parent=0 // pred_check
    _
  $region11: #{rankt5_forward.33} parent=0 // pred_check_branch
    %13 = sbr.rel (0) target = $region13
  $region12: #{rankt5_forward.33} parent=0 // pred_region
    _
  $region13: #{rankt5_forward.33} parent=0 // pred_fallthru
    _
  %v15 = vld [vmem:[%s0] sm:$0xf]
  %v16 = vld [vmem:[%s0 + $0x4] sm:$0xf]
  %v17 = vld [vmem:[%s1] sm:$0xf]
  %v18 = vld [vmem:[%s1 + $0x4] sm:$0xf]
  %v19 = vld [vmem:[%s1 + $0x8] sm:$0xf]
  %v20 = vld [vmem:[%s1 + $0xc] sm:$0xf]
  %v21 = vld [vmem:[%s1 + $0x10] sm:$0xf]
  %v22 = vld [vmem:[%s1 + $0x14] sm:$0xf]
  %v23 = vld [vmem:[%s1 + $0x18] sm:$0xf]
  %v24 = vld [vmem:[%s1 + $0x1c] sm:$0xf]
  %v25 = vld [vmem:[%s2] sm:$0xf]
  %v26 = vld [vmem:[%s2 + $0x4] sm:$0xf]
  %v27 = vunpack.c.l.bf16 %v25
  %v28 = vunpack.c.l.bf16 %v26
  %v31 = vunpack.c.l.b16 %v15
  %v32 = vunpack.c.l.b16 %v16
  %v33 = vpack.c.b16 %v32, %v31
  %v42 = vunpack.c.l.b16 %v17
  %v43 = vunpack.c.l.b16 %v18
  %v44 = vunpack.c.l.b16 %v19
  %v45 = vunpack.c.l.b16 %v20
  %v46 = vunpack.c.l.b16 %v21
  %v47 = vunpack.c.l.b16 %v22
  %v48 = vunpack.c.l.b16 %v23
  %v49 = vunpack.c.l.b16 %v24
  %v50 = vpack.c.b16 %v43, %v42
  %v51 = vpack.c.b16 %v45, %v44
  %v52 = vpack.c.b16 %v47, %v46
  %v53 = vpack.c.b16 %v49, %v48
  %vm58 = vcmask 523264
  %v60 = vsel %vm58, %v33, 0
  %62 = vmatprep.subr.bf16.mxu0 0
  %63 = vmatpush1.bf16.msra.mxu0 %v50
  %64 = vmatprep.subr.bf16.mxu0 0
  %65 = vmatpush1.bf16.msra.mxu0 %v51
  %66 = vmatprep.subr.bf16.mxu0 0
  %67 = vmatpush1.bf16.msra.mxu0 %v52
  %68 = vmatprep.subr.bf16.mxu0 0
  %69 = vmatpush1.bf16.msra.mxu0 %v53
  %70 = vmatprep.subr.bf16.mxu0 0
  %71 = vmatpush1.bf16.msra.mxu0 0
  %72 = vmatprep.subr.bf16.mxu0 0
  %73 = vmatpush1.bf16.msra.mxu0 0
  %74 = vmatprep.subr.bf16.mxu0 0
  %75 = vmatpush1.bf16.msra.mxu0 0
  %76 = vmatprep.subr.bf16.mxu0 0
  %77 = vmatpush1.bf16.msra.mxu0 0
  %78 = vmatprep.subr.bf16.mxu0 0
  %79 = vmatpush1.bf16.msra.mxu0 0
  %80 = vmatprep.subr.bf16.mxu0 0
  %81 = vmatpush1.bf16.msra.mxu0 0
  %82 = vmatprep.subr.bf16.mxu0 0
  %83 = vmatpush1.bf16.msra.mxu0 0
  %84 = vmatprep.subr.bf16.mxu0 0
  %85 = vmatpush1.bf16.msra.mxu0 0
  %86 = vmatprep.subr.bf16.mxu0 0
  %87 = vmatpush1.bf16.msra.mxu0 0
  %88 = vmatprep.subr.bf16.mxu0 0
  %89 = vmatpush1.bf16.msra.mxu0 0
  %90 = vmatprep.subr.bf16.mxu0 0
  %91 = vmatpush1.bf16.msra.mxu0 0
  %92 = vmatprep.subr.bf16.mxu0 0
  %93 = vmatpush1.bf16.msra.mxu0 0
  %94 = vmatprep.mubr.bf16.mxu0 0
  %95 = vmatmul.mubr.bf16.gmra.mrb[0].mxu0 %v60
  %v96 = vpop.f32.mrb[0].mxu0
  %v97 = vadd.f32 %v27, %v96
  %v98 = vpop.f32.mrb[0].mxu0
  %v99 = vpop.f32.mrb[0].mxu0
  %v100 = vadd.f32 %v28, %v99
  %v101 = vpop.f32.mrb[0].mxu0
  %102 = vdwg.mxu0
  %v103 = vpack.c.bf16 %v100, %v97
  %v105 = vunpack.c.l.b16 %v103
  %v106 = vunpack.c.h.b16 %v103
  %v107 = vpack.c.b16 %v105, %v105
  %v108 = vpack.c.b16 %v106, %v106
  %vm111 = vcmask 257024
  %112 = vst.msk [vmem:[%s3] sm:$0xf] %vm111, %v107
  %113 = vst.msk [vmem:[%s3 + $0x4] sm:$0xf] %vm111, %v108
  // Predicated region
  $region14: #{rankt5_forward.33} parent=0 // pred_check
    _
  $region15: #{rankt5_forward.33} parent=0 // pred_check_branch
    %115 = sbr.rel (0) target = $region17
  $region16: #{rankt5_forward.33} parent=0 // pred_region
    _
  $region17: #{rankt5_forward.33} parent=0 // pred_fallthru
    _
  // Predicated region
  $region18: #{rankt5_forward.33} parent=0 // pred_check
    _
  $region19: #{rankt5_forward.33} parent=0 // pred_check_branch
    %117 = sbr.rel (0) target = $region21
  $region20: #{rankt5_forward.33} parent=0 // pred_region
    _
  $region21: #{rankt5_forward.33} parent=0 // pred_fallthru
    _

// kernel: rankt5_forward.30
$region0: #{rankt5_forward.30}
  #allocation0 [shape = 'u32[]', space=smem, size = 0x4, offset = 0x4, fixed_abs, tag = 'smem constant byte address 0x4 - core index']
  #allocation1 [shape = 'u32[144,128]{1,0:T(1,128)}', space=vmem, size = 0x12000, scoped, tag = 'internal scratch']
  %s0 = inlined_call_operand.vmem [shape: bf16[2,8,96], index: 0, kind: input, shape index: {}]
  %s1 = inlined_call_operand.vmem [shape: f32[4,8,8], index: 1, kind: input, shape index: {}]
  %s2 = inlined_call_operand.vmem [shape: bf16[2,8,32], index: 2, kind: output, shape index: {}]
  %s3 = sld [smem:[#allocation0]]
  $region41: #{rankt5_forward.30} parent=0
    _
  %s5 = ssub.s32 1, %s3
  %s6 = scalar_select 0, %s5, %s3
  loop: start=0, step=1, limit=4
  $region2: #{rankt5_forward.30} parent=0 // loop_pre_header
    _
  $region3: #{rankt5_forward.30} parent=0 // loop_header
    %s8 = sphi 0, %s12
    %p9 = scmp.ge.s32.totalorder %s8, 4
    %s15 = sphi 0, %s27
    %s16 = sphi 0, %s23
    %s17 = sphi 0, %s15
    %s18 = sphi 0, %s16
    %s19 = sphi 0, %s17
    %s20 = sphi 0, %s18
    %s32 = sphi 0, %s34
    %s35 = sphi 0, %s32
    %s36 = sphi 0, %s35
    %s52 = sphi 0, %s36
    %s58 = sphi 0, %s60
    %s61 = sphi 0, %s58
    %s62 = sphi 0, %s61
    %s78 = sphi 0, %s62
    %s86 = sphi 0, %s88
    %s89 = sphi 0, %s86
    %s90 = sphi 0, %s89
    %s106 = sphi 0, %s90
  $region4: #{rankt5_forward.30} parent=0 // loop_header_branch
    %11 = sbr.rel (%p9) target = $region8
  $region5: #{rankt5_forward.30} parent=0 // loop_body
    %s13 = ssub.s32 %s8, 1
    %s14 = ssub.s32 %s8, 2
    %s21 = sadd.s32 1, %s16
    %p22 = scmp.ge.s32.totalorder %s21, 1
    %s23 = scalar_select %p22, 0, %s21
    %s24 = sadd.s32 1, %s15
    %s25 = scalar_select %p22, %s24, %s15
    %p26 = scmp.ge.s32.totalorder %s25, 2
    %s27 = scalar_select %p26, 0, %s25
    %s28 = ssub.s32 %s15, %s27
    %s29 = ssub.s32 %s16, %s23
    %s30 = sor.u32 %s28, %s29
    %p31 = scmp.eq.s32.totalorder %s30, 0
    %s33 = sadd.s32 %s32, 1
    %s34 = scalar_select %p31, %s32, %s33
    %p37 = pneg %p31
    %p38 = scmp.eq.s32.totalorder %s8, 1
    %p39 = por %p37, %p38
    %p40 = scmp.ne.s32.totalorder %s32, %s35
    %p41 = scmp.eq.s32.totalorder %s8, 0
    %p42 = por %p40, %p41
    %p43 = scmp.ne.s32.totalorder %s32, %s35
    %p44 = scmp.eq.s32.totalorder %s13, 1
    %p45 = por %p43, %p44
    %p46 = scmp.ne.s32.totalorder %s35, %s36
    %p47 = scmp.eq.s32.totalorder %s13, 0
    %p48 = por %p46, %p47
    %p49 = scmp.ne.s32.totalorder %s35, %s36
    %p50 = scmp.eq.s32.totalorder %s14, 1
    %p51 = por %p49, %p50
    %p53 = scmp.ne.s32.totalorder %s36, %s52
    %p54 = scmp.eq.s32.totalorder %s14, 0
    %p55 = por %p53, %p54
    %s56 = ssub.s32 %s16, %s23
    %p57 = scmp.eq.s32.totalorder %s56, 0
    %s59 = sadd.s32 %s58, 1
    %s60 = scalar_select %p57, %s58, %s59
    %p63 = pneg %p57
    %p64 = scmp.eq.s32.totalorder %s8, 1
    %p65 = por %p63, %p64
    %p66 = scmp.ne.s32.totalorder %s58, %s61
    %p67 = scmp.eq.s32.totalorder %s8, 0
    %p68 = por %p66, %p67
    %p69 = scmp.ne.s32.totalorder %s58, %s61
    %p70 = scmp.eq.s32.totalorder %s13, 1
    %p71 = por %p69, %p70
    %p72 = scmp.ne.s32.totalorder %s61, %s62
    %p73 = scmp.eq.s32.totalorder %s13, 0
    %p74 = por %p72, %p73
    %p75 = scmp.ne.s32.totalorder %s61, %s62
    %p76 = scmp.eq.s32.totalorder %s14, 1
    %p77 = por %p75, %p76
    %p79 = scmp.ne.s32.totalorder %s62, %s78
    %p80 = scmp.eq.s32.totalorder %s14, 0
    %p81 = por %p79, %p80
    %s82 = ssub.s32 %s15, %s27
    %s83 = ssub.s32 %s16, %s23
    %s84 = sor.u32 %s82, %s83
    %p85 = scmp.eq.s32.totalorder %s84, 0
    %s87 = sadd.s32 %s86, 1
    %s88 = scalar_select %p85, %s86, %s87
    %p91 = pneg %p85
    %p92 = scmp.eq.s32.totalorder %s8, 1
    %p93 = por %p91, %p92
    %p94 = scmp.ne.s32.totalorder %s86, %s89
    %p95 = scmp.eq.s32.totalorder %s8, 0
    %p96 = por %p94, %p95
    %p97 = scmp.ne.s32.totalorder %s86, %s89
    %p98 = scmp.eq.s32.totalorder %s13, 1
    %p99 = por %p97, %p98
    %p100 = scmp.ne.s32.totalorder %s89, %s90
    %p101 = scmp.eq.s32.totalorder %s13, 0
    %p102 = por %p100, %p101
    %p103 = scmp.ne.s32.totalorder %s89, %s90
    %p104 = scmp.eq.s32.totalorder %s14, 1
    %p105 = por %p103, %p104
    %p107 = scmp.ne.s32.totalorder %s90, %s106
    %p108 = scmp.eq.s32.totalorder %s14, 0
    %p109 = por %p107, %p108
    %p110 = scmp.le.s32.totalorder 1, %s8
    %p111 = scmp.lt.s32.totalorder %s8, 3
    %p112 = pnand %p110, %p111
    %p113 = pneg %p112
    // Predicated region
    $region9: #{rankt5_forward.30} parent=5 // pred_check
      _
    $region10: #{rankt5_forward.30} parent=5 // pred_check_branch
      %115 = sbr.rel (%p112) target = $region12
    $region11: #{rankt5_forward.30} parent=5 // pred_region
      %s116 = ssub.s32 %s8, 1
      // Predicated region
      $region13: #{rankt5_forward.30} parent=11 // pred_check
        %p117 = pneg %p74
      $region14: #{rankt5_forward.30} parent=11 // pred_check_branch
        %119 = sbr.rel (%p117) target = $region16
      $region15: #{rankt5_forward.30} parent=11 // pred_region
        %s120 = smul.u32 4, %s18
        %p121 = scmp.lt.s32.totalorder %s120, 3
        %s122 = scalar_select %p121, %s120, 3
        %s123 = smul.addr %s122, 8
        %s124 = scalar_lea.vmem %s1, %s123
        %s125 = smul.u32 4, %s18
      $region16: #{rankt5_forward.30} parent=11 // pred_fallthru
        _
    $region12: #{rankt5_forward.30} parent=5 // pred_fallthru
      _
    %p126 = scmp.lt.s32.totalorder %s8, 2
    // Predicated region
    $region17: #{rankt5_forward.30} parent=5 // pred_check
      %p127 = pneg %p126
    $region18: #{rankt5_forward.30} parent=5 // pred_check_branch
      %129 = sbr.rel (%p127) target = $region20
    $region19: #{rankt5_forward.30} parent=5 // pred_region
      // Predicated region
      $region21: #{rankt5_forward.30} parent=19 // pred_check
        %p130 = pneg %p42
      $region22: #{rankt5_forward.30} parent=19 // pred_check_branch
        %132 = sbr.rel (%p130) target = $region24
      $region23: #{rankt5_forward.30} parent=19 // pred_region
        %p133 = scmp.lt.s32.totalorder %s15, 1
        %s134 = scalar_select %p133, %s15, 1
        %p135 = scmp.lt.s32.totalorder %s16, 0
        %s136 = scalar_select %p135, %s16, 0
        %s137 = sadd.s32 %s136, %s134
        %s138 = smul.addr %s137, 4
        %s139 = scalar_lea.vmem %s0, %s138
      $region24: #{rankt5_forward.30} parent=19 // pred_fallthru
        _
    $region20: #{rankt5_forward.30} parent=5 // pred_fallthru
      _
    %p140 = scmp.le.s32.totalorder 1, %s8
    %p141 = scmp.lt.s32.totalorder %s8, 3
    %p142 = pnand %p140, %p141
    %p143 = pneg %p142
    // Predicated region
    $region25: #{rankt5_forward.30} parent=5 // pred_check
      _
    $region26: #{rankt5_forward.30} parent=5 // pred_check_branch
      %145 = sbr.rel (%p142) target = $region28
    $region27: #{rankt5_forward.30} parent=5 // pred_region
      %s146 = ssub.s32 %s8, 1
      %p147 = scmp.lt.s32.totalorder %s17, 1
      %s148 = scalar_select %p147, %s17, 1
      %p149 = scmp.lt.s32.totalorder %s18, 0
      %s150 = scalar_select %p149, %s18, 0
      %s151 = sadd.s32 %s150, %s148
      %s152 = smul.addr %s151, 4
      %s153 = scalar_lea.vmem %s0, %s152
      %p154 = pneg %p48
      %p155 = pneg %p45
      %s156 = smul.u32 4, %s18
      %p157 = scmp.lt.s32.totalorder %s156, 3
      %s158 = scalar_select %p157, %s156, 3
      %s159 = smul.addr %s158, 8
      %s160 = scalar_lea.vmem %s1, %s159
      %p161 = pneg %p74
      %p162 = pneg %p71
      %p163 = pneg %p102
      %p164 = pneg %p99
      %p165 = scmp.lt.s32.totalorder %s17, 1
      %s166 = scalar_select %p165, %s17, 1
      %p167 = scmp.lt.s32.totalorder %s18, 0
      %s168 = scalar_select %p167, %s18, 0
      %s169 = sadd.s32 %s168, %s166
      %s170 = smul.addr %s169, 4
      %s171 = scalar_lea.vmem %s2, %s170
      %p172 = scmp.lt.s32.totalorder %s17, 1
      %s173 = scalar_select %p172, %s17, 1
      %p174 = scmp.lt.s32.totalorder %s18, 0
      %s175 = scalar_select %p174, %s18, 0
      %s176 = sadd.s32 %s175, %s173
      %s177 = smul.addr %s176, 4
      %s178 = scalar_lea.vmem %s0, %s177
      %s179 = smul.u32 4, %s18
      %p180 = scmp.lt.s32.totalorder %s179, 3
      %s181 = scalar_select %p180, %s179, 3
      %s182 = smul.addr %s181, 8
      %s183 = scalar_lea.vmem %s1, %s182
      %s184 = smul.u32 4, %s18
      %p185 = scmp.lt.s32.totalorder %s17, 1
      %s186 = scalar_select %p185, %s17, 1
      %p187 = scmp.lt.s32.totalorder %s18, 0
      %s188 = scalar_select %p187, %s18, 0
      %s189 = sadd.s32 %s188, %s186
      %s190 = smul.addr %s189, 4
      %s191 = scalar_lea.vmem %s2, %s190
      %v193 = vld [vmem:[%s178] sm:$0xf]
      %v194 = vld [vmem:[%s183] sm:$0xff]
      %v195 = vld [vmem:[%s183 + $0x8] sm:$0xff]
      %v196 = vld [vmem:[%s183 + $0x10] sm:$0xff]
      %v197 = vld [vmem:[%s183 + $0x18] sm:$0xff]
      %v199 = vunpack.c.l.b16 %v193
      %v200 = vpack.c.b16 %v199, %v199
      %201 = vrot.lane.b32.xlu0 %v200, 96
      %v202 = vpop.permute.xlu0 %201
      %vm203 = vcmask 64512
      %v205 = vsel %vm203, %v193, 0
      %v208 = vsel %vm203, %v202, 0
      %210 = vmatprep.subr.bf16.mxu0 0
      %211 = vmatpush1.bf16.xpose.msra.mxu0 %v208
      %212 = vmatprep.subr.bf16.mxu0 0
      %213 = vmatpush1.bf16.xpose.msra.mxu0 0
      %214 = vmatprep.subr.bf16.mxu0 0
      %215 = vmatpush1.bf16.xpose.msra.mxu0 0
      %216 = vmatprep.subr.bf16.mxu0 0
      %217 = vmatpush1.bf16.xpose.msra.mxu0 0
      %218 = vmatprep.subr.bf16.mxu0 0
      %219 = vmatpush1.bf16.xpose.msra.mxu0 0
      %220 = vmatprep.subr.bf16.mxu0 0
      %221 = vmatpush1.bf16.xpose.msra.mxu0 0
      %222 = vmatprep.subr.bf16.mxu0 0
      %223 = vmatpush1.bf16.xpose.msra.mxu0 0
      %224 = vmatprep.subr.bf16.mxu0 0
      %225 = vmatpush1.bf16.xpose.msra.mxu0 0
      %226 = vmatprep.subr.bf16.mxu0 0
      %227 = vmatpush1.bf16.xpose.msra.mxu0 0
      %228 = vmatprep.subr.bf16.mxu0 0
      %229 = vmatpush1.bf16.xpose.msra.mxu0 0
      %230 = vmatprep.subr.bf16.mxu0 0
      %231 = vmatpush1.bf16.xpose.msra.mxu0 0
      %232 = vmatprep.subr.bf16.mxu0 0
      %233 = vmatpush1.bf16.xpose.msra.mxu0 0
      %234 = vmatprep.subr.bf16.mxu0 0
      %235 = vmatpush1.bf16.xpose.msra.mxu0 0
      %236 = vmatprep.subr.bf16.mxu0 0
      %237 = vmatpush1.bf16.xpose.msra.mxu0 0
      %238 = vmatprep.subr.bf16.mxu0 0
      %239 = vmatpush1.bf16.xpose.msra.mxu0 0
      %240 = vmatprep.subr.bf16.mxu0 0
      %241 = vmatpush1.bf16.xpose.msra.mxu0 0
      %242 = vmatprep.mubr.bf16.mxu0 0
      %243 = vmatmul.mubr.bf16.gmra.mrb[0].mxu0 %v205
      %v244 = vpop.f32.mrb[0].mxu0
      %v245 = vadd.f32 %v194, %v244
      %v246 = vpop.f32.mrb[0].mxu0
      %v247 = vpop.f32.mrb[0].mxu0
      %v248 = vpop.f32.mrb[0].mxu0
      %249 = vdwg.mxu0
      %v250 = vsel %vm203, %v245, -inf
      %251 = vmax.xlane.f32.xlu0 %v250
      %v252 = vpop.xlane.xlu0 %251
      %v253 = vsub.f32 %v245, %v252
      %v254 = vmul.f32 %v253, 1.442695
      %v255 = vpow.pop %v254
      %v256 = vsel %vm203, %v255, 0.0
      %257 = vadd.xlane.f32.xlu0 %v256
      %v258 = vpop.xlane.xlu0 %257
      %v259 = vrcp.pop %v258
      %v260 = vmul.f32 %v255, %v259
      %v261 = vpack.c.bf16 %v260, %v260
      %262 = vrot.lane.b32.xlu0 %v200, 64
      %v263 = vpop.permute.xlu0 %262
      %v265 = vsel %vm203, %v261, 0
      %vm267 = vcmask 1043456
      %v269 = vsel %vm267, %v263, 0
      %271 = vmatprep.subr.bf16.mxu0 0
      %272 = vmatpush1.bf16.msra.mxu0 %v269
      %273 = vmatprep.subr.bf16.mxu0 0
      %274 = vmatpush1.bf16.msra.mxu0 0
      %275 = vmatprep.subr.bf16.mxu0 0
      %276 = vmatpush1.bf16.msra.mxu0 0
      %277 = vmatprep.subr.bf16.mxu0 0
      %278 = vmatpush1.bf16.msra.mxu0 0
      %279 = vmatprep.subr.bf16.mxu0 0
      %280 = vmatpush1.bf16.msra.mxu0 0
      %281 = vmatprep.subr.bf16.mxu0 0
      %282 = vmatpush1.bf16.msra.mxu0 0
      %283 = vmatprep.subr.bf16.mxu0 0
      %284 = vmatpush1.bf16.msra.mxu0 0
      %285 = vmatprep.subr.bf16.mxu0 0
      %286 = vmatpush1.bf16.msra.mxu0 0
      %287 = vmatprep.subr.bf16.mxu0 0
      %288 = vmatpush1.bf16.msra.mxu0 0
      %289 = vmatprep.subr.bf16.mxu0 0
      %290 = vmatpush1.bf16.msra.mxu0 0
      %291 = vmatprep.subr.bf16.mxu0 0
      %292 = vmatpush1.bf16.msra.mxu0 0
      %293 = vmatprep.subr.bf16.mxu0 0
      %294 = vmatpush1.bf16.msra.mxu0 0
      %295 = vmatprep.subr.bf16.mxu0 0
      %296 = vmatpush1.bf16.msra.mxu0 0
      %297 = vmatprep.subr.bf16.mxu0 0
      %298 = vmatpush1.bf16.msra.mxu0 0
      %299 = vmatprep.subr.bf16.mxu0 0
      %300 = vmatpush1.bf16.msra.mxu0 0
      %301 = vmatprep.subr.bf16.mxu0 0
      %302 = vmatpush1.bf16.msra.mxu0 0
      %303 = vmatprep.mubr.bf16.mxu0 0
      %304 = vmatmul.mubr.bf16.gmra.mrb[0].mxu0 %v265
      %v305 = vpop.f32.mrb[0].mxu0
      %v306 = vadd.f32 0.0, %v305
      %v307 = vpop.f32.mrb[0].mxu0
      %v308 = vpop.f32.mrb[0].mxu0
      %v309 = vpop.f32.mrb[0].mxu0
      %310 = vdwg.mxu0
      %311 = vrot.lane.b32.xlu0 %v200, 120
      %v312 = vpop.permute.xlu0 %311
      %313 = vrot.lane.b32.xlu0 %v200, 88
      %v314 = vpop.permute.xlu0 %313
      %v316 = vsel %vm203, %v312, 0
      %v319 = vsel %vm203, %v314, 0
      %321 = vmatprep.subr.bf16.mxu0 0
      %322 = vmatpush1.bf16.xpose.msra.mxu0 %v319
      %323 = vmatprep.subr.bf16.mxu0 0
      %324 = vmatpush1.bf16.xpose.msra.mxu0 0
      %325 = vmatprep.subr.bf16.mxu0 0
      %326 = vmatpush1.bf16.xpose.msra.mxu0 0
      %327 = vmatprep.subr.bf16.mxu0 0
      %328 = vmatpush1.bf16.xpose.msra.mxu0 0
      %329 = vmatprep.subr.bf16.mxu0 0
      %330 = vmatpush1.bf16.xpose.msra.mxu0 0
      %331 = vmatprep.subr.bf16.mxu0 0
      %332 = vmatpush1.bf16.xpose.msra.mxu0 0
      %333 = vmatprep.subr.bf16.mxu0 0
      %334 = vmatpush1.bf16.xpose.msra.mxu0 0
      %335 = vmatprep.subr.bf16.mxu0 0
      %336 = vmatpush1.bf16.xpose.msra.mxu0 0
      %337 = vmatprep.subr.bf16.mxu0 0
      %338 = vmatpush1.bf16.xpose.msra.mxu0 0
      %339 = vmatprep.subr.bf16.mxu0 0
      %340 = vmatpush1.bf16.xpose.msra.mxu0 0
      %341 = vmatprep.subr.bf16.mxu0 0
      %342 = vmatpush1.bf16.xpose.msra.mxu0 0
      %343 = vmatprep.subr.bf16.mxu0 0
      %344 = vmatpush1.bf16.xpose.msra.mxu0 0
      %345 = vmatprep.subr.bf16.mxu0 0
      %346 = vmatpush1.bf16.xpose.msra.mxu0 0
      %347 = vmatprep.subr.bf16.mxu0 0
      %348 = vmatpush1.bf16.xpose.msra.mxu0 0
      %349 = vmatprep.subr.bf16.mxu0 0
      %350 = vmatpush1.bf16.xpose.msra.mxu0 0
      %351 = vmatprep.subr.bf16.mxu0 0
      %352 = vmatpush1.bf16.xpose.msra.mxu0 0
      %353 = vmatprep.mubr.bf16.mxu0 0
      %354 = vmatmul.mubr.bf16.gmra.mrb[0].mxu0 %v316
      %v355 = vpop.f32.mrb[0].mxu0
      %v356 = vadd.f32 %v195, %v355
      %v357 = vpop.f32.mrb[0].mxu0
      %v358 = vpop.f32.mrb[0].mxu0
      %v359 = vpop.f32.mrb[0].mxu0
      %360 = vdwg.mxu0
      %v361 = vsel %vm203, %v356, -inf
      %362 = vmax.xlane.f32.xlu0 %v361
      %v363 = vpop.xlane.xlu0 %362
      %v364 = vsub.f32 %v356, %v363
      %v365 = vmul.f32 %v364, 1.442695
      %v366 = vpow.pop %v365
      %v367 = vsel %vm203, %v366, 0.0
      %368 = vadd.xlane.f32.xlu0 %v367
      %v369 = vpop.xlane.xlu0 %368
      %v370 = vrcp.pop %v369
      %v371 = vmul.f32 %v366, %v370
      %v372 = vpack.c.bf16 %v371, %v371
      %373 = vrot.lane.b32.xlu0 %v200, 56
      %v374 = vpop.permute.xlu0 %373
      %v376 = vsel %vm203, %v372, 0
      %v379 = vsel %vm267, %v374, 0
      %381 = vmatprep.subr.bf16.mxu0 0
      %382 = vmatpush1.bf16.msra.mxu0 %v379
      %383 = vmatprep.subr.bf16.mxu0 0
      %384 = vmatpush1.bf16.msra.mxu0 0
      %385 = vmatprep.subr.bf16.mxu0 0
      %386 = vmatpush1.bf16.msra.mxu0 0
      %387 = vmatprep.subr.bf16.mxu0 0
      %388 = vmatpush1.bf16.msra.mxu0 0
      %389 = vmatprep.subr.bf16.mxu0 0
      %390 = vmatpush1.bf16.msra.mxu0 0
      %391 = vmatprep.subr.bf16.mxu0 0
      %392 = vmatpush1.bf16.msra.mxu0 0
      %393 = vmatprep.subr.bf16.mxu0 0
      %394 = vmatpush1.bf16.msra.mxu0 0
      %395 = vmatprep.subr.bf16.mxu0 0
      %396 = vmatpush1.bf16.msra.mxu0 0
      %397 = vmatprep.subr.bf16.mxu0 0
      %398 = vmatpush1.bf16.msra.mxu0 0
      %399 = vmatprep.subr.bf16.mxu0 0
      %400 = vmatpush1.bf16.msra.mxu0 0
      %401 = vmatprep.subr.bf16.mxu0 0
      %402 = vmatpush1.bf16.msra.mxu0 0
      %403 = vmatprep.subr.bf16.mxu0 0
      %404 = vmatpush1.bf16.msra.mxu0 0
      %405 = vmatprep.subr.bf16.mxu0 0
      %406 = vmatpush1.bf16.msra.mxu0 0
      %407 = vmatprep.subr.bf16.mxu0 0
      %408 = vmatpush1.bf16.msra.mxu0 0
      %409 = vmatprep.subr.bf16.mxu0 0
      %410 = vmatpush1.bf16.msra.mxu0 0
      %411 = vmatprep.subr.bf16.mxu0 0
      %412 = vmatpush1.bf16.msra.mxu0 0
      %413 = vmatprep.mubr.bf16.mxu0 0
      %414 = vmatmul.mubr.bf16.gmra.mrb[0].mxu0 %v376
      %v415 = vpop.f32.mrb[0].mxu0
      %v416 = vadd.f32 0.0, %v415
      %v417 = vpop.f32.mrb[0].mxu0
      %v418 = vpop.f32.mrb[0].mxu0
      %v419 = vpop.f32.mrb[0].mxu0
      %420 = vdwg.mxu0
      %421 = vrot.lane.b32.xlu0 %v200, 112
      %v422 = vpop.permute.xlu0 %421
      %423 = vrot.lane.b32.xlu0 %v200, 80
      %v424 = vpop.permute.xlu0 %423
      %v426 = vsel %vm203, %v422, 0
      %v429 = vsel %vm203, %v424, 0
      %431 = vmatprep.subr.bf16.mxu0 0
      %432 = vmatpush1.bf16.xpose.msra.mxu0 %v429
      %433 = vmatprep.subr.bf16.mxu0 0
      %434 = vmatpush1.bf16.xpose.msra.mxu0 0
      %435 = vmatprep.subr.bf16.mxu0 0
      %436 = vmatpush1.bf16.xpose.msra.mxu0 0
      %437 = vmatprep.subr.bf16.mxu0 0
      %438 = vmatpush1.bf16.xpose.msra.mxu0 0
      %439 = vmatprep.subr.bf16.mxu0 0
      %440 = vmatpush1.bf16.xpose.msra.mxu0 0
      %441 = vmatprep.subr.bf16.mxu0 0
      %442 = vmatpush1.bf16.xpose.msra.mxu0 0
      %443 = vmatprep.subr.bf16.mxu0 0
      %444 = vmatpush1.bf16.xpose.msra.mxu0 0
      %445 = vmatprep.subr.bf16.mxu0 0
      %446 = vmatpush1.bf16.xpose.msra.mxu0 0
      %447 = vmatprep.subr.bf16.mxu0 0
      %448 = vmatpush1.bf16.xpose.msra.mxu0 0
      %449 = vmatprep.subr.bf16.mxu0 0
      %450 = vmatpush1.bf16.xpose.msra.mxu0 0
      %451 = vmatprep.subr.bf16.mxu0 0
      %452 = vmatpush1.bf16.xpose.msra.mxu0 0
      %453 = vmatprep.subr.bf16.mxu0 0
      %454 = vmatpush1.bf16.xpose.msra.mxu0 0
      %455 = vmatprep.subr.bf16.mxu0 0
      %456 = vmatpush1.bf16.xpose.msra.mxu0 0
      %457 = vmatprep.subr.bf16.mxu0 0
      %458 = vmatpush1.bf16.xpose.msra.mxu0 0
      %459 = vmatprep.subr.bf16.mxu0 0
      %460 = vmatpush1.bf16.xpose.msra.mxu0 0
      %461 = vmatprep.subr.bf16.mxu0 0
      %462 = vmatpush1.bf16.xpose.msra.mxu0 0
      %463 = vmatprep.mubr.bf16.mxu0 0
      %464 = vmatmul.mubr.bf16.gmra.mrb[0].mxu0 %v426
      %v465 = vpop.f32.mrb[0].mxu0
      %v466 = vadd.f32 %v196, %v465
      %v467 = vpop.f32.mrb[0].mxu0
      %v468 = vpop.f32.mrb[0].mxu0
      %v469 = vpop.f32.mrb[0].mxu0
      %470 = vdwg.mxu0
      %v471 = vsel %vm203, %v466, -inf
      %472 = vmax.xlane.f32.xlu0 %v471
      %v473 = vpop.xlane.xlu0 %472
      %v474 = vsub.f32 %v466, %v473
      %v475 = vmul.f32 %v474, 1.442695
      %v476 = vpow.pop %v475
      %v477 = vsel %vm203, %v476, 0.0
      %478 = vadd.xlane.f32.xlu0 %v477
      %v479 = vpop.xlane.xlu0 %478
      %v480 = vrcp.pop %v479
      %v481 = vmul.f32 %v476, %v480
      %v482 = vpack.c.bf16 %v481, %v481
      %483 = vrot.lane.b32.xlu0 %v200, 48
      %v484 = vpop.permute.xlu0 %483
      %v486 = vsel %vm203, %v482, 0
      %v489 = vsel %vm267, %v484, 0
      %491 = vmatprep.subr.bf16.mxu0 0
      %492 = vmatpush1.bf16.msra.mxu0 %v489
      %493 = vmatprep.subr.bf16.mxu0 0
      %494 = vmatpush1.bf16.msra.mxu0 0
      %495 = vmatprep.subr.bf16.mxu0 0
      %496 = vmatpush1.bf16.msra.mxu0 0
      %497 = vmatprep.subr.bf16.mxu0 0
      %498 = vmatpush1.bf16.msra.mxu0 0
      %499 = vmatprep.subr.bf16.mxu0 0
      %500 = vmatpush1.bf16.msra.mxu0 0
      %501 = vmatprep.subr.bf16.mxu0 0
      %502 = vmatpush1.bf16.msra.mxu0 0
      %503 = vmatprep.subr.bf16.mxu0 0
      %504 = vmatpush1.bf16.msra.mxu0 0
      %505 = vmatprep.subr.bf16.mxu0 0
      %506 = vmatpush1.bf16.msra.mxu0 0
      %507 = vmatprep.subr.bf16.mxu0 0
      %508 = vmatpush1.bf16.msra.mxu0 0
      %509 = vmatprep.subr.bf16.mxu0 0
      %510 = vmatpush1.bf16.msra.mxu0 0
      %511 = vmatprep.subr.bf16.mxu0 0
      %512 = vmatpush1.bf16.msra.mxu0 0
      %513 = vmatprep.subr.bf16.mxu0 0
      %514 = vmatpush1.bf16.msra.mxu0 0
      %515 = vmatprep.subr.bf16.mxu0 0
      %516 = vmatpush1.bf16.msra.mxu0 0
      %517 = vmatprep.subr.bf16.mxu0 0
      %518 = vmatpush1.bf16.msra.mxu0 0
      %519 = vmatprep.subr.bf16.mxu0 0
      %520 = vmatpush1.bf16.msra.mxu0 0
      %521 = vmatprep.subr.bf16.mxu0 0
      %522 = vmatpush1.bf16.msra.mxu0 0
      %523 = vmatprep.mubr.bf16.mxu0 0
      %524 = vmatmul.mubr.bf16.gmra.mrb[0].mxu0 %v486
      %v525 = vpop.f32.mrb[0].mxu0
      %v526 = vadd.f32 0.0, %v525
      %v527 = vpop.f32.mrb[0].mxu0
      %v528 = vpop.f32.mrb[0].mxu0
      %v529 = vpop.f32.mrb[0].mxu0
      %530 = vdwg.mxu0
      %531 = vrot.lane.b32.xlu0 %v200, 104
      %v532 = vpop.permute.xlu0 %531
      %533 = vrot.lane.b32.xlu0 %v200, 72
      %v534 = vpop.permute.xlu0 %533
      %v536 = vsel %vm203, %v532, 0
      %v539 = vsel %vm203, %v534, 0
      %541 = vmatprep.subr.bf16.mxu0 0
      %542 = vmatpush1.bf16.xpose.msra.mxu0 %v539
      %543 = vmatprep.subr.bf16.mxu0 0
      %544 = vmatpush1.bf16.xpose.msra.mxu0 0
      %545 = vmatprep.subr.bf16.mxu0 0
      %546 = vmatpush1.bf16.xpose.msra.mxu0 0
      %547 = vmatprep.subr.bf16.mxu0 0
      %548 = vmatpush1.bf16.xpose.msra.mxu0 0
      %549 = vmatprep.subr.bf16.mxu0 0
      %550 = vmatpush1.bf16.xpose.msra.mxu0 0
      %551 = vmatprep.subr.bf16.mxu0 0
      %552 = vmatpush1.bf16.xpose.msra.mxu0 0
      %553 = vmatprep.subr.bf16.mxu0 0
      %554 = vmatpush1.bf16.xpose.msra.mxu0 0
      %555 = vmatprep.subr.bf16.mxu0 0
      %556 = vmatpush1.bf16.xpose.msra.mxu0 0
      %557 = vmatprep.subr.bf16.mxu0 0
      %558 = vmatpush1.bf16.xpose.msra.mxu0 0
      %559 = vmatprep.subr.bf16.mxu0 0
      %560 = vmatpush1.bf16.xpose.msra.mxu0 0
      %561 = vmatprep.subr.bf16.mxu0 0
      %562 = vmatpush1.bf16.xpose.msra.mxu0 0
      %563 = vmatprep.subr.bf16.mxu0 0
      %564 = vmatpush1.bf16.xpose.msra.mxu0 0
      %565 = vmatprep.subr.bf16.mxu0 0
      %566 = vmatpush1.bf16.xpose.msra.mxu0 0
      %567 = vmatprep.subr.bf16.mxu0 0
      %568 = vmatpush1.bf16.xpose.msra.mxu0 0
      %569 = vmatprep.subr.bf16.mxu0 0
      %570 = vmatpush1.bf16.xpose.msra.mxu0 0
      %571 = vmatprep.subr.bf16.mxu0 0
      %572 = vmatpush1.bf16.xpose.msra.mxu0 0
      %573 = vmatprep.mubr.bf16.mxu0 0
      %574 = vmatmul.mubr.bf16.gmra.mrb[0].mxu0 %v536
      %v575 = vpop.f32.mrb[0].mxu0
      %v576 = vadd.f32 %v197, %v575
      %v577 = vpop.f32.mrb[0].mxu0
      %v578 = vpop.f32.mrb[0].mxu0
      %v579 = vpop.f32.mrb[0].mxu0
      %580 = vdwg.mxu0
      %v581 = vsel %vm203, %v576, -inf
      %582 = vmax.xlane.f32.xlu0 %v581
      %v583 = vpop.xlane.xlu0 %582
      %v584 = vsub.f32 %v576, %v583
      %v585 = vmul.f32 %v584, 1.442695
      %v586 = vpow.pop %v585
      %v587 = vsel %vm203, %v586, 0.0
      %588 = vadd.xlane.f32.xlu0 %v587
      %v589 = vpop.xlane.xlu0 %588
      %v590 = vrcp.pop %v589
      %v591 = vmul.f32 %v586, %v590
      %v592 = vpack.c.bf16 %v591, %v591
      %593 = vrot.lane.b32.xlu0 %v200, 40
      %v594 = vpop.permute.xlu0 %593
      %v596 = vsel %vm203, %v592, 0
      %v599 = vsel %vm267, %v594, 0
      %601 = vmatprep.subr.bf16.mxu0 0
      %602 = vmatpush1.bf16.msra.mxu0 %v599
      %603 = vmatprep.subr.bf16.mxu0 0
      %604 = vmatpush1.bf16.msra.mxu0 0
      %605 = vmatprep.subr.bf16.mxu0 0
      %606 = vmatpush1.bf16.msra.mxu0 0
      %607 = vmatprep.subr.bf16.mxu0 0
      %608 = vmatpush1.bf16.msra.mxu0 0
      %609 = vmatprep.subr.bf16.mxu0 0
      %610 = vmatpush1.bf16.msra.mxu0 0
      %611 = vmatprep.subr.bf16.mxu0 0
      %612 = vmatpush1.bf16.msra.mxu0 0
      %613 = vmatprep.subr.bf16.mxu0 0
      %614 = vmatpush1.bf16.msra.mxu0 0
      %615 = vmatprep.subr.bf16.mxu0 0
      %616 = vmatpush1.bf16.msra.mxu0 0
      %617 = vmatprep.subr.bf16.mxu0 0
      %618 = vmatpush1.bf16.msra.mxu0 0
      %619 = vmatprep.subr.bf16.mxu0 0
      %620 = vmatpush1.bf16.msra.mxu0 0
      %621 = vmatprep.subr.bf16.mxu0 0
      %622 = vmatpush1.bf16.msra.mxu0 0
      %623 = vmatprep.subr.bf16.mxu0 0
      %624 = vmatpush1.bf16.msra.mxu0 0
      %625 = vmatprep.subr.bf16.mxu0 0
      %626 = vmatpush1.bf16.msra.mxu0 0
      %627 = vmatprep.subr.bf16.mxu0 0
      %628 = vmatpush1.bf16.msra.mxu0 0
      %629 = vmatprep.subr.bf16.mxu0 0
      %630 = vmatpush1.bf16.msra.mxu0 0
      %631 = vmatprep.subr.bf16.mxu0 0
      %632 = vmatpush1.bf16.msra.mxu0 0
      %633 = vmatprep.mubr.bf16.mxu0 0
      %634 = vmatmul.mubr.bf16.gmra.mrb[0].mxu0 %v596
      %v635 = vpop.f32.mrb[0].mxu0
      %v636 = vadd.f32 0.0, %v635
      %v637 = vpop.f32.mrb[0].mxu0
      %v638 = vpop.f32.mrb[0].mxu0
      %v639 = vpop.f32.mrb[0].mxu0
      %640 = vdwg.mxu0
      %642 = vrot.lane.b32.xlu0 %v416, 8
      %v643 = vpop.permute.xlu0 %642
      %646 = vrot.lane.b32.xlu0 %v526, 16
      %v647 = vpop.permute.xlu0 %646
      %650 = vrot.lane.b32.xlu0 %v636, 24
      %v651 = vpop.permute.xlu0 %650
      %v653 = vsel %vm203, %v306, %v643
      %vm654 = vcmask 130048
      %v655 = vsel %vm654, %v653, %v647
      %vm656 = vcmask 195584
      %v657 = vsel %vm656, %v655, %v651
      %v658 = vpack.c.bf16 %v657, %v657
      %vm659 = vcmask 257024
      %660 = vst.msk [vmem:[%s191] sm:$0xf] %vm659, %v658
      %p661 = scmp.lt.s32.totalorder %s17, 1
      %s662 = scalar_select %p661, %s17, 1
      %p663 = scmp.lt.s32.totalorder %s18, 0
      %s664 = scalar_select %p663, %s18, 0
      %s665 = sadd.s32 %s664, %s662
      %s666 = smul.addr %s665, 4
      %s667 = scalar_lea.vmem %s2, %s666
      // Predicated region
      $region29: #{rankt5_forward.30} parent=27 // pred_check
        %p668 = pneg %p99
      $region30: #{rankt5_forward.30} parent=27 // pred_check_branch
        %670 = sbr.rel (%p668) target = $region32
      $region31: #{rankt5_forward.30} parent=27 // pred_region
        _
      $region32: #{rankt5_forward.30} parent=27 // pred_fallthru
        _
    $region28: #{rankt5_forward.30} parent=5 // pred_fallthru
      _
    %p671 = scmp.le.s32.totalorder 2, %s8
    // Predicated region
    $region33: #{rankt5_forward.30} parent=5 // pred_check
      %p672 = pneg %p671
    $region34: #{rankt5_forward.30} parent=5 // pred_check_branch
      %674 = sbr.rel (%p672) target = $region36
    $region35: #{rankt5_forward.30} parent=5 // pred_region
      %s675 = ssub.s32 %s8, 2
      // Predicated region
      $region37: #{rankt5_forward.30} parent=35 // pred_check
        %p676 = pneg %p105
      $region38: #{rankt5_forward.30} parent=35 // pred_check_branch
        %678 = sbr.rel (%p676) target = $region40
      $region39: #{rankt5_forward.30} parent=35 // pred_region
        %p679 = scmp.lt.s32.totalorder %s19, 1
        %s680 = scalar_select %p679, %s19, 1
        %p681 = scmp.lt.s32.totalorder %s20, 0
        %s682 = scalar_select %p681, %s20, 0
        %s683 = sadd.s32 %s682, %s680
        %s684 = smul.addr %s683, 4
        %s685 = scalar_lea.vmem %s2, %s684
      $region40: #{rankt5_forward.30} parent=35 // pred_fallthru
        _
    $region36: #{rankt5_forward.30} parent=5 // pred_fallthru
      _
  $region6: #{rankt5_forward.30} parent=0 // loop_footer
    %s12 = sadd.s32 1, %s8
  $region7: #{rankt5_forward.30} parent=0 // loop_footer_branch
    %7 = sbr.rel target = $region3
  $region8: #{rankt5_forward.30} parent=0 // loop_exit
    _

// kernel: rankt5_forward.42
$region0: #{rankt5_forward.42}
  #allocation0 [shape = 'u32[]', space=smem, size = 0x4, offset = 0x4, fixed_abs, tag = 'smem constant byte address 0x4 - core index']
  #allocation1 [shape = 'u32[144,128]{1,0:T(1,128)}', space=vmem, size = 0x12000, scoped, tag = 'internal scratch']
  %s0 = inlined_call_operand.vmem [shape: bf16[16,32], index: 0, kind: input, shape index: {}]
  %s1 = inlined_call_operand.vmem [shape: bf16[32,32], index: 1, kind: input, shape index: {}]
  %s2 = inlined_call_operand.vmem [shape: f32[1,32], index: 2, kind: input, shape index: {}]
  %s3 = inlined_call_operand.vmem [shape: bf16[16,32], index: 3, kind: output, shape index: {}]
  %s4 = sld [smem:[#allocation0]]
  $region22: #{rankt5_forward.42} parent=0
    _
  %s6 = ssub.s32 1, %s4
  %s7 = scalar_select 0, %s6, %s4
  // Predicated region
  $region2: #{rankt5_forward.42} parent=0 // pred_check
    _
  $region3: #{rankt5_forward.42} parent=0 // pred_check_branch
    %9 = sbr.rel (0) target = $region5
  $region4: #{rankt5_forward.42} parent=0 // pred_region
    _
  $region5: #{rankt5_forward.42} parent=0 // pred_fallthru
    _
  // Predicated region
  $region6: #{rankt5_forward.42} parent=0 // pred_check
    _
  $region7: #{rankt5_forward.42} parent=0 // pred_check_branch
    %11 = sbr.rel (0) target = $region9
  $region8: #{rankt5_forward.42} parent=0 // pred_region
    _
  $region9: #{rankt5_forward.42} parent=0 // pred_fallthru
    _
  // Predicated region
  $region10: #{rankt5_forward.42} parent=0 // pred_check
    _
  $region11: #{rankt5_forward.42} parent=0 // pred_check_branch
    %13 = sbr.rel (0) target = $region13
  $region12: #{rankt5_forward.42} parent=0 // pred_region
    _
  $region13: #{rankt5_forward.42} parent=0 // pred_fallthru
    _
  %v15 = vld [vmem:[%s0] sm:$0xf]
  %v16 = vld [vmem:[%s0 + $0x4] sm:$0xf]
  %v17 = vunpack.c.l.bf16 %v15
  %v18 = vunpack.c.l.bf16 %v16
  %v19 = vmul.f32 %v17, %v17
  %v20 = vmul.f32 %v18, %v18
  %vm21 = vcmask 261120
  %v22 = vsel %vm21, %v19, 0.0
  %23 = vadd.xlane.f32.xlu0 %v22
  %v24 = vpop.xlane.xlu0 %23
  %v25 = vsel %vm21, %v20, 0.0
  %26 = vadd.xlane.f32.xlu0 %v25
  %v27 = vpop.xlane.xlu0 %26
  %v28 = vrcp.pop 32.0
  %v29 = vmul.f32 %v24, %v28
  %v30 = vmul.f32 %v27, %v28
  %v31 = vadd.f32 %v29, 1e-06
  %v32 = vadd.f32 %v30, 1e-06
  %v33 = vrsqrt.pop %v31
  %v34 = vrsqrt.pop %v32
  %v35 = vmul.f32 %v17, %v33
  %v36 = vmul.f32 %v18, %v34
  %v37 = vld [vmem:[%s2] sm:$0x1]
  %v39 = vlaneseq
  %v40 = vshrl.u32 %v39, 7
  %v41 = vsub.s32 0, %v40
  %v42 = vrot.slane %v37, %v41
  %v44 = vmul.f32 %v35, %v42
  %v45 = vmul.f32 %v36, %v42
  %v46 = vpack.c.bf16 %v45, %v44
  %v47 = vld [vmem:[%s1] sm:$0xf]
  %v48 = vld [vmem:[%s1 + $0x4] sm:$0xf]
  %v49 = vld [vmem:[%s1 + $0x8] sm:$0xf]
  %v50 = vld [vmem:[%s1 + $0xc] sm:$0xf]
  %v55 = vunpack.c.l.b16 %v47
  %v56 = vunpack.c.l.b16 %v48
  %v57 = vunpack.c.l.b16 %v49
  %v58 = vunpack.c.l.b16 %v50
  %v59 = vpack.c.b16 %v56, %v55
  %v60 = vpack.c.b16 %v58, %v57
  %v64 = vsel %vm21, %v46, 0
  %66 = vmatprep.subr.bf16.mxu0 0
  %67 = vmatpush1.bf16.msra.mxu0 %v59
  %68 = vmatprep.subr.bf16.mxu0 0
  %69 = vmatpush1.bf16.msra.mxu0 %v60
  %70 = vmatprep.subr.bf16.mxu0 0
  %71 = vmatpush1.bf16.msra.mxu0 0
  %72 = vmatprep.subr.bf16.mxu0 0
  %73 = vmatpush1.bf16.msra.mxu0 0
  %74 = vmatprep.subr.bf16.mxu0 0
  %75 = vmatpush1.bf16.msra.mxu0 0
  %76 = vmatprep.subr.bf16.mxu0 0
  %77 = vmatpush1.bf16.msra.mxu0 0
  %78 = vmatprep.subr.bf16.mxu0 0
  %79 = vmatpush1.bf16.msra.mxu0 0
  %80 = vmatprep.subr.bf16.mxu0 0
  %81 = vmatpush1.bf16.msra.mxu0 0
  %82 = vmatprep.subr.bf16.mxu0 0
  %83 = vmatpush1.bf16.msra.mxu0 0
  %84 = vmatprep.subr.bf16.mxu0 0
  %85 = vmatpush1.bf16.msra.mxu0 0
  %86 = vmatprep.subr.bf16.mxu0 0
  %87 = vmatpush1.bf16.msra.mxu0 0
  %88 = vmatprep.subr.bf16.mxu0 0
  %89 = vmatpush1.bf16.msra.mxu0 0
  %90 = vmatprep.subr.bf16.mxu0 0
  %91 = vmatpush1.bf16.msra.mxu0 0
  %92 = vmatprep.subr.bf16.mxu0 0
  %93 = vmatpush1.bf16.msra.mxu0 0
  %94 = vmatprep.subr.bf16.mxu0 0
  %95 = vmatpush1.bf16.msra.mxu0 0
  %96 = vmatprep.subr.bf16.mxu0 0
  %97 = vmatpush1.bf16.msra.mxu0 0
  %98 = vmatprep.mubr.bf16.mxu0 0
  %99 = vmatmul.mubr.bf16.gmra.mrb[0].mxu0 %v64
  %v100 = vpop.f32.mrb[0].mxu0
  %v101 = vadd.f32 0.0, %v100
  %v102 = vpop.f32.mrb[0].mxu0
  %v103 = vpop.f32.mrb[0].mxu0
  %v104 = vadd.f32 0.0, %v103
  %v105 = vpop.f32.mrb[0].mxu0
  %106 = vdwg.mxu0
  %v107 = vpack.c.bf16 %v104, %v101
  %v109 = vunpack.c.l.b16 %v107
  %v110 = vunpack.c.h.b16 %v107
  %v111 = vpack.c.b16 %v109, %v109
  %v112 = vpack.c.b16 %v110, %v110
  %vm115 = vcmask 257024
  %116 = vst.msk [vmem:[%s3] sm:$0xf] %vm115, %v111
  %117 = vst.msk [vmem:[%s3 + $0x4] sm:$0xf] %vm115, %v112
  // Predicated region
  $region14: #{rankt5_forward.42} parent=0 // pred_check
    _
  $region15: #{rankt5_forward.42} parent=0 // pred_check_branch
    %119 = sbr.rel (0) target = $region17
  $region16: #{rankt5_forward.42} parent=0 // pred_region
    _
  $region17: #{rankt5_forward.42} parent=0 // pred_fallthru
    _
  // Predicated region
  $region18: #{rankt5_forward.42} parent=0 // pred_check
    _
  $region19: #{rankt5_forward.42} parent=0 // pred_check_branch
    %121 = sbr.rel (0) target = $region21
  $region20: #{rankt5_forward.42} parent=0 // pred_region
    _
  $region21: #{rankt5_forward.42} parent=0 // pred_fallthru
    _

// kernel: rankt5_forward.43
$region0: #{rankt5_forward.43}
  #allocation0 [shape = 'u32[]', space=smem, size = 0x4, offset = 0x4, fixed_abs, tag = 'smem constant byte address 0x4 - core index']
  #allocation1 [shape = 'u32[144,128]{1,0:T(1,128)}', space=vmem, size = 0x12000, scoped, tag = 'internal scratch']
  %s0 = inlined_call_operand.vmem [shape: bf16[16,32], index: 0, kind: input, shape index: {}]
  %s1 = inlined_call_operand.vmem [shape: bf16[32,64], index: 1, kind: input, shape index: {}]
  %s2 = inlined_call_operand.vmem [shape: f32[1,32], index: 2, kind: input, shape index: {}]
  %s3 = inlined_call_operand.vmem [shape: bf16[16,64], index: 3, kind: output, shape index: {}]
  %s4 = sld [smem:[#allocation0]]
  $region22: #{rankt5_forward.43} parent=0
    _
  %s6 = ssub.s32 1, %s4
  %s7 = scalar_select 0, %s6, %s4
  // Predicated region
  $region2: #{rankt5_forward.43} parent=0 // pred_check
    _
  $region3: #{rankt5_forward.43} parent=0 // pred_check_branch
    %9 = sbr.rel (0) target = $region5
  $region4: #{rankt5_forward.43} parent=0 // pred_region
    _
  $region5: #{rankt5_forward.43} parent=0 // pred_fallthru
    _
  // Predicated region
  $region6: #{rankt5_forward.43} parent=0 // pred_check
    _
  $region7: #{rankt5_forward.43} parent=0 // pred_check_branch
    %11 = sbr.rel (0) target = $region9
  $region8: #{rankt5_forward.43} parent=0 // pred_region
    _
  $region9: #{rankt5_forward.43} parent=0 // pred_fallthru
    _
  // Predicated region
  $region10: #{rankt5_forward.43} parent=0 // pred_check
    _
  $region11: #{rankt5_forward.43} parent=0 // pred_check_branch
    %13 = sbr.rel (0) target = $region13
  $region12: #{rankt5_forward.43} parent=0 // pred_region
    _
  $region13: #{rankt5_forward.43} parent=0 // pred_fallthru
    _
  %v15 = vld [vmem:[%s0] sm:$0xf]
  %v16 = vld [vmem:[%s0 + $0x4] sm:$0xf]
  %v17 = vunpack.c.l.bf16 %v15
  %v18 = vunpack.c.l.bf16 %v16
  %v19 = vmul.f32 %v17, %v17
  %v20 = vmul.f32 %v18, %v18
  %vm21 = vcmask 261120
  %v22 = vsel %vm21, %v19, 0.0
  %23 = vadd.xlane.f32.xlu0 %v22
  %v24 = vpop.xlane.xlu0 %23
  %v25 = vsel %vm21, %v20, 0.0
  %26 = vadd.xlane.f32.xlu0 %v25
  %v27 = vpop.xlane.xlu0 %26
  %v28 = vrcp.pop 32.0
  %v29 = vmul.f32 %v24, %v28
  %v30 = vmul.f32 %v27, %v28
  %v31 = vadd.f32 %v29, 1e-06
  %v32 = vadd.f32 %v30, 1e-06
  %v33 = vrsqrt.pop %v31
  %v34 = vrsqrt.pop %v32
  %v35 = vmul.f32 %v17, %v33
  %v36 = vmul.f32 %v18, %v34
  %v37 = vld [vmem:[%s2] sm:$0x1]
  %v39 = vlaneseq
  %v40 = vshrl.u32 %v39, 7
  %v41 = vsub.s32 0, %v40
  %v42 = vrot.slane %v37, %v41
  %v44 = vmul.f32 %v35, %v42
  %v45 = vmul.f32 %v36, %v42
  %v46 = vpack.c.bf16 %v45, %v44
  %v47 = vld [vmem:[%s1] sm:$0xf]
  %v48 = vld [vmem:[%s1 + $0x4] sm:$0xf]
  %v49 = vld [vmem:[%s1 + $0x8] sm:$0xf]
  %v50 = vld [vmem:[%s1 + $0xc] sm:$0xf]
  %v55 = vunpack.c.l.b16 %v47
  %v56 = vunpack.c.l.b16 %v48
  %v57 = vunpack.c.l.b16 %v49
  %v58 = vunpack.c.l.b16 %v50
  %v59 = vpack.c.b16 %v56, %v55
  %v60 = vpack.c.b16 %v58, %v57
  %v64 = vsel %vm21, %v46, 0
  %66 = vmatprep.subr.bf16.mxu0 0
  %67 = vmatpush1.bf16.msra.mxu0 %v59
  %68 = vmatprep.subr.bf16.mxu0 0
  %69 = vmatpush1.bf16.msra.mxu0 %v60
  %70 = vmatprep.subr.bf16.mxu0 0
  %71 = vmatpush1.bf16.msra.mxu0 0
  %72 = vmatprep.subr.bf16.mxu0 0
  %73 = vmatpush1.bf16.msra.mxu0 0
  %74 = vmatprep.subr.bf16.mxu0 0
  %75 = vmatpush1.bf16.msra.mxu0 0
  %76 = vmatprep.subr.bf16.mxu0 0
  %77 = vmatpush1.bf16.msra.mxu0 0
  %78 = vmatprep.subr.bf16.mxu0 0
  %79 = vmatpush1.bf16.msra.mxu0 0
  %80 = vmatprep.subr.bf16.mxu0 0
  %81 = vmatpush1.bf16.msra.mxu0 0
  %82 = vmatprep.subr.bf16.mxu0 0
  %83 = vmatpush1.bf16.msra.mxu0 0
  %84 = vmatprep.subr.bf16.mxu0 0
  %85 = vmatpush1.bf16.msra.mxu0 0
  %86 = vmatprep.subr.bf16.mxu0 0
  %87 = vmatpush1.bf16.msra.mxu0 0
  %88 = vmatprep.subr.bf16.mxu0 0
  %89 = vmatpush1.bf16.msra.mxu0 0
  %90 = vmatprep.subr.bf16.mxu0 0
  %91 = vmatpush1.bf16.msra.mxu0 0
  %92 = vmatprep.subr.bf16.mxu0 0
  %93 = vmatpush1.bf16.msra.mxu0 0
  %94 = vmatprep.subr.bf16.mxu0 0
  %95 = vmatpush1.bf16.msra.mxu0 0
  %96 = vmatprep.subr.bf16.mxu0 0
  %97 = vmatpush1.bf16.msra.mxu0 0
  %98 = vmatprep.mubr.bf16.mxu0 0
  %99 = vmatmul.mubr.bf16.gmra.mrb[0].mxu0 %v64
  %v100 = vpop.f32.mrb[0].mxu0
  %v101 = vadd.f32 0.0, %v100
  %v102 = vpop.f32.mrb[0].mxu0
  %v103 = vpop.f32.mrb[0].mxu0
  %v104 = vadd.f32 0.0, %v103
  %v105 = vpop.f32.mrb[0].mxu0
  %106 = vdwg.mxu0
  %v107 = vpack.c.bf16 %v104, %v101
  %v109 = vunpack.c.l.b16 %v107
  %v110 = vunpack.c.h.b16 %v107
  %v111 = vpack.c.b16 %v109, %v109
  %v112 = vpack.c.b16 %v110, %v110
  %vm115 = vcmask 519168
  %116 = vst.msk [vmem:[%s3] sm:$0xf] %vm115, %v111
  %117 = vst.msk [vmem:[%s3 + $0x4] sm:$0xf] %vm115, %v112
  // Predicated region
  $region14: #{rankt5_forward.43} parent=0 // pred_check
    _
  $region15: #{rankt5_forward.43} parent=0 // pred_check_branch
    %119 = sbr.rel (0) target = $region17
  $region16: #{rankt5_forward.43} parent=0 // pred_region
    _
  $region17: #{rankt5_forward.43} parent=0 // pred_fallthru
    _
  // Predicated region
  $region18: #{rankt5_forward.43} parent=0 // pred_check
    _
  $region19: #{rankt5_forward.43} parent=0 // pred_check_branch
    %121 = sbr.rel (0) target = $region21
  $region20: #{rankt5_forward.43} parent=0 // pred_region
    _
  $region21: #{rankt5_forward.43} parent=0 // pred_fallthru
    _

// kernel: rankt5_forward.44
$region0: #{rankt5_forward.44}
  #allocation0 [shape = 'u32[]', space=smem, size = 0x4, offset = 0x4, fixed_abs, tag = 'smem constant byte address 0x4 - core index']
  #allocation1 [shape = 'u32[144,128]{1,0:T(1,128)}', space=vmem, size = 0x12000, scoped, tag = 'internal scratch']
  %s0 = inlined_call_operand.vmem [shape: bf16[2,8,32], index: 0, kind: input, shape index: {}]
  %s1 = inlined_call_operand.vmem [shape: bf16[2,8,64], index: 1, kind: input, shape index: {}]
  %s2 = inlined_call_operand.vmem [shape: bf16[2,8,32], index: 2, kind: output, shape index: {}]
  %s3 = sld [smem:[#allocation0]]
  $region41: #{rankt5_forward.44} parent=0
    _
  %s5 = ssub.s32 1, %s3
  %s6 = scalar_select 0, %s5, %s3
  loop: start=0, step=1, limit=4
  $region2: #{rankt5_forward.44} parent=0 // loop_pre_header
    _
  $region3: #{rankt5_forward.44} parent=0 // loop_header
    %s8 = sphi 0, %s12
    %p9 = scmp.ge.s32.totalorder %s8, 4
    %s15 = sphi 0, %s27
    %s16 = sphi 0, %s23
    %s17 = sphi 0, %s15
    %s18 = sphi 0, %s16
    %s19 = sphi 0, %s17
    %s20 = sphi 0, %s18
    %s32 = sphi 0, %s34
    %s35 = sphi 0, %s32
    %s36 = sphi 0, %s35
    %s52 = sphi 0, %s36
    %s60 = sphi 0, %s62
    %s63 = sphi 0, %s60
    %s64 = sphi 0, %s63
    %s80 = sphi 0, %s64
    %s88 = sphi 0, %s90
    %s91 = sphi 0, %s88
    %s92 = sphi 0, %s91
    %s108 = sphi 0, %s92
  $region4: #{rankt5_forward.44} parent=0 // loop_header_branch
    %11 = sbr.rel (%p9) target = $region8
  $region5: #{rankt5_forward.44} parent=0 // loop_body
    %s13 = ssub.s32 %s8, 1
    %s14 = ssub.s32 %s8, 2
    %s21 = sadd.s32 1, %s16
    %p22 = scmp.ge.s32.totalorder %s21, 1
    %s23 = scalar_select %p22, 0, %s21
    %s24 = sadd.s32 1, %s15
    %s25 = scalar_select %p22, %s24, %s15
    %p26 = scmp.ge.s32.totalorder %s25, 2
    %s27 = scalar_select %p26, 0, %s25
    %s28 = ssub.s32 %s15, %s27
    %s29 = ssub.s32 %s16, %s23
    %s30 = sor.u32 %s28, %s29
    %p31 = scmp.eq.s32.totalorder %s30, 0
    %s33 = sadd.s32 %s32, 1
    %s34 = scalar_select %p31, %s32, %s33
    %p37 = pneg %p31
    %p38 = scmp.eq.s32.totalorder %s8, 1
    %p39 = por %p37, %p38
    %p40 = scmp.ne.s32.totalorder %s32, %s35
    %p41 = scmp.eq.s32.totalorder %s8, 0
    %p42 = por %p40, %p41
    %p43 = scmp.ne.s32.totalorder %s32, %s35
    %p44 = scmp.eq.s32.totalorder %s13, 1
    %p45 = por %p43, %p44
    %p46 = scmp.ne.s32.totalorder %s35, %s36
    %p47 = scmp.eq.s32.totalorder %s13, 0
    %p48 = por %p46, %p47
    %p49 = scmp.ne.s32.totalorder %s35, %s36
    %p50 = scmp.eq.s32.totalorder %s14, 1
    %p51 = por %p49, %p50
    %p53 = scmp.ne.s32.totalorder %s36, %s52
    %p54 = scmp.eq.s32.totalorder %s14, 0
    %p55 = por %p53, %p54
    %s56 = ssub.s32 %s15, %s27
    %s57 = ssub.s32 %s16, %s23
    %s58 = sor.u32 %s56, %s57
    %p59 = scmp.eq.s32.totalorder %s58, 0
    %s61 = sadd.s32 %s60, 1
    %s62 = scalar_select %p59, %s60, %s61
    %p65 = pneg %p59
    %p66 = scmp.eq.s32.totalorder %s8, 1
    %p67 = por %p65, %p66
    %p68 = scmp.ne.s32.totalorder %s60, %s63
    %p69 = scmp.eq.s32.totalorder %s8, 0
    %p70 = por %p68, %p69
    %p71 = scmp.ne.s32.totalorder %s60, %s63
    %p72 = scmp.eq.s32.totalorder %s13, 1
    %p73 = por %p71, %p72
    %p74 = scmp.ne.s32.totalorder %s63, %s64
    %p75 = scmp.eq.s32.totalorder %s13, 0
    %p76 = por %p74, %p75
    %p77 = scmp.ne.s32.totalorder %s63, %s64
    %p78 = scmp.eq.s32.totalorder %s14, 1
    %p79 = por %p77, %p78
    %p81 = scmp.ne.s32.totalorder %s64, %s80
    %p82 = scmp.eq.s32.totalorder %s14, 0
    %p83 = por %p81, %p82
    %s84 = ssub.s32 %s15, %s27
    %s85 = ssub.s32 %s16, %s23
    %s86 = sor.u32 %s84, %s85
    %p87 = scmp.eq.s32.totalorder %s86, 0
    %s89 = sadd.s32 %s88, 1
    %s90 = scalar_select %p87, %s88, %s89
    %p93 = pneg %p87
    %p94 = scmp.eq.s32.totalorder %s8, 1
    %p95 = por %p93, %p94
    %p96 = scmp.ne.s32.totalorder %s88, %s91
    %p97 = scmp.eq.s32.totalorder %s8, 0
    %p98 = por %p96, %p97
    %p99 = scmp.ne.s32.totalorder %s88, %s91
    %p100 = scmp.eq.s32.totalorder %s13, 1
    %p101 = por %p99, %p100
    %p102 = scmp.ne.s32.totalorder %s91, %s92
    %p103 = scmp.eq.s32.totalorder %s13, 0
    %p104 = por %p102, %p103
    %p105 = scmp.ne.s32.totalorder %s91, %s92
    %p106 = scmp.eq.s32.totalorder %s14, 1
    %p107 = por %p105, %p106
    %p109 = scmp.ne.s32.totalorder %s92, %s108
    %p110 = scmp.eq.s32.totalorder %s14, 0
    %p111 = por %p109, %p110
    %p112 = scmp.le.s32.totalorder 1, %s8
    %p113 = scmp.lt.s32.totalorder %s8, 3
    %p114 = pnand %p112, %p113
    %p115 = pneg %p114
    // Predicated region
    $region9: #{rankt5_forward.44} parent=5 // pred_check
      _
    $region10: #{rankt5_forward.44} parent=5 // pred_check_branch
      %117 = sbr.rel (%p114) target = $region12
    $region11: #{rankt5_forward.44} parent=5 // pred_region
      %s118 = ssub.s32 %s8, 1
    $region12: #{rankt5_forward.44} parent=5 // pred_fallthru
      _
    %p119 = scmp.lt.s32.totalorder %s8, 2
    // Predicated region
    $region13: #{rankt5_forward.44} parent=5 // pred_check
      %p120 = pneg %p119
    $region14: #{rankt5_forward.44} parent=5 // pred_check_branch
      %122 = sbr.rel (%p120) target = $region16
    $region15: #{rankt5_forward.44} parent=5 // pred_region
      // Predicated region
      $region17: #{rankt5_forward.44} parent=15 // pred_check
        %p123 = pneg %p42
      $region18: #{rankt5_forward.44} parent=15 // pred_check_branch
        %125 = sbr.rel (%p123) target = $region20
      $region19: #{rankt5_forward.44} parent=15 // pred_region
        %p126 = scmp.lt.s32.totalorder %s15, 1
        %s127 = scalar_select %p126, %s15, 1
        %p128 = scmp.lt.s32.totalorder %s16, 0
        %s129 = scalar_select %p128, %s16, 0
        %s130 = sadd.s32 %s129, %s127
        %s131 = smul.addr %s130, 4
        %s132 = scalar_lea.vmem %s0, %s131
      $region20: #{rankt5_forward.44} parent=15 // pred_fallthru
        _
      // Predicated region
      $region21: #{rankt5_forward.44} parent=15 // pred_check
        %p133 = pneg %p70
      $region22: #{rankt5_forward.44} parent=15 // pred_check_branch
        %135 = sbr.rel (%p133) target = $region24
      $region23: #{rankt5_forward.44} parent=15 // pred_region
        %p136 = scmp.lt.s32.totalorder %s15, 1
        %s137 = scalar_select %p136, %s15, 1
        %p138 = scmp.lt.s32.totalorder %s16, 0
        %s139 = scalar_select %p138, %s16, 0
        %s140 = sadd.s32 %s139, %s137
        %s141 = smul.addr %s140, 4
        %s142 = scalar_lea.vmem %s1, %s141
      $region24: #{rankt5_forward.44} parent=15 // pred_fallthru
        _
    $region16: #{rankt5_forward.44} parent=5 // pred_fallthru
      _
    %p143 = scmp.le.s32.totalorder 1, %s8
    %p144 = scmp.lt.s32.totalorder %s8, 3
    %p145 = pnand %p143, %p144
    %p146 = pneg %p145
    // Predicated region
    $region25: #{rankt5_forward.44} parent=5 // pred_check
      _
    $region26: #{rankt5_forward.44} parent=5 // pred_check_branch
      %148 = sbr.rel (%p145) target = $region28
    $region27: #{rankt5_forward.44} parent=5 // pred_region
      %s149 = ssub.s32 %s8, 1
      %p150 = scmp.lt.s32.totalorder %s17, 1
      %s151 = scalar_select %p150, %s17, 1
      %p152 = scmp.lt.s32.totalorder %s18, 0
      %s153 = scalar_select %p152, %s18, 0
      %s154 = sadd.s32 %s153, %s151
      %s155 = smul.addr %s154, 4
      %s156 = scalar_lea.vmem %s0, %s155
      %p157 = pneg %p48
      %p158 = pneg %p45
      %p159 = scmp.lt.s32.totalorder %s17, 1
      %s160 = scalar_select %p159, %s17, 1
      %p161 = scmp.lt.s32.totalorder %s18, 0
      %s162 = scalar_select %p161, %s18, 0
      %s163 = sadd.s32 %s162, %s160
      %s164 = smul.addr %s163, 4
      %s165 = scalar_lea.vmem %s1, %s164
      %p166 = pneg %p76
      %p167 = pneg %p73
      %p168 = pneg %p104
      %p169 = pneg %p101
      %p170 = scmp.lt.s32.totalorder %s17, 1
      %s171 = scalar_select %p170, %s17, 1
      %p172 = scmp.lt.s32.totalorder %s18, 0
      %s173 = scalar_select %p172, %s18, 0
      %s174 = sadd.s32 %s173, %s171
      %s175 = smul.addr %s174, 4
      %s176 = scalar_lea.vmem %s2, %s175
      %p177 = scmp.lt.s32.totalorder %s17, 1
      %s178 = scalar_select %p177, %s17, 1
      %p179 = scmp.lt.s32.totalorder %s18, 0
      %s180 = scalar_select %p179, %s18, 0
      %s181 = sadd.s32 %s180, %s178
      %s182 = smul.addr %s181, 4
      %s183 = scalar_lea.vmem %s0, %s182
      %p184 = scmp.lt.s32.totalorder %s17, 1
      %s185 = scalar_select %p184, %s17, 1
      %p186 = scmp.lt.s32.totalorder %s18, 0
      %s187 = scalar_select %p186, %s18, 0
      %s188 = sadd.s32 %s187, %s185
      %s189 = smul.addr %s188, 4
      %s190 = scalar_lea.vmem %s1, %s189
      %p191 = scmp.lt.s32.totalorder %s17, 1
      %s192 = scalar_select %p191, %s17, 1
      %p193 = scmp.lt.s32.totalorder %s18, 0
      %s194 = scalar_select %p193, %s18, 0
      %s195 = sadd.s32 %s194, %s192
      %s196 = smul.addr %s195, 4
      %s197 = scalar_lea.vmem %s2, %s196
      %v199 = vld [vmem:[%s183] sm:$0xf]
      %v200 = vld [vmem:[%s190] sm:$0xf]
      %vm201 = vcmask 64512
      %v203 = vsel %vm201, %v199, 0
      %v206 = vsel %vm201, %v200, 0
      %208 = vmatprep.subr.bf16.mxu0 0
      %209 = vmatpush1.bf16.xpose.msra.mxu0 %v206
      %210 = vmatprep.subr.bf16.mxu0 0
      %211 = vmatpush1.bf16.xpose.msra.mxu0 0
      %212 = vmatprep.subr.bf16.mxu0 0
      %213 = vmatpush1.bf16.xpose.msra.mxu0 0
      %214 = vmatprep.subr.bf16.mxu0 0
      %215 = vmatpush1.bf16.xpose.msra.mxu0 0
      %216 = vmatprep.subr.bf16.mxu0 0
      %217 = vmatpush1.bf16.xpose.msra.mxu0 0
      %218 = vmatprep.subr.bf16.mxu0 0
      %219 = vmatpush1.bf16.xpose.msra.mxu0 0
      %220 = vmatprep.subr.bf16.mxu0 0
      %221 = vmatpush1.bf16.xpose.msra.mxu0 0
      %222 = vmatprep.subr.bf16.mxu0 0
      %223 = vmatpush1.bf16.xpose.msra.mxu0 0
      %224 = vmatprep.subr.bf16.mxu0 0
      %225 = vmatpush1.bf16.xpose.msra.mxu0 0
      %226 = vmatprep.subr.bf16.mxu0 0
      %227 = vmatpush1.bf16.xpose.msra.mxu0 0
      %228 = vmatprep.subr.bf16.mxu0 0
      %229 = vmatpush1.bf16.xpose.msra.mxu0 0
      %230 = vmatprep.subr.bf16.mxu0 0
      %231 = vmatpush1.bf16.xpose.msra.mxu0 0
      %232 = vmatprep.subr.bf16.mxu0 0
      %233 = vmatpush1.bf16.xpose.msra.mxu0 0
      %234 = vmatprep.subr.bf16.mxu0 0
      %235 = vmatpush1.bf16.xpose.msra.mxu0 0
      %236 = vmatprep.subr.bf16.mxu0 0
      %237 = vmatpush1.bf16.xpose.msra.mxu0 0
      %238 = vmatprep.subr.bf16.mxu0 0
      %239 = vmatpush1.bf16.xpose.msra.mxu0 0
      %240 = vmatprep.mubr.bf16.mxu0 0
      %241 = vmatmul.mubr.bf16.gmra.mrb[0].mxu0 %v203
      %v242 = vpop.f32.mrb[0].mxu0
      %v243 = vadd.f32 0.0, %v242
      %v244 = vpop.f32.mrb[0].mxu0
      %v245 = vpop.f32.mrb[0].mxu0
      %v246 = vpop.f32.mrb[0].mxu0
      %247 = vdwg.mxu0
      %v248 = vsel %vm201, %v243, -inf
      %249 = vmax.xlane.f32.xlu0 %v248
      %v250 = vpop.xlane.xlu0 %249
      %v251 = vsub.f32 %v243, %v250
      %v252 = vmul.f32 %v251, 1.442695
      %v253 = vpow.pop %v252
      %v254 = vsel %vm201, %v253, 0.0
      %255 = vadd.xlane.f32.xlu0 %v254
      %v256 = vpop.xlane.xlu0 %255
      %v257 = vrcp.pop %v256
      %v258 = vmul.f32 %v253, %v257
      %v259 = vpack.c.bf16 %v258, %v258
      %v261 = vunpack.c.l.b16 %v200
      %v262 = vpack.c.b16 %v261, %v261
      %263 = vrot.lane.b32.xlu0 %v262, 96
      %v264 = vpop.permute.xlu0 %263
      %v266 = vsel %vm201, %v259, 0
      %vm268 = vcmask 1043456
      %v270 = vsel %vm268, %v264, 0
      %272 = vmatprep.subr.bf16.mxu0 0
      %273 = vmatpush1.bf16.msra.mxu0 %v270
      %274 = vmatprep.subr.bf16.mxu0 0
      %275 = vmatpush1.bf16.msra.mxu0 0
      %276 = vmatprep.subr.bf16.mxu0 0
      %277 = vmatpush1.bf16.msra.mxu0 0
      %278 = vmatprep.subr.bf16.mxu0 0
      %279 = vmatpush1.bf16.msra.mxu0 0
      %280 = vmatprep.subr.bf16.mxu0 0
      %281 = vmatpush1.bf16.msra.mxu0 0
      %282 = vmatprep.subr.bf16.mxu0 0
      %283 = vmatpush1.bf16.msra.mxu0 0
      %284 = vmatprep.subr.bf16.mxu0 0
      %285 = vmatpush1.bf16.msra.mxu0 0
      %286 = vmatprep.subr.bf16.mxu0 0
      %287 = vmatpush1.bf16.msra.mxu0 0
      %288 = vmatprep.subr.bf16.mxu0 0
      %289 = vmatpush1.bf16.msra.mxu0 0
      %290 = vmatprep.subr.bf16.mxu0 0
      %291 = vmatpush1.bf16.msra.mxu0 0
      %292 = vmatprep.subr.bf16.mxu0 0
      %293 = vmatpush1.bf16.msra.mxu0 0
      %294 = vmatprep.subr.bf16.mxu0 0
      %295 = vmatpush1.bf16.msra.mxu0 0
      %296 = vmatprep.subr.bf16.mxu0 0
      %297 = vmatpush1.bf16.msra.mxu0 0
      %298 = vmatprep.subr.bf16.mxu0 0
      %299 = vmatpush1.bf16.msra.mxu0 0
      %300 = vmatprep.subr.bf16.mxu0 0
      %301 = vmatpush1.bf16.msra.mxu0 0
      %302 = vmatprep.subr.bf16.mxu0 0
      %303 = vmatpush1.bf16.msra.mxu0 0
      %304 = vmatprep.mubr.bf16.mxu0 0
      %305 = vmatmul.mubr.bf16.gmra.mrb[0].mxu0 %v266
      %v306 = vpop.f32.mrb[0].mxu0
      %v307 = vadd.f32 0.0, %v306
      %v308 = vpop.f32.mrb[0].mxu0
      %v309 = vpop.f32.mrb[0].mxu0
      %v310 = vpop.f32.mrb[0].mxu0
      %311 = vdwg.mxu0
      %v313 = vunpack.c.l.b16 %v199
      %v314 = vpack.c.b16 %v313, %v313
      %315 = vrot.lane.b32.xlu0 %v314, 120
      %v316 = vpop.permute.xlu0 %315
      %317 = vrot.lane.b32.xlu0 %v262, 120
      %v318 = vpop.permute.xlu0 %317
      %v320 = vsel %vm201, %v316, 0
      %v323 = vsel %vm201, %v318, 0
      %325 = vmatprep.subr.bf16.mxu0 0
      %326 = vmatpush1.bf16.xpose.msra.mxu0 %v323
      %327 = vmatprep.subr.bf16.mxu0 0
      %328 = vmatpush1.bf16.xpose.msra.mxu0 0
      %329 = vmatprep.subr.bf16.mxu0 0
      %330 = vmatpush1.bf16.xpose.msra.mxu0 0
      %331 = vmatprep.subr.bf16.mxu0 0
      %332 = vmatpush1.bf16.xpose.msra.mxu0 0
      %333 = vmatprep.subr.bf16.mxu0 0
      %334 = vmatpush1.bf16.xpose.msra.mxu0 0
      %335 = vmatprep.subr.bf16.mxu0 0
      %336 = vmatpush1.bf16.xpose.msra.mxu0 0
      %337 = vmatprep.subr.bf16.mxu0 0
      %338 = vmatpush1.bf16.xpose.msra.mxu0 0
      %339 = vmatprep.subr.bf16.mxu0 0
      %340 = vmatpush1.bf16.xpose.msra.mxu0 0
      %341 = vmatprep.subr.bf16.mxu0 0
      %342 = vmatpush1.bf16.xpose.msra.mxu0 0
      %343 = vmatprep.subr.bf16.mxu0 0
      %344 = vmatpush1.bf16.xpose.msra.mxu0 0
      %345 = vmatprep.subr.bf16.mxu0 0
      %346 = vmatpush1.bf16.xpose.msra.mxu0 0
      %347 = vmatprep.subr.bf16.mxu0 0
      %348 = vmatpush1.bf16.xpose.msra.mxu0 0
      %349 = vmatprep.subr.bf16.mxu0 0
      %350 = vmatpush1.bf16.xpose.msra.mxu0 0
      %351 = vmatprep.subr.bf16.mxu0 0
      %352 = vmatpush1.bf16.xpose.msra.mxu0 0
      %353 = vmatprep.subr.bf16.mxu0 0
      %354 = vmatpush1.bf16.xpose.msra.mxu0 0
      %355 = vmatprep.subr.bf16.mxu0 0
      %356 = vmatpush1.bf16.xpose.msra.mxu0 0
      %357 = vmatprep.mubr.bf16.mxu0 0
      %358 = vmatmul.mubr.bf16.gmra.mrb[0].mxu0 %v320
      %v359 = vpop.f32.mrb[0].mxu0
      %v360 = vadd.f32 0.0, %v359
      %v361 = vpop.f32.mrb[0].mxu0
      %v362 = vpop.f32.mrb[0].mxu0
      %v363 = vpop.f32.mrb[0].mxu0
      %364 = vdwg.mxu0
      %v365 = vsel %vm201, %v360, -inf
      %366 = vmax.xlane.f32.xlu0 %v365
      %v367 = vpop.xlane.xlu0 %366
      %v368 = vsub.f32 %v360, %v367
      %v369 = vmul.f32 %v368, 1.442695
      %v370 = vpow.pop %v369
      %v371 = vsel %vm201, %v370, 0.0
      %372 = vadd.xlane.f32.xlu0 %v371
      %v373 = vpop.xlane.xlu0 %372
      %v374 = vrcp.pop %v373
      %v375 = vmul.f32 %v370, %v374
      %v376 = vpack.c.bf16 %v375, %v375
      %377 = vrot.lane.b32.xlu0 %v262, 88
      %v378 = vpop.permute.xlu0 %377
      %v380 = vsel %vm201, %v376, 0
      %v383 = vsel %vm268, %v378, 0
      %385 = vmatprep.subr.bf16.mxu0 0
      %386 = vmatpush1.bf16.msra.mxu0 %v383
      %387 = vmatprep.subr.bf16.mxu0 0
      %388 = vmatpush1.bf16.msra.mxu0 0
      %389 = vmatprep.subr.bf16.mxu0 0
      %390 = vmatpush1.bf16.msra.mxu0 0
      %391 = vmatprep.subr.bf16.mxu0 0
      %392 = vmatpush1.bf16.msra.mxu0 0
      %393 = vmatprep.subr.bf16.mxu0 0
      %394 = vmatpush1.bf16.msra.mxu0 0
      %395 = vmatprep.subr.bf16.mxu0 0
      %396 = vmatpush1.bf16.msra.mxu0 0
      %397 = vmatprep.subr.bf16.mxu0 0
      %398 = vmatpush1.bf16.msra.mxu0 0
      %399 = vmatprep.subr.bf16.mxu0 0
      %400 = vmatpush1.bf16.msra.mxu0 0
      %401 = vmatprep.subr.bf16.mxu0 0
      %402 = vmatpush1.bf16.msra.mxu0 0
      %403 = vmatprep.subr.bf16.mxu0 0
      %404 = vmatpush1.bf16.msra.mxu0 0
      %405 = vmatprep.subr.bf16.mxu0 0
      %406 = vmatpush1.bf16.msra.mxu0 0
      %407 = vmatprep.subr.bf16.mxu0 0
      %408 = vmatpush1.bf16.msra.mxu0 0
      %409 = vmatprep.subr.bf16.mxu0 0
      %410 = vmatpush1.bf16.msra.mxu0 0
      %411 = vmatprep.subr.bf16.mxu0 0
      %412 = vmatpush1.bf16.msra.mxu0 0
      %413 = vmatprep.subr.bf16.mxu0 0
      %414 = vmatpush1.bf16.msra.mxu0 0
      %415 = vmatprep.subr.bf16.mxu0 0
      %416 = vmatpush1.bf16.msra.mxu0 0
      %417 = vmatprep.mubr.bf16.mxu0 0
      %418 = vmatmul.mubr.bf16.gmra.mrb[0].mxu0 %v380
      %v419 = vpop.f32.mrb[0].mxu0
      %v420 = vadd.f32 0.0, %v419
      %v421 = vpop.f32.mrb[0].mxu0
      %v422 = vpop.f32.mrb[0].mxu0
      %v423 = vpop.f32.mrb[0].mxu0
      %424 = vdwg.mxu0
      %425 = vrot.lane.b32.xlu0 %v314, 112
      %v426 = vpop.permute.xlu0 %425
      %427 = vrot.lane.b32.xlu0 %v262, 112
      %v428 = vpop.permute.xlu0 %427
      %v430 = vsel %vm201, %v426, 0
      %v433 = vsel %vm201, %v428, 0
      %435 = vmatprep.subr.bf16.mxu0 0
      %436 = vmatpush1.bf16.xpose.msra.mxu0 %v433
      %437 = vmatprep.subr.bf16.mxu0 0
      %438 = vmatpush1.bf16.xpose.msra.mxu0 0
      %439 = vmatprep.subr.bf16.mxu0 0
      %440 = vmatpush1.bf16.xpose.msra.mxu0 0
      %441 = vmatprep.subr.bf16.mxu0 0
      %442 = vmatpush1.bf16.xpose.msra.mxu0 0
      %443 = vmatprep.subr.bf16.mxu0 0
      %444 = vmatpush1.bf16.xpose.msra.mxu0 0
      %445 = vmatprep.subr.bf16.mxu0 0
      %446 = vmatpush1.bf16.xpose.msra.mxu0 0
      %447 = vmatprep.subr.bf16.mxu0 0
      %448 = vmatpush1.bf16.xpose.msra.mxu0 0
      %449 = vmatprep.subr.bf16.mxu0 0
      %450 = vmatpush1.bf16.xpose.msra.mxu0 0
      %451 = vmatprep.subr.bf16.mxu0 0
      %452 = vmatpush1.bf16.xpose.msra.mxu0 0
      %453 = vmatprep.subr.bf16.mxu0 0
      %454 = vmatpush1.bf16.xpose.msra.mxu0 0
      %455 = vmatprep.subr.bf16.mxu0 0
      %456 = vmatpush1.bf16.xpose.msra.mxu0 0
      %457 = vmatprep.subr.bf16.mxu0 0
      %458 = vmatpush1.bf16.xpose.msra.mxu0 0
      %459 = vmatprep.subr.bf16.mxu0 0
      %460 = vmatpush1.bf16.xpose.msra.mxu0 0
      %461 = vmatprep.subr.bf16.mxu0 0
      %462 = vmatpush1.bf16.xpose.msra.mxu0 0
      %463 = vmatprep.subr.bf16.mxu0 0
      %464 = vmatpush1.bf16.xpose.msra.mxu0 0
      %465 = vmatprep.subr.bf16.mxu0 0
      %466 = vmatpush1.bf16.xpose.msra.mxu0 0
      %467 = vmatprep.mubr.bf16.mxu0 0
      %468 = vmatmul.mubr.bf16.gmra.mrb[0].mxu0 %v430
      %v469 = vpop.f32.mrb[0].mxu0
      %v470 = vadd.f32 0.0, %v469
      %v471 = vpop.f32.mrb[0].mxu0
      %v472 = vpop.f32.mrb[0].mxu0
      %v473 = vpop.f32.mrb[0].mxu0
      %474 = vdwg.mxu0
      %v475 = vsel %vm201, %v470, -inf
      %476 = vmax.xlane.f32.xlu0 %v475
      %v477 = vpop.xlane.xlu0 %476
      %v478 = vsub.f32 %v470, %v477
      %v479 = vmul.f32 %v478, 1.442695
      %v480 = vpow.pop %v479
      %v481 = vsel %vm201, %v480, 0.0
      %482 = vadd.xlane.f32.xlu0 %v481
      %v483 = vpop.xlane.xlu0 %482
      %v484 = vrcp.pop %v483
      %v485 = vmul.f32 %v480, %v484
      %v486 = vpack.c.bf16 %v485, %v485
      %487 = vrot.lane.b32.xlu0 %v262, 80
      %v488 = vpop.permute.xlu0 %487
      %v490 = vsel %vm201, %v486, 0
      %v493 = vsel %vm268, %v488, 0
      %495 = vmatprep.subr.bf16.mxu0 0
      %496 = vmatpush1.bf16.msra.mxu0 %v493
      %497 = vmatprep.subr.bf16.mxu0 0
      %498 = vmatpush1.bf16.msra.mxu0 0
      %499 = vmatprep.subr.bf16.mxu0 0
      %500 = vmatpush1.bf16.msra.mxu0 0
      %501 = vmatprep.subr.bf16.mxu0 0
      %502 = vmatpush1.bf16.msra.mxu0 0
      %503 = vmatprep.subr.bf16.mxu0 0
      %504 = vmatpush1.bf16.msra.mxu0 0
      %505 = vmatprep.subr.bf16.mxu0 0
      %506 = vmatpush1.bf16.msra.mxu0 0
      %507 = vmatprep.subr.bf16.mxu0 0
      %508 = vmatpush1.bf16.msra.mxu0 0
      %509 = vmatprep.subr.bf16.mxu0 0
      %510 = vmatpush1.bf16.msra.mxu0 0
      %511 = vmatprep.subr.bf16.mxu0 0
      %512 = vmatpush1.bf16.msra.mxu0 0
      %513 = vmatprep.subr.bf16.mxu0 0
      %514 = vmatpush1.bf16.msra.mxu0 0
      %515 = vmatprep.subr.bf16.mxu0 0
      %516 = vmatpush1.bf16.msra.mxu0 0
      %517 = vmatprep.subr.bf16.mxu0 0
      %518 = vmatpush1.bf16.msra.mxu0 0
      %519 = vmatprep.subr.bf16.mxu0 0
      %520 = vmatpush1.bf16.msra.mxu0 0
      %521 = vmatprep.subr.bf16.mxu0 0
      %522 = vmatpush1.bf16.msra.mxu0 0
      %523 = vmatprep.subr.bf16.mxu0 0
      %524 = vmatpush1.bf16.msra.mxu0 0
      %525 = vmatprep.subr.bf16.mxu0 0
      %526 = vmatpush1.bf16.msra.mxu0 0
      %527 = vmatprep.mubr.bf16.mxu0 0
      %528 = vmatmul.mubr.bf16.gmra.mrb[0].mxu0 %v490
      %v529 = vpop.f32.mrb[0].mxu0
      %v530 = vadd.f32 0.0, %v529
      %v531 = vpop.f32.mrb[0].mxu0
      %v532 = vpop.f32.mrb[0].mxu0
      %v533 = vpop.f32.mrb[0].mxu0
      %534 = vdwg.mxu0
      %535 = vrot.lane.b32.xlu0 %v314, 104
      %v536 = vpop.permute.xlu0 %535
      %537 = vrot.lane.b32.xlu0 %v262, 104
      %v538 = vpop.permute.xlu0 %537
      %v540 = vsel %vm201, %v536, 0
      %v543 = vsel %vm201, %v538, 0
      %545 = vmatprep.subr.bf16.mxu0 0
      %546 = vmatpush1.bf16.xpose.msra.mxu0 %v543
      %547 = vmatprep.subr.bf16.mxu0 0
      %548 = vmatpush1.bf16.xpose.msra.mxu0 0
      %549 = vmatprep.subr.bf16.mxu0 0
      %550 = vmatpush1.bf16.xpose.msra.mxu0 0
      %551 = vmatprep.subr.bf16.mxu0 0
      %552 = vmatpush1.bf16.xpose.msra.mxu0 0
      %553 = vmatprep.subr.bf16.mxu0 0
      %554 = vmatpush1.bf16.xpose.msra.mxu0 0
      %555 = vmatprep.subr.bf16.mxu0 0
      %556 = vmatpush1.bf16.xpose.msra.mxu0 0
      %557 = vmatprep.subr.bf16.mxu0 0
      %558 = vmatpush1.bf16.xpose.msra.mxu0 0
      %559 = vmatprep.subr.bf16.mxu0 0
      %560 = vmatpush1.bf16.xpose.msra.mxu0 0
      %561 = vmatprep.subr.bf16.mxu0 0
      %562 = vmatpush1.bf16.xpose.msra.mxu0 0
      %563 = vmatprep.subr.bf16.mxu0 0
      %564 = vmatpush1.bf16.xpose.msra.mxu0 0
      %565 = vmatprep.subr.bf16.mxu0 0
      %566 = vmatpush1.bf16.xpose.msra.mxu0 0
      %567 = vmatprep.subr.bf16.mxu0 0
      %568 = vmatpush1.bf16.xpose.msra.mxu0 0
      %569 = vmatprep.subr.bf16.mxu0 0
      %570 = vmatpush1.bf16.xpose.msra.mxu0 0
      %571 = vmatprep.subr.bf16.mxu0 0
      %572 = vmatpush1.bf16.xpose.msra.mxu0 0
      %573 = vmatprep.subr.bf16.mxu0 0
      %574 = vmatpush1.bf16.xpose.msra.mxu0 0
      %575 = vmatprep.subr.bf16.mxu0 0
      %576 = vmatpush1.bf16.xpose.msra.mxu0 0
      %577 = vmatprep.mubr.bf16.mxu0 0
      %578 = vmatmul.mubr.bf16.gmra.mrb[0].mxu0 %v540
      %v579 = vpop.f32.mrb[0].mxu0
      %v580 = vadd.f32 0.0, %v579
      %v581 = vpop.f32.mrb[0].mxu0
      %v582 = vpop.f32.mrb[0].mxu0
      %v583 = vpop.f32.mrb[0].mxu0
      %584 = vdwg.mxu0
      %v585 = vsel %vm201, %v580, -inf
      %586 = vmax.xlane.f32.xlu0 %v585
      %v587 = vpop.xlane.xlu0 %586
      %v588 = vsub.f32 %v580, %v587
      %v589 = vmul.f32 %v588, 1.442695
      %v590 = vpow.pop %v589
      %v591 = vsel %vm201, %v590, 0.0
      %592 = vadd.xlane.f32.xlu0 %v591
      %v593 = vpop.xlane.xlu0 %592
      %v594 = vrcp.pop %v593
      %v595 = vmul.f32 %v590, %v594
      %v596 = vpack.c.bf16 %v595, %v595
      %597 = vrot.lane.b32.xlu0 %v262, 72
      %v598 = vpop.permute.xlu0 %597
      %v600 = vsel %vm201, %v596, 0
      %v603 = vsel %vm268, %v598, 0
      %605 = vmatprep.subr.bf16.mxu0 0
      %606 = vmatpush1.bf16.msra.mxu0 %v603
      %607 = vmatprep.subr.bf16.mxu0 0
      %608 = vmatpush1.bf16.msra.mxu0 0
      %609 = vmatprep.subr.bf16.mxu0 0
      %610 = vmatpush1.bf16.msra.mxu0 0
      %611 = vmatprep.subr.bf16.mxu0 0
      %612 = vmatpush1.bf16.msra.mxu0 0
      %613 = vmatprep.subr.bf16.mxu0 0
      %614 = vmatpush1.bf16.msra.mxu0 0
      %615 = vmatprep.subr.bf16.mxu0 0
      %616 = vmatpush1.bf16.msra.mxu0 0
      %617 = vmatprep.subr.bf16.mxu0 0
      %618 = vmatpush1.bf16.msra.mxu0 0
      %619 = vmatprep.subr.bf16.mxu0 0
      %620 = vmatpush1.bf16.msra.mxu0 0
      %621 = vmatprep.subr.bf16.mxu0 0
      %622 = vmatpush1.bf16.msra.mxu0 0
      %623 = vmatprep.subr.bf16.mxu0 0
      %624 = vmatpush1.bf16.msra.mxu0 0
      %625 = vmatprep.subr.bf16.mxu0 0
      %626 = vmatpush1.bf16.msra.mxu0 0
      %627 = vmatprep.subr.bf16.mxu0 0
      %628 = vmatpush1.bf16.msra.mxu0 0
      %629 = vmatprep.subr.bf16.mxu0 0
      %630 = vmatpush1.bf16.msra.mxu0 0
      %631 = vmatprep.subr.bf16.mxu0 0
      %632 = vmatpush1.bf16.msra.mxu0 0
      %633 = vmatprep.subr.bf16.mxu0 0
      %634 = vmatpush1.bf16.msra.mxu0 0
      %635 = vmatprep.subr.bf16.mxu0 0
      %636 = vmatpush1.bf16.msra.mxu0 0
      %637 = vmatprep.mubr.bf16.mxu0 0
      %638 = vmatmul.mubr.bf16.gmra.mrb[0].mxu0 %v600
      %v639 = vpop.f32.mrb[0].mxu0
      %v640 = vadd.f32 0.0, %v639
      %v641 = vpop.f32.mrb[0].mxu0
      %v642 = vpop.f32.mrb[0].mxu0
      %v643 = vpop.f32.mrb[0].mxu0
      %644 = vdwg.mxu0
      %646 = vrot.lane.b32.xlu0 %v420, 8
      %v647 = vpop.permute.xlu0 %646
      %650 = vrot.lane.b32.xlu0 %v530, 16
      %v651 = vpop.permute.xlu0 %650
      %654 = vrot.lane.b32.xlu0 %v640, 24
      %v655 = vpop.permute.xlu0 %654
      %v657 = vsel %vm201, %v307, %v647
      %vm658 = vcmask 130048
      %v659 = vsel %vm658, %v657, %v651
      %vm660 = vcmask 195584
      %v661 = vsel %vm660, %v659, %v655
      %v662 = vpack.c.bf16 %v661, %v661
      %vm663 = vcmask 257024
      %664 = vst.msk [vmem:[%s197] sm:$0xf] %vm663, %v662
      %p665 = scmp.lt.s32.totalorder %s17, 1
      %s666 = scalar_select %p665, %s17, 1
      %p667 = scmp.lt.s32.totalorder %s18, 0
      %s668 = scalar_select %p667, %s18, 0
      %s669 = sadd.s32 %s668, %s666
      %s670 = smul.addr %s669, 4
      %s671 = scalar_lea.vmem %s2, %s670
      // Predicated region
      $region29: #{rankt5_forward.44} parent=27 // pred_check
        %p672 = pneg %p101
      $region30: #{rankt5_forward.44} parent=27 // pred_check_branch
        %674 = sbr.rel (%p672) target = $region32
      $region31: #{rankt5_forward.44} parent=27 // pred_region
        _
      $region32: #{rankt5_forward.44} parent=27 // pred_fallthru
        _
    $region28: #{rankt5_forward.44} parent=5 // pred_fallthru
      _
    %p675 = scmp.le.s32.totalorder 2, %s8
    // Predicated region
    $region33: #{rankt5_forward.44} parent=5 // pred_check
      %p676 = pneg %p675
    $region34: #{rankt5_forward.44} parent=5 // pred_check_branch
      %678 = sbr.rel (%p676) target = $region36
    $region35: #{rankt5_forward.44} parent=5 // pred_region
      %s679 = ssub.s32 %s8, 2
      // Predicated region
      $region37: #{rankt5_forward.44} parent=35 // pred_check
        %p680 = pneg %p107
      $region38: #{rankt5_forward.44} parent=35 // pred_check_branch
        %682 = sbr.rel (%p680) target = $region40
      $region39: #{rankt5_forward.44} parent=35 // pred_region
        %p683 = scmp.lt.s32.totalorder %s19, 1
        %s684 = scalar_select %p683, %s19, 1
        %p685 = scmp.lt.s32.totalorder %s20, 0
        %s686 = scalar_select %p685, %s20, 0
        %s687 = sadd.s32 %s686, %s684
        %s688 = smul.addr %s687, 4
        %s689 = scalar_lea.vmem %s2, %s688
      $region40: #{rankt5_forward.44} parent=35 // pred_fallthru
        _
    $region36: #{rankt5_forward.44} parent=5 // pred_fallthru
      _
  $region6: #{rankt5_forward.44} parent=0 // loop_footer
    %s12 = sadd.s32 1, %s8
  $region7: #{rankt5_forward.44} parent=0 // loop_footer_branch
    %7 = sbr.rel target = $region3
  $region8: #{rankt5_forward.44} parent=0 // loop_exit
    _

// kernel: rankt5_forward.57
$region0: #{rankt5_forward.57}
  #allocation0 [shape = 'u32[]', space=smem, size = 0x4, offset = 0x4, fixed_abs, tag = 'smem constant byte address 0x4 - core index']
  #allocation1 [shape = 'u32[144,128]{1,0:T(1,128)}', space=vmem, size = 0x12000, scoped, tag = 'internal scratch']
  #allocation2 [shape = 'f32[1,1]{1,0:T(1,128)S(1)}', space=vmem, size = 0x200, scoped, tag = 'scoped memory for rankt5_forward.57']
  %s0 = inlined_call_operand.vmem [shape: bf16[16,32], index: 0, kind: input, shape index: {}]
  %s1 = inlined_call_operand.vmem [shape: f32[1,32], index: 1, kind: input, shape index: {}]
  %s2 = inlined_call_operand.vmem [shape: f32[1,32], index: 2, kind: input, shape index: {}]
  %s3 = inlined_call_operand.<no memory space> [shape: f32[1,1], index: 3, kind: input, shape index: {}]
  %s4 = inlined_call_operand.vmem [shape: f32[16,1], index: 4, kind: output, shape index: {}]
  %s5 = sld [smem:[#allocation0]]
  $region26: #{rankt5_forward.57} parent=0
    _
  %s7 = ssub.s32 1, %s5
  %s8 = scalar_select 0, %s7, %s5
  %v9 = vstv %s3
  %10 = vst [vmem:[#allocation2] sm:$0x1] %v9
  // Predicated region
  $region2: #{rankt5_forward.57} parent=0 // pred_check
    _
  $region3: #{rankt5_forward.57} parent=0 // pred_check_branch
    %12 = sbr.rel (0) target = $region5
  $region4: #{rankt5_forward.57} parent=0 // pred_region
    _
  $region5: #{rankt5_forward.57} parent=0 // pred_fallthru
    _
  // Predicated region
  $region6: #{rankt5_forward.57} parent=0 // pred_check
    _
  $region7: #{rankt5_forward.57} parent=0 // pred_check_branch
    %14 = sbr.rel (0) target = $region9
  $region8: #{rankt5_forward.57} parent=0 // pred_region
    _
  $region9: #{rankt5_forward.57} parent=0 // pred_fallthru
    _
  // Predicated region
  $region10: #{rankt5_forward.57} parent=0 // pred_check
    _
  $region11: #{rankt5_forward.57} parent=0 // pred_check_branch
    %16 = sbr.rel (0) target = $region13
  $region12: #{rankt5_forward.57} parent=0 // pred_region
    _
  $region13: #{rankt5_forward.57} parent=0 // pred_fallthru
    _
  // Predicated region
  $region14: #{rankt5_forward.57} parent=0 // pred_check
    _
  $region15: #{rankt5_forward.57} parent=0 // pred_check_branch
    %18 = sbr.rel (0) target = $region17
  $region16: #{rankt5_forward.57} parent=0 // pred_region
    _
  $region17: #{rankt5_forward.57} parent=0 // pred_fallthru
    _
  %v19 = vld [vmem:[%s0] sm:$0xf]
  %v20 = vld [vmem:[%s0 + $0x4] sm:$0xf]
  %v21 = vunpack.c.l.bf16 %v19
  %v22 = vunpack.c.l.bf16 %v20
  %v23 = vmul.f32 %v21, %v21
  %v24 = vmul.f32 %v22, %v22
  %vm25 = vcmask 261120
  %v26 = vsel %vm25, %v23, 0.0
  %27 = vadd.xlane.f32.xlu0 %v26
  %v28 = vpop.xlane.xlu0 %27
  %v29 = vsel %vm25, %v24, 0.0
  %30 = vadd.xlane.f32.xlu0 %v29
  %v31 = vpop.xlane.xlu0 %30
  %v32 = vrcp.pop 32.0
  %v33 = vmul.f32 %v28, %v32
  %v34 = vmul.f32 %v31, %v32
  %v35 = vadd.f32 %v33, 1e-06
  %v36 = vadd.f32 %v34, 1e-06
  %v37 = vrsqrt.pop %v35
  %v38 = vrsqrt.pop %v36
  %v39 = vmul.f32 %v21, %v37
  %v40 = vmul.f32 %v22, %v38
  %v41 = vld [vmem:[%s1] sm:$0x1]
  %v43 = vlaneseq
  %v44 = vshrl.u32 %v43, 7
  %v45 = vsub.s32 0, %v44
  %v46 = vrot.slane %v41, %v45
  %v48 = vmul.f32 %v39, %v46
  %v49 = vmul.f32 %v40, %v46
  %v50 = vld [vmem:[%s2] sm:$0x1]
  %v52 = vlaneseq
  %v53 = vshrl.u32 %v52, 7
  %v54 = vsub.s32 0, %v53
  %v55 = vrot.slane %v50, %v54
  %v57 = vmul.f32 %v48, %v55
  %v58 = vmul.f32 %v49, %v55
  %v59 = vsel %vm25, %v57, 0.0
  %60 = vadd.xlane.f32.xlu0 %v59
  %v61 = vpop.xlane.xlu0 %60
  %v62 = vsel %vm25, %v58, 0.0
  %63 = vadd.xlane.f32.xlu0 %v62
  %v64 = vpop.xlane.xlu0 %63
  %v65 = vld [vmem:[#allocation2] sm:$0x1]
  %v67 = vlaneseq
  %v68 = vshrl.u32 %v67, 7
  %v69 = vsub.s32 0, %v68
  %v70 = vrot.slane %v65, %v69
  %v72 = vadd.f32 %v61, %v70
  %v73 = vadd.f32 %v64, %v70
  %vm74 = vcmask 7168
  %75 = vst.msk [vmem:[%s4] sm:$0xff] %vm74, %v72
  %76 = vst.msk [vmem:[%s4 + $0x8] sm:$0xff] %vm74, %v73
  // Predicated region
  $region18: #{rankt5_forward.57} parent=0 // pred_check
    _
  $region19: #{rankt5_forward.57} parent=0 // pred_check_branch
    %78 = sbr.rel (0) target = $region21
  $region20: #{rankt5_forward.57} parent=0 // pred_region
    _
  $region21: #{rankt5_forward.57} parent=0 // pred_fallthru
    _
  // Predicated region
  $region22: #{rankt5_forward.57} parent=0 // pred_check
    _
  $region23: #{rankt5_forward.57} parent=0 // pred_check_branch
    %80 = sbr.rel (0) target = $region25
  $region24: #{rankt5_forward.57} parent=0 // pred_region
    _
  $region25: #{rankt5_forward.57} parent=0 // pred_fallthru
    _

</llo_original>
